<compile_context>
chip_gen: v7x
topology: tpu7x:2x2x1
jax: 0.10.0
libtpu: 0.0.40
codegen_flags: <defaults>
</compile_context>

<pallas_src>
import functools

import jax
import jax.numpy as jnp
from jax import lax
from jax.experimental import pallas as pl
from jax.experimental.pallas import tpu as pltpu

EPS = 1e-5        # nn.LayerNorm default eps
FC_TILE = 2048    # vocab tile for the final projection (review: 2048-4096)


def _round_up(a, b):
    return ((a + b - 1) // b) * b


# ---------------------------------------------------------------------------
# Fused Pallas kernels
# ---------------------------------------------------------------------------
def _layernorm(z, g, b):
    mu = jnp.mean(z, axis=-1, keepdims=True)
    zc = z - mu
    var = jnp.mean(zc * zc, axis=-1, keepdims=True)
    return zc * lax.rsqrt(var + EPS) * g + b


def _encoder_stack_kernel(x_ref, wqkv_ref, bqkv_ref, wo_ref, bo_ref, g1_ref, be1_ref,
                          w1_ref, b1_ref, w2_ref, b2_ref, g2_ref, be2_ref, o_ref,
                          *, num_heads):
    # One grid step == one encoder layer.  The activation lives in o_ref (constant block
    # index across the layer axis => resident in VMEM, written to HBM once at the end).
    N, L, E = o_ref.shape
    H = num_heads
    Dh = E // H

    @pl.when(pl.program_id(0) == 0)
    def _():
        o_ref[...] = x_ref[...]

    x = o_ref[...].reshape(N * L, E)                      # (N*L, E) f32
    xb = x.astype(jnp.bfloat16)

    # ---- self-attention: fused QKV projection (bf16 MXU, f32 accumulate) ----
    # 1/sqrt(Dh) is pre-folded into the Q columns of wqkv/bqkv at prepare time.
    qkv = jnp.dot(xb, wqkv_ref[0], preferred_element_type=jnp.float32) + bqkv_ref[0]
    q = qkv[:, :E].reshape(N, L, E)
    k = qkv[:, E:2 * E].reshape(N, L, E)
    v = qkv[:, 2 * E:].reshape(N, L, E)

    # Per-head scores / PV, batched over N; head outputs concatenated so the
    # output projection is a single dense (N*L, E) x (E, E) matmul.
    heads = []
    for h in range(H):
        sl = slice(h * Dh, (h + 1) * Dh)
        q_h = q[:, :, sl].astype(jnp.bfloat16)            # (N, L, Dh)
        k_h = k[:, :, sl].astype(jnp.bfloat16)
        v_h = v[:, :, sl].astype(jnp.bfloat16)
        s = jnp.einsum('nqd,nkd->nqk', q_h, k_h,
                       preferred_element_type=jnp.float32)            # (N, L, L)
        s = s - jnp.max(s, axis=-1, keepdims=True)
        p = jnp.exp(s)
        p = p * pl.reciprocal(jnp.sum(p, axis=-1, keepdims=True), approx=True)
        heads.append(jnp.einsum('nqk,nkd->nqd', p.astype(jnp.bfloat16), v_h,
                                preferred_element_type=jnp.float32))  # (N, L, Dh)
    attn = jnp.concatenate(heads, axis=-1).reshape(N * L, E)
    attn = jnp.dot(attn.astype(jnp.bfloat16), wo_ref[0],
                   preferred_element_type=jnp.float32) + bo_ref[0]

    # post-norm residual 1 (f32)
    x = _layernorm(x + attn, g1_ref[0], be1_ref[0])

    # ---- FFN: lin1 + ReLU + lin2, all N*L rows at once ----
    h1 = jnp.dot(x.astype(jnp.bfloat16), w1_ref[0],
                 preferred_element_type=jnp.float32) + b1_ref[0]
    h1 = jnp.maximum(h1, 0.0)
    y = jnp.dot(h1.astype(jnp.bfloat16), w2_ref[0],
                preferred_element_type=jnp.float32) + b2_ref[0]

    # post-norm residual 2 (f32); carried to the next layer via o_ref
    x = _layernorm(x + y, g2_ref[0], be2_ref[0])
    o_ref[...] = x.reshape(N, L, E)


def _fc_kernel(x_ref, w_ref, b_ref, o_ref):
    # lane-dense vocab tile: (M, E) x (E, tv) -> (M, tv); rows already in (L, N) order.
    o_ref[...] = jnp.dot(x_ref[...].astype(jnp.bfloat16), w_ref[...],
                         preferred_element_type=jnp.float32) + b_ref[...]


# ---------------------------------------------------------------------------
# pallas_call wrappers
# ---------------------------------------------------------------------------
def encoder_stack(x, prep, num_heads):
    N, L, E = x.shape
    num_layers = prep["wqkv"].shape[0]
    Hd = prep["w1"].shape[2]

    def lw(shape):  # per-layer weight spec: leading layer axis indexed by the grid
        return pl.BlockSpec((1,) + shape, lambda l: (l, 0, 0))

    return pl.pallas_call(
        functools.partial(_encoder_stack_kernel, num_heads=num_heads),
        out_shape=jax.ShapeDtypeStruct((N, L, E), jnp.float32),
        grid=(num_layers,),
        in_specs=[
            pl.BlockSpec((N, L, E), lambda l: (0, 0, 0)),   # embeddings (read at layer 0)
            lw((E, 3 * E)), lw((1, 3 * E)),                 # wqkv, bqkv
            lw((E, E)), lw((1, E)),                         # wo, bo
            lw((1, E)), lw((1, E)),                         # norm1 gamma, beta
            lw((E, Hd)), lw((1, Hd)),                       # lin1 w, b
            lw((Hd, E)), lw((1, E)),                        # lin2 w, b
            lw((1, E)), lw((1, E)),                         # norm2 gamma, beta
        ],
        out_specs=pl.BlockSpec((N, L, E), lambda l: (0, 0, 0)),
        compiler_params=pltpu.CompilerParams(
            dimension_semantics=("arbitrary",),             # activation carried across layers
            vmem_limit_bytes=32 * 1024 * 1024),
    )(x, prep["wqkv"], prep["bqkv"], prep["wo"], prep["bo"],
      prep["g1"], prep["be1"], prep["w1"], prep["b1"],
      prep["w2"], prep["b2"], prep["g2"], prep["be2"])


def fc_logits(x2, w, b):
    # x2: (M, E) f32 with rows in (l, n) order; w: (E, Vpad) bf16; b: (1, Vpad) f32.
    M, E = x2.shape
    Vpad = w.shape[1]
    tv = min(FC_TILE, Vpad)
    assert Vpad % tv == 0  # guaranteed by prepare_params padding
    return pl.pallas_call(
        _fc_kernel,
        out_shape=jax.ShapeDtypeStruct((M, Vpad), jnp.float32),
        grid=(Vpad // tv,),
        in_specs=[
            pl.BlockSpec((M, E), lambda j: (0, 0)),
            pl.BlockSpec((E, tv), lambda j: (0, j)),
            pl.BlockSpec((1, tv), lambda j: (0, j)),
        ],
        out_specs=pl.BlockSpec((M, tv), lambda j: (0, j)),
        compiler_params=pltpu.CompilerParams(
            dimension_semantics=("parallel",),
            vmem_limit_bytes=32 * 1024 * 1024),
    )(x2, w, b)


# ---------------------------------------------------------------------------
# Parameters (PyTorch layout, f32) + prepared (stacked, pre-transposed, bf16 MXU weights)
# ---------------------------------------------------------------------------
def init_params(key, vocab, E, hidden, num_layers):
    keys = jax.random.split(key, 2 + num_layers)
    params = {
        "embedding": 0.02 * jax.random.normal(keys[0], (vocab, E), jnp.float32),
        "fc_w": 0.02 * jax.random.normal(keys[1], (vocab, E), jnp.float32),
        "fc_b": jnp.zeros((vocab,), jnp.float32),
        "layers": [],
    }
    for l in range(num_layers):
        lk = jax.random.split(keys[2 + l], 6)
        params["layers"].append(dict(
            in_proj_w=0.02 * jax.random.normal(lk[0], (3 * E, E), jnp.float32),
            in_proj_b=0.02 * jax.random.normal(lk[1], (3 * E,), jnp.float32),
            out_proj_w=0.02 * jax.random.normal(lk[2], (E, E), jnp.float32),
            out_proj_b=jnp.zeros((E,), jnp.float32),
            lin1_w=0.02 * jax.random.normal(lk[3], (hidden, E), jnp.float32),
            lin1_b=0.02 * jax.random.normal(lk[4], (hidden,), jnp.float32),
            lin2_w=0.02 * jax.random.normal(lk[5], (E, hidden), jnp.float32),
            lin2_b=jnp.zeros((E,), jnp.float32),
            norm1_g=jnp.ones((E,), jnp.float32),
            norm1_b=jnp.zeros((E,), jnp.float32),
            norm2_g=jnp.ones((E,), jnp.float32),
            norm2_b=jnp.zeros((E,), jnp.float32),
        ))
    return params


def prepare_params(params, num_heads):
    """Stack per-layer weights, pre-transpose to (K, N), fold 1/sqrt(Dh) into Q,
    cast MXU weights to bf16, and pad the vocab dim to a lane-tileable size."""
    E = params["embedding"].shape[1]
    assert E % num_heads == 0, "embed_dim must be divisible by num_heads"
    scale = 1.0 / ((E // num_heads) ** 0.5)
    bf16 = lambda w: w.astype(jnp.bfloat16)

    wqkv, bqkv, wo, bo, g1, be1, w1, b1, w2, b2, g2, be2 = ([] for _ in range(12))
    for p in params["layers"]:
        w_in = p["in_proj_w"].T                    # (E, 3E)
        b_in = p["in_proj_b"]                      # (3E,)
        w_in = w_in.at[:, :E].multiply(scale)      # fold 1/sqrt(Dh) into Q (exact: power of 2)
        b_in = b_in.at[:E].multiply(scale)
        wqkv.append(bf16(w_in));               bqkv.append(b_in[None, :])
        wo.append(bf16(p["out_proj_w"].T));    bo.append(p["out_proj_b"][None, :])
        g1.append(p["norm1_g"][None, :]);      be1.append(p["norm1_b"][None, :])
        w1.append(bf16(p["lin1_w"].T));        b1.append(p["lin1_b"][None, :])
        w2.append(bf16(p["lin2_w"].T));        b2.append(p["lin2_b"][None, :])
        g2.append(p["norm2_g"][None, :]);      be2.append(p["norm2_b"][None, :])

    # Pad vocab so the fc BlockSpecs are lane-tileable (vocab_size=30522 -> 30720).
    V = params["fc_w"].shape[0]
    Vpad = _round_up(V, 128)
    if Vpad > FC_TILE:
        Vpad = _round_up(V, FC_TILE)
    fc_w = jnp.pad(params["fc_w"].T, ((0, 0), (0, Vpad - V)))   # (E, Vpad)
    fc_b = jnp.pad(params["fc_b"], (0, Vpad - V))

    return {
        "embedding": params["embedding"],          # f32 (gather stays f32)
        "fc_w": bf16(fc_w), "fc_b": fc_b[None, :],
        "wqkv": jnp.stack(wqkv), "bqkv": jnp.stack(bqkv),
        "wo": jnp.stack(wo), "bo": jnp.stack(bo),
        "g1": jnp.stack(g1), "be1": jnp.stack(be1),
        "w1": jnp.stack(w1), "b1": jnp.stack(b1),
        "w2": jnp.stack(w2), "b2": jnp.stack(b2),
        "g2": jnp.stack(g2), "be2": jnp.stack(be2),
    }


# ---------------------------------------------------------------------------
# Forward (jit'ed; embedding gather and two tiny (8 KiB) activation transposes are XLA glue)
# ---------------------------------------------------------------------------
@functools.partial(jax.jit, static_argnums=(2,))
def transformer_forward(prep, input_ids, num_heads):
    # TODO(synk): src_key_padding_mask (attention_mask) path not implemented;
    # the reference forward is exercised with mask=None.  Dropout = eval no-op.
    L, N = input_ids.shape
    V = prep["embedding"].shape[0]                         # unpadded vocab size (static)
    x = jnp.take(prep["embedding"], input_ids, axis=0)     # (L, N, E) gather (XLA glue)
    x = x.transpose(1, 0, 2)                               # (N, L, E) lane-dense
    x = encoder_stack(x, prep, num_heads)                  # single fused pallas_call
    E = x.shape[-1]
    # Present rows in (l, n) order so the fc kernel writes the (L, N, V) layout directly
    # (no logits transpose; only a cheap pad-slice of the vocab dim remains).
    x2 = x.transpose(1, 0, 2).reshape(L * N, E)
    logits = fc_logits(x2, prep["fc_w"], prep["fc_b"])     # (L*N, Vpad)
    return logits.reshape(L, N, -1)[:, :, :V]              # (L, N, V)


# ---------------------------------------------------------------------------
# Pure-JAX f32 reference (semantics check)
# ---------------------------------------------------------------------------
def ref_forward(params, input_ids, num_heads):
    x = jnp.take(params["embedding"], input_ids, axis=0)
    L, N, E = x.shape
    H = num_heads
    Dh = E // H

    def ln(z, g, b):
        mu = z.mean(-1, keepdims=True)
        var = ((z - mu) ** 2).mean(-1, keepdims=True)
        return (z - mu) / jnp.sqrt(var + EPS) * g + b

    for p in params["layers"]:
        qkv = x @ p["in_proj_w"].T + p["in_proj_b"]
        q, k, v = jnp.split(qkv, 3, axis=-1)

        def heads(t):
            return t.reshape(L, N * H, Dh).transpose(1, 0, 2)

        q, k, v = heads(q), heads(k), heads(v)
        s = (q / (Dh ** 0.5)) @ k.transpose(0, 2, 1)
        pm = jax.nn.softmax(s, axis=-1)
        a = (pm @ v).transpose(1, 0, 2).reshape(L, N, E)
        a = a @ p["out_proj_w"].T + p["out_proj_b"]
        x = ln(x + a, p["norm1_g"], p["norm1_b"])
        ff = jnp.maximum(x @ p["lin1_w"].T + p["lin1_b"], 0.0) @ p["lin2_w"].T + p["lin2_b"]
        x = ln(x + ff, p["norm2_g"], p["norm2_b"])
    return x @ params["fc_w"].T + params["fc_b"]


if __name__ == "__main__":
    # Module-consistent shapes: E=128, H=8, hidden=512, 2 layers, vocab=30522 (full size —
    # exercises the vocab-padding path); small seq/batch for the self-test.
    vocab_size = 30522
    embed_dim = 128
    num_heads = 8
    hidden_dim = 512
    num_layers = 2
    L, N = 8, 2  # seq=8 (attended axis), batch=2

    key = jax.random.PRNGKey(0)
    pkey, ikey = jax.random.split(key)
    params = init_params(pkey, vocab_size, embed_dim, hidden_dim, num_layers)
    prep = prepare_params(params, num_heads)
    input_ids = jax.random.randint(ikey, (L, N), 0, vocab_size, dtype=jnp.int32)

    logits = transformer_forward(prep, input_ids, num_heads)
    logits = jax.block_until_ready(logits)
    assert logits.shape == (L, N, vocab_size), logits.shape

    ref = ref_forward(params, input_ids, num_heads)
    # bf16 MXU operands vs f32 reference -> loosened tolerance (real bugs are >> 2e-2).
    if not jnp.allclose(logits, ref, atol=2e-2, rtol=2e-2):
        raise AssertionError(
            f"mismatch vs reference, max abs err = {float(jnp.max(jnp.abs(logits - ref)))}"
        )
    print("KERNEL_OK")
</pallas_src>

<mosaic_0001>
module attributes {stable_mosaic.version = 11 : i64} {
  func.func @_fc_kernel(%arg0: i32, %arg1: memref<16x128xf32, #tpu.memory_space<vmem>>, %arg2: memref<128x2048xbf16, #tpu.memory_space<vmem>>, %arg3: memref<1x2048xf32, #tpu.memory_space<vmem>>, %arg4: memref<16x2048xf32, #tpu.memory_space<vmem>>) attributes {dimension_semantics = [#tpu.dimension_semantics<parallel>], iteration_bounds = array<i64: 15>, scalar_prefetch = 0 : i64, scratch_operands = 0 : i64, tpu.core_type = #tpu.core_type<tc>, window_params = [{pipeline_mode = #tpu.pipeline_mode<synchronous>, transform_indices = @transform_0, window_bounds = array<i64: 16, 128>}, {transform_indices = @transform_1, window_bounds = array<i64: 128, 2048>}, {transform_indices = @transform_2, window_bounds = array<i64: 1, 2048>}, {transform_indices = @transform_3, window_bounds = array<i64: 16, 2048>}]} {
    %c0 = arith.constant 0 : index
    %c0_0 = arith.constant 0 : index
    %0 = vector.load %arg1[%c0, %c0_0] : memref<16x128xf32, #tpu.memory_space<vmem>>, vector<16x128xf32>
    %1 = arith.truncf %0 : vector<16x128xf32> to vector<16x128xbf16>
    %c0_1 = arith.constant 0 : index
    %c0_2 = arith.constant 0 : index
    %2 = vector.load %arg2[%c0_1, %c0_2] : memref<128x2048xbf16, #tpu.memory_space<vmem>>, vector<128x2048xbf16>
    %cst = arith.constant dense<0.000000e+00> : vector<16x2048xf32>
    %3 = tpu.matmul %1, %2, %cst {dimension_numbers = #tpu.dot_dimension_numbers<[1], [0], [0], [1], [0, 0, 1, 1], [], []>} : vector<16x128xbf16>, vector<128x2048xbf16>, vector<16x2048xf32> -> vector<16x2048xf32>
    %c0_3 = arith.constant 0 : index
    %c0_4 = arith.constant 0 : index
    %4 = vector.load %arg3[%c0_3, %c0_4] : memref<1x2048xf32, #tpu.memory_space<vmem>>, vector<1x2048xf32>
    %5 = vector.broadcast %4 : vector<1x2048xf32> to vector<16x2048xf32>
    %6 = arith.addf %3, %5 : vector<16x2048xf32>
    %c0_5 = arith.constant 0 : index
    %c0_6 = arith.constant 0 : index
    %7 = vector.load %arg4[%c0_5, %c0_6] : memref<16x2048xf32, #tpu.memory_space<vmem>>, vector<16x2048xf32>
    tpu.vector_store %arg4[%c0_5, %c0_6], %6 {strides = array<i32>} : memref<16x2048xf32, #tpu.memory_space<vmem>>, vector<16x2048xf32>,
    return
  }
  func.func @transform_0(%arg0: i32) -> (i32, i32) {
    %c0_i32 = arith.constant 0 : i32
    %c0_i32_0 = arith.constant 0 : i32
    %c0_i32_1 = arith.constant 0 : i32
    return %c0_i32, %c0_i32_0 : i32, i32
  }
  func.func @transform_1(%arg0: i32) -> (i32, i32) {
    %c0_i32 = arith.constant 0 : i32
    %c0_i32_0 = arith.constant 0 : i32
    return %c0_i32, %arg0 : i32, i32
  }
  func.func @transform_2(%arg0: i32) -> (i32, i32) {
    %c0_i32 = arith.constant 0 : i32
    %c0_i32_0 = arith.constant 0 : i32
    return %c0_i32, %arg0 : i32, i32
  }
  func.func @transform_3(%arg0: i32) -> (i32, i32) {
    %c0_i32 = arith.constant 0 : i32
    %c0_i32_0 = arith.constant 0 : i32
    return %c0_i32, %arg0 : i32, i32
  }
}

module attributes {stable_mosaic.version = 11 : i64} {
  func.func @_encoder_stack_kernel(%arg0: i32, %arg1: memref<2x8x128xf32, #tpu.memory_space<vmem>>, %arg2: memref<1x128x384xbf16, #tpu.memory_space<vmem>>, %arg3: memref<1x1x384xf32, #tpu.memory_space<vmem>>, %arg4: memref<1x128x128xbf16, #tpu.memory_space<vmem>>, %arg5: memref<1x1x128xf32, #tpu.memory_space<vmem>>, %arg6: memref<1x1x128xf32, #tpu.memory_space<vmem>>, %arg7: memref<1x1x128xf32, #tpu.memory_space<vmem>>, %arg8: memref<1x128x512xbf16, #tpu.memory_space<vmem>>, %arg9: memref<1x1x512xf32, #tpu.memory_space<vmem>>, %arg10: memref<1x512x128xbf16, #tpu.memory_space<vmem>>, %arg11: memref<1x1x128xf32, #tpu.memory_space<vmem>>, %arg12: memref<1x1x128xf32, #tpu.memory_space<vmem>>, %arg13: memref<1x1x128xf32, #tpu.memory_space<vmem>>, %arg14: memref<2x8x128xf32, #tpu.memory_space<vmem>>) attributes {dimension_semantics = [#tpu.dimension_semantics<arbitrary>], iteration_bounds = array<i64: 2>, scalar_prefetch = 0 : i64, scratch_operands = 0 : i64, tpu.core_type = #tpu.core_type<tc>, window_params = [{pipeline_mode = #tpu.pipeline_mode<synchronous>, transform_indices = @transform_0, window_bounds = array<i64: 2, 8, 128>}, {transform_indices = @transform_1, window_bounds = array<i64: 1, 128, 384>}, {transform_indices = @transform_2, window_bounds = array<i64: 1, 1, 384>}, {transform_indices = @transform_3, window_bounds = array<i64: 1, 128, 128>}, {transform_indices = @transform_4, window_bounds = array<i64: 1, 1, 128>}, {transform_indices = @transform_5, window_bounds = array<i64: 1, 1, 128>}, {transform_indices = @transform_6, window_bounds = array<i64: 1, 1, 128>}, {transform_indices = @transform_7, window_bounds = array<i64: 1, 128, 512>}, {transform_indices = @transform_8, window_bounds = array<i64: 1, 1, 512>}, {transform_indices = @transform_9, window_bounds = array<i64: 1, 512, 128>}, {transform_indices = @transform_10, window_bounds = array<i64: 1, 1, 128>}, {transform_indices = @transform_11, window_bounds = array<i64: 1, 1, 128>}, {transform_indices = @transform_12, window_bounds = array<i64: 1, 1, 128>}, {pipeline_mode = #tpu.pipeline_mode<synchronous>, transform_indices = @transform_13, window_bounds = array<i64: 2, 8, 128>}]} {
    %c0_i32 = arith.constant 0 : i32
    %0 = arith.cmpi eq, %arg0, %c0_i32 : i32
    %1 = arith.extui %0 : i1 to i32
    %c0_i32_0 = arith.constant 0 : i32
    %2 = arith.cmpi ne, %1, %c0_i32_0 : i32
    scf.if %2 {
      %c0_88 = arith.constant 0 : index
      %c0_89 = arith.constant 0 : index
      %c0_90 = arith.constant 0 : index
      %251 = vector.load %arg1[%c0_88, %c0_89, %c0_90] : memref<2x8x128xf32, #tpu.memory_space<vmem>>, vector<2x8x128xf32>
      %c0_91 = arith.constant 0 : index
      %c0_92 = arith.constant 0 : index
      %c0_93 = arith.constant 0 : index
      %252 = vector.load %arg14[%c0_91, %c0_92, %c0_93] : memref<2x8x128xf32, #tpu.memory_space<vmem>>, vector<2x8x128xf32>
      tpu.vector_store %arg14[%c0_91, %c0_92, %c0_93], %251 {strides = array<i32>} : memref<2x8x128xf32, #tpu.memory_space<vmem>>, vector<2x8x128xf32>,
    } else {
    }
    %c0 = arith.constant 0 : index
    %c0_1 = arith.constant 0 : index
    %c0_2 = arith.constant 0 : index
    %3 = vector.load %arg14[%c0, %c0_1, %c0_2] : memref<2x8x128xf32, #tpu.memory_space<vmem>>, vector<2x8x128xf32>
    %4 = vector.shape_cast %3 : vector<2x8x128xf32> to vector<16x128xf32>
    %5 = arith.truncf %4 : vector<16x128xf32> to vector<16x128xbf16>
    %c0_3 = arith.constant 0 : index
    %c0_4 = arith.constant 0 : index
    %c0_5 = arith.constant 0 : index
    %6 = vector.load %arg2[%c0_3, %c0_4, %c0_5] : memref<1x128x384xbf16, #tpu.memory_space<vmem>>, vector<1x128x384xbf16>
    %7 = vector.shape_cast %6 : vector<1x128x384xbf16> to vector<128x384xbf16>
    %cst = arith.constant dense<0.000000e+00> : vector<16x384xf32>
    %8 = tpu.matmul %5, %7, %cst {dimension_numbers = #tpu.dot_dimension_numbers<[1], [0], [0], [1], [0, 0, 1, 1], [], []>} : vector<16x128xbf16>, vector<128x384xbf16>, vector<16x384xf32> -> vector<16x384xf32>
    %c0_6 = arith.constant 0 : index
    %c0_7 = arith.constant 0 : index
    %c0_8 = arith.constant 0 : index
    %9 = vector.load %arg3[%c0_6, %c0_7, %c0_8] : memref<1x1x384xf32, #tpu.memory_space<vmem>>, vector<1x1x384xf32>
    %10 = vector.shape_cast %9 : vector<1x1x384xf32> to vector<1x384xf32>
    %11 = vector.broadcast %10 : vector<1x384xf32> to vector<16x384xf32>
    %12 = arith.addf %8, %11 : vector<16x384xf32>
    %13 = vector.extract_strided_slice %12 {offsets = [0, 0], sizes = [16, 128], strides = [1, 1]} : vector<16x384xf32> to vector<16x128xf32>
    %14 = vector.shape_cast %13 : vector<16x128xf32> to vector<2x8x128xf32>
    %15 = vector.extract_strided_slice %12 {offsets = [0, 128], sizes = [16, 128], strides = [1, 1]} : vector<16x384xf32> to vector<16x128xf32>
    %16 = vector.shape_cast %15 : vector<16x128xf32> to vector<2x8x128xf32>
    %17 = vector.extract_strided_slice %12 {offsets = [0, 256], sizes = [16, 128], strides = [1, 1]} : vector<16x384xf32> to vector<16x128xf32>
    %18 = vector.shape_cast %17 : vector<16x128xf32> to vector<2x8x128xf32>
    %19 = vector.extract_strided_slice %14 {offsets = [0, 0, 0], sizes = [2, 8, 16], strides = [1, 1, 1]} : vector<2x8x128xf32> to vector<2x8x16xf32>
    %20 = arith.truncf %19 : vector<2x8x16xf32> to vector<2x8x16xbf16>
    %21 = vector.extract_strided_slice %16 {offsets = [0, 0, 0], sizes = [2, 8, 16], strides = [1, 1, 1]} : vector<2x8x128xf32> to vector<2x8x16xf32>
    %22 = arith.truncf %21 : vector<2x8x16xf32> to vector<2x8x16xbf16>
    %23 = vector.extract_strided_slice %18 {offsets = [0, 0, 0], sizes = [2, 8, 16], strides = [1, 1, 1]} : vector<2x8x128xf32> to vector<2x8x16xf32>
    %24 = arith.truncf %23 : vector<2x8x16xf32> to vector<2x8x16xbf16>
    "tpu.trace_start"() <{level = 10 : i32, message = "nqd,nkd->nqk"}> : () -> ()
    %cst_9 = arith.constant dense<0.000000e+00> : vector<2x8x8xf32>
    %25 = tpu.matmul %20, %22, %cst_9 {dimension_numbers = #tpu.dot_dimension_numbers<[2], [2], [1], [1], [0, 0, 0, 1, 1, 1], [0], [0]>} : vector<2x8x16xbf16>, vector<2x8x16xbf16>, vector<2x8x8xf32> -> vector<2x8x8xf32>
    "tpu.trace_stop"() : () -> ()
    %cst_10 = arith.constant dense<0xFF800000> : vector<2x8xf32>
    %26 = vector.multi_reduction <maximumf>, %25, %cst_10 [2] : vector<2x8x8xf32> to vector<2x8xf32>
    %27 = vector.shape_cast %26 : vector<2x8xf32> to vector<2x8x1xf32>
    %28 = vector.broadcast %27 : vector<2x8x1xf32> to vector<2x8x8xf32>
    %29 = arith.subf %25, %28 : vector<2x8x8xf32>
    %30 = math.exp %29 : vector<2x8x8xf32>
    %cst_11 = arith.constant dense<0.000000e+00> : vector<2x8xf32>
    %31 = vector.multi_reduction <add>, %30, %cst_11 [2] : vector<2x8x8xf32> to vector<2x8xf32>
    %32 = vector.shape_cast %31 : vector<2x8xf32> to vector<2x8x1xf32>
    %33 = tpu.reciprocal %32 {approx = true} : vector<2x8x1xf32> -> vector<2x8x1xf32>
    %34 = vector.broadcast %33 : vector<2x8x1xf32> to vector<2x8x8xf32>
    %35 = arith.mulf %30, %34 : vector<2x8x8xf32>
    %36 = arith.truncf %35 : vector<2x8x8xf32> to vector<2x8x8xbf16>
    "tpu.trace_start"() <{level = 10 : i32, message = "nqk,nkd->nqd"}> : () -> ()
    %cst_12 = arith.constant dense<0.000000e+00> : vector<2x8x16xf32>
    %37 = tpu.matmul %36, %24, %cst_12 {dimension_numbers = #tpu.dot_dimension_numbers<[2], [1], [1], [2], [0, 0, 0, 1, 1, 2], [0], [0]>} : vector<2x8x8xbf16>, vector<2x8x16xbf16>, vector<2x8x16xf32> -> vector<2x8x16xf32>
    "tpu.trace_stop"() : () -> ()
    %38 = vector.extract_strided_slice %14 {offsets = [0, 0, 16], sizes = [2, 8, 16], strides = [1, 1, 1]} : vector<2x8x128xf32> to vector<2x8x16xf32>
    %39 = arith.truncf %38 : vector<2x8x16xf32> to vector<2x8x16xbf16>
    %40 = vector.extract_strided_slice %16 {offsets = [0, 0, 16], sizes = [2, 8, 16], strides = [1, 1, 1]} : vector<2x8x128xf32> to vector<2x8x16xf32>
    %41 = arith.truncf %40 : vector<2x8x16xf32> to vector<2x8x16xbf16>
    %42 = vector.extract_strided_slice %18 {offsets = [0, 0, 16], sizes = [2, 8, 16], strides = [1, 1, 1]} : vector<2x8x128xf32> to vector<2x8x16xf32>
    %43 = arith.truncf %42 : vector<2x8x16xf32> to vector<2x8x16xbf16>
    "tpu.trace_start"() <{level = 10 : i32, message = "nqd,nkd->nqk"}> : () -> ()
    %cst_13 = arith.constant dense<0.000000e+00> : vector<2x8x8xf32>
    %44 = tpu.matmul %39, %41, %cst_13 {dimension_numbers = #tpu.dot_dimension_numbers<[2], [2], [1], [1], [0, 0, 0, 1, 1, 1], [0], [0]>} : vector<2x8x16xbf16>, vector<2x8x16xbf16>, vector<2x8x8xf32> -> vector<2x8x8xf32>
    "tpu.trace_stop"() : () -> ()
    %cst_14 = arith.constant dense<0xFF800000> : vector<2x8xf32>
    %45 = vector.multi_reduction <maximumf>, %44, %cst_14 [2] : vector<2x8x8xf32> to vector<2x8xf32>
    %46 = vector.shape_cast %45 : vector<2x8xf32> to vector<2x8x1xf32>
    %47 = vector.broadcast %46 : vector<2x8x1xf32> to vector<2x8x8xf32>
    %48 = arith.subf %44, %47 : vector<2x8x8xf32>
    %49 = math.exp %48 : vector<2x8x8xf32>
    %cst_15 = arith.constant dense<0.000000e+00> : vector<2x8xf32>
    %50 = vector.multi_reduction <add>, %49, %cst_15 [2] : vector<2x8x8xf32> to vector<2x8xf32>
    %51 = vector.shape_cast %50 : vector<2x8xf32> to vector<2x8x1xf32>
    %52 = tpu.reciprocal %51 {approx = true} : vector<2x8x1xf32> -> vector<2x8x1xf32>
    %53 = vector.broadcast %52 : vector<2x8x1xf32> to vector<2x8x8xf32>
    %54 = arith.mulf %49, %53 : vector<2x8x8xf32>
    %55 = arith.truncf %54 : vector<2x8x8xf32> to vector<2x8x8xbf16>
    "tpu.trace_start"() <{level = 10 : i32, message = "nqk,nkd->nqd"}> : () -> ()
    %cst_16 = arith.constant dense<0.000000e+00> : vector<2x8x16xf32>
    %56 = tpu.matmul %55, %43, %cst_16 {dimension_numbers = #tpu.dot_dimension_numbers<[2], [1], [1], [2], [0, 0, 0, 1, 1, 2], [0], [0]>} : vector<2x8x8xbf16>, vector<2x8x16xbf16>, vector<2x8x16xf32> -> vector<2x8x16xf32>
    "tpu.trace_stop"() : () -> ()
    %57 = vector.extract_strided_slice %14 {offsets = [0, 0, 32], sizes = [2, 8, 16], strides = [1, 1, 1]} : vector<2x8x128xf32> to vector<2x8x16xf32>
    %58 = arith.truncf %57 : vector<2x8x16xf32> to vector<2x8x16xbf16>
    %59 = vector.extract_strided_slice %16 {offsets = [0, 0, 32], sizes = [2, 8, 16], strides = [1, 1, 1]} : vector<2x8x128xf32> to vector<2x8x16xf32>
    %60 = arith.truncf %59 : vector<2x8x16xf32> to vector<2x8x16xbf16>
    %61 = vector.extract_strided_slice %18 {offsets = [0, 0, 32], sizes = [2, 8, 16], strides = [1, 1, 1]} : vector<2x8x128xf32> to vector<2x8x16xf32>
    %62 = arith.truncf %61 : vector<2x8x16xf32> to vector<2x8x16xbf16>
    "tpu.trace_start"() <{level = 10 : i32, message = "nqd,nkd->nqk"}> : () -> ()
    %cst_17 = arith.constant dense<0.000000e+00> : vector<2x8x8xf32>
    %63 = tpu.matmul %58, %60, %cst_17 {dimension_numbers = #tpu.dot_dimension_numbers<[2], [2], [1], [1], [0, 0, 0, 1, 1, 1], [0], [0]>} : vector<2x8x16xbf16>, vector<2x8x16xbf16>, vector<2x8x8xf32> -> vector<2x8x8xf32>
    "tpu.trace_stop"() : () -> ()
    %cst_18 = arith.constant dense<0xFF800000> : vector<2x8xf32>
    %64 = vector.multi_reduction <maximumf>, %63, %cst_18 [2] : vector<2x8x8xf32> to vector<2x8xf32>
    %65 = vector.shape_cast %64 : vector<2x8xf32> to vector<2x8x1xf32>
    %66 = vector.broadcast %65 : vector<2x8x1xf32> to vector<2x8x8xf32>
    %67 = arith.subf %63, %66 : vector<2x8x8xf32>
    %68 = math.exp %67 : vector<2x8x8xf32>
    %cst_19 = arith.constant dense<0.000000e+00> : vector<2x8xf32>
    %69 = vector.multi_reduction <add>, %68, %cst_19 [2] : vector<2x8x8xf32> to vector<2x8xf32>
    %70 = vector.shape_cast %69 : vector<2x8xf32> to vector<2x8x1xf32>
    %71 = tpu.reciprocal %70 {approx = true} : vector<2x8x1xf32> -> vector<2x8x1xf32>
    %72 = vector.broadcast %71 : vector<2x8x1xf32> to vector<2x8x8xf32>
    %73 = arith.mulf %68, %72 : vector<2x8x8xf32>
    %74 = arith.truncf %73 : vector<2x8x8xf32> to vector<2x8x8xbf16>
    "tpu.trace_start"() <{level = 10 : i32, message = "nqk,nkd->nqd"}> : () -> ()
    %cst_20 = arith.constant dense<0.000000e+00> : vector<2x8x16xf32>
    %75 = tpu.matmul %74, %62, %cst_20 {dimension_numbers = #tpu.dot_dimension_numbers<[2], [1], [1], [2], [0, 0, 0, 1, 1, 2], [0], [0]>} : vector<2x8x8xbf16>, vector<2x8x16xbf16>, vector<2x8x16xf32> -> vector<2x8x16xf32>
    "tpu.trace_stop"() : () -> ()
    %76 = vector.extract_strided_slice %14 {offsets = [0, 0, 48], sizes = [2, 8, 16], strides = [1, 1, 1]} : vector<2x8x128xf32> to vector<2x8x16xf32>
    %77 = arith.truncf %76 : vector<2x8x16xf32> to vector<2x8x16xbf16>
    %78 = vector.extract_strided_slice %16 {offsets = [0, 0, 48], sizes = [2, 8, 16], strides = [1, 1, 1]} : vector<2x8x128xf32> to vector<2x8x16xf32>
    %79 = arith.truncf %78 : vector<2x8x16xf32> to vector<2x8x16xbf16>
    %80 = vector.extract_strided_slice %18 {offsets = [0, 0, 48], sizes = [2, 8, 16], strides = [1, 1, 1]} : vector<2x8x128xf32> to vector<2x8x16xf32>
    %81 = arith.truncf %80 : vector<2x8x16xf32> to vector<2x8x16xbf16>
    "tpu.trace_start"() <{level = 10 : i32, message = "nqd,nkd->nqk"}> : () -> ()
    %cst_21 = arith.constant dense<0.000000e+00> : vector<2x8x8xf32>
    %82 = tpu.matmul %77, %79, %cst_21 {dimension_numbers = #tpu.dot_dimension_numbers<[2], [2], [1], [1], [0, 0, 0, 1, 1, 1], [0], [0]>} : vector<2x8x16xbf16>, vector<2x8x16xbf16>, vector<2x8x8xf32> -> vector<2x8x8xf32>
    "tpu.trace_stop"() : () -> ()
    %cst_22 = arith.constant dense<0xFF800000> : vector<2x8xf32>
    %83 = vector.multi_reduction <maximumf>, %82, %cst_22 [2] : vector<2x8x8xf32> to vector<2x8xf32>
    %84 = vector.shape_cast %83 : vector<2x8xf32> to vector<2x8x1xf32>
    %85 = vector.broadcast %84 : vector<2x8x1xf32> to vector<2x8x8xf32>
    %86 = arith.subf %82, %85 : vector<2x8x8xf32>
    %87 = math.exp %86 : vector<2x8x8xf32>
    %cst_23 = arith.constant dense<0.000000e+00> : vector<2x8xf32>
    %88 = vector.multi_reduction <add>, %87, %cst_23 [2] : vector<2x8x8xf32> to vector<2x8xf32>
    %89 = vector.shape_cast %88 : vector<2x8xf32> to vector<2x8x1xf32>
    %90 = tpu.reciprocal %89 {approx = true} : vector<2x8x1xf32> -> vector<2x8x1xf32>
    %91 = vector.broadcast %90 : vector<2x8x1xf32> to vector<2x8x8xf32>
    %92 = arith.mulf %87, %91 : vector<2x8x8xf32>
    %93 = arith.truncf %92 : vector<2x8x8xf32> to vector<2x8x8xbf16>
    "tpu.trace_start"() <{level = 10 : i32, message = "nqk,nkd->nqd"}> : () -> ()
    %cst_24 = arith.constant dense<0.000000e+00> : vector<2x8x16xf32>
    %94 = tpu.matmul %93, %81, %cst_24 {dimension_numbers = #tpu.dot_dimension_numbers<[2], [1], [1], [2], [0, 0, 0, 1, 1, 2], [0], [0]>} : vector<2x8x8xbf16>, vector<2x8x16xbf16>, vector<2x8x16xf32> -> vector<2x8x16xf32>
    "tpu.trace_stop"() : () -> ()
    %95 = vector.extract_strided_slice %14 {offsets = [0, 0, 64], sizes = [2, 8, 16], strides = [1, 1, 1]} : vector<2x8x128xf32> to vector<2x8x16xf32>
    %96 = arith.truncf %95 : vector<2x8x16xf32> to vector<2x8x16xbf16>
    %97 = vector.extract_strided_slice %16 {offsets = [0, 0, 64], sizes = [2, 8, 16], strides = [1, 1, 1]} : vector<2x8x128xf32> to vector<2x8x16xf32>
    %98 = arith.truncf %97 : vector<2x8x16xf32> to vector<2x8x16xbf16>
    %99 = vector.extract_strided_slice %18 {offsets = [0, 0, 64], sizes = [2, 8, 16], strides = [1, 1, 1]} : vector<2x8x128xf32> to vector<2x8x16xf32>
    %100 = arith.truncf %99 : vector<2x8x16xf32> to vector<2x8x16xbf16>
    "tpu.trace_start"() <{level = 10 : i32, message = "nqd,nkd->nqk"}> : () -> ()
    %cst_25 = arith.constant dense<0.000000e+00> : vector<2x8x8xf32>
    %101 = tpu.matmul %96, %98, %cst_25 {dimension_numbers = #tpu.dot_dimension_numbers<[2], [2], [1], [1], [0, 0, 0, 1, 1, 1], [0], [0]>} : vector<2x8x16xbf16>, vector<2x8x16xbf16>, vector<2x8x8xf32> -> vector<2x8x8xf32>
    "tpu.trace_stop"() : () -> ()
    %cst_26 = arith.constant dense<0xFF800000> : vector<2x8xf32>
    %102 = vector.multi_reduction <maximumf>, %101, %cst_26 [2] : vector<2x8x8xf32> to vector<2x8xf32>
    %103 = vector.shape_cast %102 : vector<2x8xf32> to vector<2x8x1xf32>
    %104 = vector.broadcast %103 : vector<2x8x1xf32> to vector<2x8x8xf32>
    %105 = arith.subf %101, %104 : vector<2x8x8xf32>
    %106 = math.exp %105 : vector<2x8x8xf32>
    %cst_27 = arith.constant dense<0.000000e+00> : vector<2x8xf32>
    %107 = vector.multi_reduction <add>, %106, %cst_27 [2] : vector<2x8x8xf32> to vector<2x8xf32>
    %108 = vector.shape_cast %107 : vector<2x8xf32> to vector<2x8x1xf32>
    %109 = tpu.reciprocal %108 {approx = true} : vector<2x8x1xf32> -> vector<2x8x1xf32>
    %110 = vector.broadcast %109 : vector<2x8x1xf32> to vector<2x8x8xf32>
    %111 = arith.mulf %106, %110 : vector<2x8x8xf32>
    %112 = arith.truncf %111 : vector<2x8x8xf32> to vector<2x8x8xbf16>
    "tpu.trace_start"() <{level = 10 : i32, message = "nqk,nkd->nqd"}> : () -> ()
    %cst_28 = arith.constant dense<0.000000e+00> : vector<2x8x16xf32>
    %113 = tpu.matmul %112, %100, %cst_28 {dimension_numbers = #tpu.dot_dimension_numbers<[2], [1], [1], [2], [0, 0, 0, 1, 1, 2], [0], [0]>} : vector<2x8x8xbf16>, vector<2x8x16xbf16>, vector<2x8x16xf32> -> vector<2x8x16xf32>
    "tpu.trace_stop"() : () -> ()
    %114 = vector.extract_strided_slice %14 {offsets = [0, 0, 80], sizes = [2, 8, 16], strides = [1, 1, 1]} : vector<2x8x128xf32> to vector<2x8x16xf32>
    %115 = arith.truncf %114 : vector<2x8x16xf32> to vector<2x8x16xbf16>
    %116 = vector.extract_strided_slice %16 {offsets = [0, 0, 80], sizes = [2, 8, 16], strides = [1, 1, 1]} : vector<2x8x128xf32> to vector<2x8x16xf32>
    %117 = arith.truncf %116 : vector<2x8x16xf32> to vector<2x8x16xbf16>
    %118 = vector.extract_strided_slice %18 {offsets = [0, 0, 80], sizes = [2, 8, 16], strides = [1, 1, 1]} : vector<2x8x128xf32> to vector<2x8x16xf32>
    %119 = arith.truncf %118 : vector<2x8x16xf32> to vector<2x8x16xbf16>
    "tpu.trace_start"() <{level = 10 : i32, message = "nqd,nkd->nqk"}> : () -> ()
    %cst_29 = arith.constant dense<0.000000e+00> : vector<2x8x8xf32>
    %120 = tpu.matmul %115, %117, %cst_29 {dimension_numbers = #tpu.dot_dimension_numbers<[2], [2], [1], [1], [0, 0, 0, 1, 1, 1], [0], [0]>} : vector<2x8x16xbf16>, vector<2x8x16xbf16>, vector<2x8x8xf32> -> vector<2x8x8xf32>
    "tpu.trace_stop"() : () -> ()
    %cst_30 = arith.constant dense<0xFF800000> : vector<2x8xf32>
    %121 = vector.multi_reduction <maximumf>, %120, %cst_30 [2] : vector<2x8x8xf32> to vector<2x8xf32>
    %122 = vector.shape_cast %121 : vector<2x8xf32> to vector<2x8x1xf32>
    %123 = vector.broadcast %122 : vector<2x8x1xf32> to vector<2x8x8xf32>
    %124 = arith.subf %120, %123 : vector<2x8x8xf32>
    %125 = math.exp %124 : vector<2x8x8xf32>
    %cst_31 = arith.constant dense<0.000000e+00> : vector<2x8xf32>
    %126 = vector.multi_reduction <add>, %125, %cst_31 [2] : vector<2x8x8xf32> to vector<2x8xf32>
    %127 = vector.shape_cast %126 : vector<2x8xf32> to vector<2x8x1xf32>
    %128 = tpu.reciprocal %127 {approx = true} : vector<2x8x1xf32> -> vector<2x8x1xf32>
    %129 = vector.broadcast %128 : vector<2x8x1xf32> to vector<2x8x8xf32>
    %130 = arith.mulf %125, %129 : vector<2x8x8xf32>
    %131 = arith.truncf %130 : vector<2x8x8xf32> to vector<2x8x8xbf16>
    "tpu.trace_start"() <{level = 10 : i32, message = "nqk,nkd->nqd"}> : () -> ()
    %cst_32 = arith.constant dense<0.000000e+00> : vector<2x8x16xf32>
    %132 = tpu.matmul %131, %119, %cst_32 {dimension_numbers = #tpu.dot_dimension_numbers<[2], [1], [1], [2], [0, 0, 0, 1, 1, 2], [0], [0]>} : vector<2x8x8xbf16>, vector<2x8x16xbf16>, vector<2x8x16xf32> -> vector<2x8x16xf32>
    "tpu.trace_stop"() : () -> ()
    %133 = vector.extract_strided_slice %14 {offsets = [0, 0, 96], sizes = [2, 8, 16], strides = [1, 1, 1]} : vector<2x8x128xf32> to vector<2x8x16xf32>
    %134 = arith.truncf %133 : vector<2x8x16xf32> to vector<2x8x16xbf16>
    %135 = vector.extract_strided_slice %16 {offsets = [0, 0, 96], sizes = [2, 8, 16], strides = [1, 1, 1]} : vector<2x8x128xf32> to vector<2x8x16xf32>
    %136 = arith.truncf %135 : vector<2x8x16xf32> to vector<2x8x16xbf16>
    %137 = vector.extract_strided_slice %18 {offsets = [0, 0, 96], sizes = [2, 8, 16], strides = [1, 1, 1]} : vector<2x8x128xf32> to vector<2x8x16xf32>
    %138 = arith.truncf %137 : vector<2x8x16xf32> to vector<2x8x16xbf16>
    "tpu.trace_start"() <{level = 10 : i32, message = "nqd,nkd->nqk"}> : () -> ()
    %cst_33 = arith.constant dense<0.000000e+00> : vector<2x8x8xf32>
    %139 = tpu.matmul %134, %136, %cst_33 {dimension_numbers = #tpu.dot_dimension_numbers<[2], [2], [1], [1], [0, 0, 0, 1, 1, 1], [0], [0]>} : vector<2x8x16xbf16>, vector<2x8x16xbf16>, vector<2x8x8xf32> -> vector<2x8x8xf32>
    "tpu.trace_stop"() : () -> ()
    %cst_34 = arith.constant dense<0xFF800000> : vector<2x8xf32>
    %140 = vector.multi_reduction <maximumf>, %139, %cst_34 [2] : vector<2x8x8xf32> to vector<2x8xf32>
    %141 = vector.shape_cast %140 : vector<2x8xf32> to vector<2x8x1xf32>
    %142 = vector.broadcast %141 : vector<2x8x1xf32> to vector<2x8x8xf32>
    %143 = arith.subf %139, %142 : vector<2x8x8xf32>
    %144 = math.exp %143 : vector<2x8x8xf32>
    %cst_35 = arith.constant dense<0.000000e+00> : vector<2x8xf32>
    %145 = vector.multi_reduction <add>, %144, %cst_35 [2] : vector<2x8x8xf32> to vector<2x8xf32>
    %146 = vector.shape_cast %145 : vector<2x8xf32> to vector<2x8x1xf32>
    %147 = tpu.reciprocal %146 {approx = true} : vector<2x8x1xf32> -> vector<2x8x1xf32>
    %148 = vector.broadcast %147 : vector<2x8x1xf32> to vector<2x8x8xf32>
    %149 = arith.mulf %144, %148 : vector<2x8x8xf32>
    %150 = arith.truncf %149 : vector<2x8x8xf32> to vector<2x8x8xbf16>
    "tpu.trace_start"() <{level = 10 : i32, message = "nqk,nkd->nqd"}> : () -> ()
    %cst_36 = arith.constant dense<0.000000e+00> : vector<2x8x16xf32>
    %151 = tpu.matmul %150, %138, %cst_36 {dimension_numbers = #tpu.dot_dimension_numbers<[2], [1], [1], [2], [0, 0, 0, 1, 1, 2], [0], [0]>} : vector<2x8x8xbf16>, vector<2x8x16xbf16>, vector<2x8x16xf32> -> vector<2x8x16xf32>
    "tpu.trace_stop"() : () -> ()
    %152 = vector.extract_strided_slice %14 {offsets = [0, 0, 112], sizes = [2, 8, 16], strides = [1, 1, 1]} : vector<2x8x128xf32> to vector<2x8x16xf32>
    %153 = arith.truncf %152 : vector<2x8x16xf32> to vector<2x8x16xbf16>
    %154 = vector.extract_strided_slice %16 {offsets = [0, 0, 112], sizes = [2, 8, 16], strides = [1, 1, 1]} : vector<2x8x128xf32> to vector<2x8x16xf32>
    %155 = arith.truncf %154 : vector<2x8x16xf32> to vector<2x8x16xbf16>
    %156 = vector.extract_strided_slice %18 {offsets = [0, 0, 112], sizes = [2, 8, 16], strides = [1, 1, 1]} : vector<2x8x128xf32> to vector<2x8x16xf32>
    %157 = arith.truncf %156 : vector<2x8x16xf32> to vector<2x8x16xbf16>
    "tpu.trace_start"() <{level = 10 : i32, message = "nqd,nkd->nqk"}> : () -> ()
    %cst_37 = arith.constant dense<0.000000e+00> : vector<2x8x8xf32>
    %158 = tpu.matmul %153, %155, %cst_37 {dimension_numbers = #tpu.dot_dimension_numbers<[2], [2], [1], [1], [0, 0, 0, 1, 1, 1], [0], [0]>} : vector<2x8x16xbf16>, vector<2x8x16xbf16>, vector<2x8x8xf32> -> vector<2x8x8xf32>
    "tpu.trace_stop"() : () -> ()
    %cst_38 = arith.constant dense<0xFF800000> : vector<2x8xf32>
    %159 = vector.multi_reduction <maximumf>, %158, %cst_38 [2] : vector<2x8x8xf32> to vector<2x8xf32>
    %160 = vector.shape_cast %159 : vector<2x8xf32> to vector<2x8x1xf32>
    %161 = vector.broadcast %160 : vector<2x8x1xf32> to vector<2x8x8xf32>
    %162 = arith.subf %158, %161 : vector<2x8x8xf32>
    %163 = math.exp %162 : vector<2x8x8xf32>
    %cst_39 = arith.constant dense<0.000000e+00> : vector<2x8xf32>
    %164 = vector.multi_reduction <add>, %163, %cst_39 [2] : vector<2x8x8xf32> to vector<2x8xf32>
    %165 = vector.shape_cast %164 : vector<2x8xf32> to vector<2x8x1xf32>
    %166 = tpu.reciprocal %165 {approx = true} : vector<2x8x1xf32> -> vector<2x8x1xf32>
    %167 = vector.broadcast %166 : vector<2x8x1xf32> to vector<2x8x8xf32>
    %168 = arith.mulf %163, %167 : vector<2x8x8xf32>
    %169 = arith.truncf %168 : vector<2x8x8xf32> to vector<2x8x8xbf16>
    "tpu.trace_start"() <{level = 10 : i32, message = "nqk,nkd->nqd"}> : () -> ()
    %cst_40 = arith.constant dense<0.000000e+00> : vector<2x8x16xf32>
    %170 = tpu.matmul %169, %157, %cst_40 {dimension_numbers = #tpu.dot_dimension_numbers<[2], [1], [1], [2], [0, 0, 0, 1, 1, 2], [0], [0]>} : vector<2x8x8xbf16>, vector<2x8x16xbf16>, vector<2x8x16xf32> -> vector<2x8x16xf32>
    "tpu.trace_stop"() : () -> ()
    %171 = tpu.concatenate %37, %56, %75, %94, %113, %132, %151, %170 in 2 : vector<2x8x16xf32>, vector<2x8x16xf32>, vector<2x8x16xf32>, vector<2x8x16xf32>, vector<2x8x16xf32>, vector<2x8x16xf32>, vector<2x8x16xf32>, vector<2x8x16xf32> -> vector<2x8x128xf32>
    %172 = vector.shape_cast %171 : vector<2x8x128xf32> to vector<16x128xf32>
    %173 = arith.truncf %172 : vector<16x128xf32> to vector<16x128xbf16>
    %c0_41 = arith.constant 0 : index
    %c0_42 = arith.constant 0 : index
    %c0_43 = arith.constant 0 : index
    %174 = vector.load %arg4[%c0_41, %c0_42, %c0_43] : memref<1x128x128xbf16, #tpu.memory_space<vmem>>, vector<1x128x128xbf16>
    %175 = vector.shape_cast %174 : vector<1x128x128xbf16> to vector<128x128xbf16>
    %cst_44 = arith.constant dense<0.000000e+00> : vector<16x128xf32>
    %176 = tpu.matmul %173, %175, %cst_44 {dimension_numbers = #tpu.dot_dimension_numbers<[1], [0], [0], [1], [0, 0, 1, 1], [], []>} : vector<16x128xbf16>, vector<128x128xbf16>, vector<16x128xf32> -> vector<16x128xf32>
    %c0_45 = arith.constant 0 : index
    %c0_46 = arith.constant 0 : index
    %c0_47 = arith.constant 0 : index
    %177 = vector.load %arg5[%c0_45, %c0_46, %c0_47] : memref<1x1x128xf32, #tpu.memory_space<vmem>>, vector<1x1x128xf32>
    %178 = vector.shape_cast %177 : vector<1x1x128xf32> to vector<1x128xf32>
    %179 = vector.broadcast %178 : vector<1x128xf32> to vector<16x128xf32>
    %180 = arith.addf %176, %179 : vector<16x128xf32>
    %181 = arith.addf %4, %180 : vector<16x128xf32>
    %c0_48 = arith.constant 0 : index
    %c0_49 = arith.constant 0 : index
    %c0_50 = arith.constant 0 : index
    %182 = vector.load %arg6[%c0_48, %c0_49, %c0_50] : memref<1x1x128xf32, #tpu.memory_space<vmem>>, vector<1x1x128xf32>
    %183 = vector.shape_cast %182 : vector<1x1x128xf32> to vector<1x128xf32>
    %c0_51 = arith.constant 0 : index
    %c0_52 = arith.constant 0 : index
    %c0_53 = arith.constant 0 : index
    %184 = vector.load %arg7[%c0_51, %c0_52, %c0_53] : memref<1x1x128xf32, #tpu.memory_space<vmem>>, vector<1x1x128xf32>
    %185 = vector.shape_cast %184 : vector<1x1x128xf32> to vector<1x128xf32>
    %cst_54 = arith.constant dense<0.000000e+00> : vector<16xf32>
    %186 = vector.multi_reduction <add>, %181, %cst_54 [1] : vector<16x128xf32> to vector<16xf32>
    %187 = vector.shape_cast %186 : vector<16xf32> to vector<16x1xf32>
    %cst_55 = arith.constant 1.280000e+02 : f32
    %188 = vector.broadcast %cst_55 : f32 to vector<16x1xf32>
    %189 = arith.divf %187, %188 : vector<16x1xf32>
    %190 = vector.broadcast %189 : vector<16x1xf32> to vector<16x128xf32>
    %191 = arith.subf %181, %190 : vector<16x128xf32>
    %192 = arith.mulf %191, %191 : vector<16x128xf32>
    %cst_56 = arith.constant dense<0.000000e+00> : vector<16xf32>
    %193 = vector.multi_reduction <add>, %192, %cst_56 [1] : vector<16x128xf32> to vector<16xf32>
    %194 = vector.shape_cast %193 : vector<16xf32> to vector<16x1xf32>
    %cst_57 = arith.constant 1.280000e+02 : f32
    %195 = vector.broadcast %cst_57 : f32 to vector<16x1xf32>
    %196 = arith.divf %194, %195 : vector<16x1xf32>
    %cst_58 = arith.constant 9.99999974E-6 : f32
    %197 = vector.broadcast %cst_58 : f32 to vector<16x1xf32>
    %198 = arith.addf %196, %197 : vector<16x1xf32>
    %199 = math.rsqrt %198 : vector<16x1xf32>
    %200 = vector.broadcast %199 : vector<16x1xf32> to vector<16x128xf32>
    %201 = arith.mulf %191, %200 : vector<16x128xf32>
    %202 = vector.broadcast %183 : vector<1x128xf32> to vector<16x128xf32>
    %203 = arith.mulf %201, %202 : vector<16x128xf32>
    %204 = vector.broadcast %185 : vector<1x128xf32> to vector<16x128xf32>
    %205 = arith.addf %203, %204 : vector<16x128xf32>
    %206 = arith.truncf %205 : vector<16x128xf32> to vector<16x128xbf16>
    %c0_59 = arith.constant 0 : index
    %c0_60 = arith.constant 0 : index
    %c0_61 = arith.constant 0 : index
    %207 = vector.load %arg8[%c0_59, %c0_60, %c0_61] : memref<1x128x512xbf16, #tpu.memory_space<vmem>>, vector<1x128x512xbf16>
    %208 = vector.shape_cast %207 : vector<1x128x512xbf16> to vector<128x512xbf16>
    %cst_62 = arith.constant dense<0.000000e+00> : vector<16x512xf32>
    %209 = tpu.matmul %206, %208, %cst_62 {dimension_numbers = #tpu.dot_dimension_numbers<[1], [0], [0], [1], [0, 0, 1, 1], [], []>} : vector<16x128xbf16>, vector<128x512xbf16>, vector<16x512xf32> -> vector<16x512xf32>
    %c0_63 = arith.constant 0 : index
    %c0_64 = arith.constant 0 : index
    %c0_65 = arith.constant 0 : index
    %210 = vector.load %arg9[%c0_63, %c0_64, %c0_65] : memref<1x1x512xf32, #tpu.memory_space<vmem>>, vector<1x1x512xf32>
    %211 = vector.shape_cast %210 : vector<1x1x512xf32> to vector<1x512xf32>
    %212 = vector.broadcast %211 : vector<1x512xf32> to vector<16x512xf32>
    %213 = arith.addf %209, %212 : vector<16x512xf32>
    %cst_66 = arith.constant 0.000000e+00 : f32
    %214 = vector.broadcast %cst_66 : f32 to vector<16x512xf32>
    %215 = arith.maximumf %213, %214 : vector<16x512xf32>
    %216 = arith.truncf %215 : vector<16x512xf32> to vector<16x512xbf16>
    %c0_67 = arith.constant 0 : index
    %c0_68 = arith.constant 0 : index
    %c0_69 = arith.constant 0 : index
    %217 = vector.load %arg10[%c0_67, %c0_68, %c0_69] : memref<1x512x128xbf16, #tpu.memory_space<vmem>>, vector<1x512x128xbf16>
    %218 = vector.shape_cast %217 : vector<1x512x128xbf16> to vector<512x128xbf16>
    %cst_70 = arith.constant dense<0.000000e+00> : vector<16x128xf32>
    %219 = tpu.matmul %216, %218, %cst_70 {dimension_numbers = #tpu.dot_dimension_numbers<[1], [0], [0], [1], [0, 0, 1, 1], [], []>} : vector<16x512xbf16>, vector<512x128xbf16>, vector<16x128xf32> -> vector<16x128xf32>
    %c0_71 = arith.constant 0 : index
    %c0_72 = arith.constant 0 : index
    %c0_73 = arith.constant 0 : index
    %220 = vector.load %arg11[%c0_71, %c0_72, %c0_73] : memref<1x1x128xf32, #tpu.memory_space<vmem>>, vector<1x1x128xf32>
    %221 = vector.shape_cast %220 : vector<1x1x128xf32> to vector<1x128xf32>
    %222 = vector.broadcast %221 : vector<1x128xf32> to vector<16x128xf32>
    %223 = arith.addf %219, %222 : vector<16x128xf32>
    %224 = arith.addf %205, %223 : vector<16x128xf32>
    %c0_74 = arith.constant 0 : index
    %c0_75 = arith.constant 0 : index
    %c0_76 = arith.constant 0 : index
    %225 = vector.load %arg12[%c0_74, %c0_75, %c0_76] : memref<1x1x128xf32, #tpu.memory_space<vmem>>, vector<1x1x128xf32>
    %226 = vector.shape_cast %225 : vector<1x1x128xf32> to vector<1x128xf32>
    %c0_77 = arith.constant 0 : index
    %c0_78 = arith.constant 0 : index
    %c0_79 = arith.constant 0 : index
    %227 = vector.load %arg13[%c0_77, %c0_78, %c0_79] : memref<1x1x128xf32, #tpu.memory_space<vmem>>, vector<1x1x128xf32>
    %228 = vector.shape_cast %227 : vector<1x1x128xf32> to vector<1x128xf32>
    %cst_80 = arith.constant dense<0.000000e+00> : vector<16xf32>
    %229 = vector.multi_reduction <add>, %224, %cst_80 [1] : vector<16x128xf32> to vector<16xf32>
    %230 = vector.shape_cast %229 : vector<16xf32> to vector<16x1xf32>
    %cst_81 = arith.constant 1.280000e+02 : f32
    %231 = vector.broadcast %cst_81 : f32 to vector<16x1xf32>
    %232 = arith.divf %230, %231 : vector<16x1xf32>
    %233 = vector.broadcast %232 : vector<16x1xf32> to vector<16x128xf32>
    %234 = arith.subf %224, %233 : vector<16x128xf32>
    %235 = arith.mulf %234, %234 : vector<16x128xf32>
    %cst_82 = arith.constant dense<0.000000e+00> : vector<16xf32>
    %236 = vector.multi_reduction <add>, %235, %cst_82 [1] : vector<16x128xf32> to vector<16xf32>
    %237 = vector.shape_cast %236 : vector<16xf32> to vector<16x1xf32>
    %cst_83 = arith.constant 1.280000e+02 : f32
    %238 = vector.broadcast %cst_83 : f32 to vector<16x1xf32>
    %239 = arith.divf %237, %238 : vector<16x1xf32>
    %cst_84 = arith.constant 9.99999974E-6 : f32
    %240 = vector.broadcast %cst_84 : f32 to vector<16x1xf32>
    %241 = arith.addf %239, %240 : vector<16x1xf32>
    %242 = math.rsqrt %241 : vector<16x1xf32>
    %243 = vector.broadcast %242 : vector<16x1xf32> to vector<16x128xf32>
    %244 = arith.mulf %234, %243 : vector<16x128xf32>
    %245 = vector.broadcast %226 : vector<1x128xf32> to vector<16x128xf32>
    %246 = arith.mulf %244, %245 : vector<16x128xf32>
    %247 = vector.broadcast %228 : vector<1x128xf32> to vector<16x128xf32>
    %248 = arith.addf %246, %247 : vector<16x128xf32>
    %249 = vector.shape_cast %248 : vector<16x128xf32> to vector<2x8x128xf32>
    %c0_85 = arith.constant 0 : index
    %c0_86 = arith.constant 0 : index
    %c0_87 = arith.constant 0 : index
    %250 = vector.load %arg14[%c0_85, %c0_86, %c0_87] : memref<2x8x128xf32, #tpu.memory_space<vmem>>, vector<2x8x128xf32>
    tpu.vector_store %arg14[%c0_85, %c0_86, %c0_87], %249 {strides = array<i32>} : memref<2x8x128xf32, #tpu.memory_space<vmem>>, vector<2x8x128xf32>,
    return
  }
  func.func @transform_0(%arg0: i32) -> (i32, i32, i32) {
    %c0_i32 = arith.constant 0 : i32
    %c0_i32_0 = arith.constant 0 : i32
    %c0_i32_1 = arith.constant 0 : i32
    %c0_i32_2 = arith.constant 0 : i32
    return %c0_i32, %c0_i32_0, %c0_i32_1 : i32, i32, i32
  }
  func.func @transform_1(%arg0: i32) -> (i32, i32, i32) {
    %c0_i32 = arith.constant 0 : i32
    %c0_i32_0 = arith.constant 0 : i32
    %c0_i32_1 = arith.constant 0 : i32
    return %arg0, %c0_i32, %c0_i32_0 : i32, i32, i32
  }
  func.func @transform_2(%arg0: i32) -> (i32, i32, i32) {
    %c0_i32 = arith.constant 0 : i32
    %c0_i32_0 = arith.constant 0 : i32
    %c0_i32_1 = arith.constant 0 : i32
    return %arg0, %c0_i32, %c0_i32_0 : i32, i32, i32
  }
  func.func @transform_3(%arg0: i32) -> (i32, i32, i32) {
    %c0_i32 = arith.constant 0 : i32
    %c0_i32_0 = arith.constant 0 : i32
    %c0_i32_1 = arith.constant 0 : i32
    return %arg0, %c0_i32, %c0_i32_0 : i32, i32, i32
  }
  func.func @transform_4(%arg0: i32) -> (i32, i32, i32) {
    %c0_i32 = arith.constant 0 : i32
    %c0_i32_0 = arith.constant 0 : i32
    %c0_i32_1 = arith.constant 0 : i32
    return %arg0, %c0_i32, %c0_i32_0 : i32, i32, i32
  }
  func.func @transform_5(%arg0: i32) -> (i32, i32, i32) {
    %c0_i32 = arith.constant 0 : i32
    %c0_i32_0 = arith.constant 0 : i32
    %c0_i32_1 = arith.constant 0 : i32
    return %arg0, %c0_i32, %c0_i32_0 : i32, i32, i32
  }
  func.func @transform_6(%arg0: i32) -> (i32, i32, i32) {
    %c0_i32 = arith.constant 0 : i32
    %c0_i32_0 = arith.constant 0 : i32
    %c0_i32_1 = arith.constant 0 : i32
    return %arg0, %c0_i32, %c0_i32_0 : i32, i32, i32
  }
  func.func @transform_7(%arg0: i32) -> (i32, i32, i32) {
    %c0_i32 = arith.constant 0 : i32
    %c0_i32_0 = arith.constant 0 : i32
    %c0_i32_1 = arith.constant 0 : i32
    return %arg0, %c0_i32, %c0_i32_0 : i32, i32, i32
  }
  func.func @transform_8(%arg0: i32) -> (i32, i32, i32) {
    %c0_i32 = arith.constant 0 : i32
    %c0_i32_0 = arith.constant 0 : i32
    %c0_i32_1 = arith.constant 0 : i32
    return %arg0, %c0_i32, %c0_i32_0 : i32, i32, i32
  }
  func.func @transform_9(%arg0: i32) -> (i32, i32, i32) {
    %c0_i32 = arith.constant 0 : i32
    %c0_i32_0 = arith.constant 0 : i32
    %c0_i32_1 = arith.constant 0 : i32
    return %arg0, %c0_i32, %c0_i32_0 : i32, i32, i32
  }
  func.func @transform_10(%arg0: i32) -> (i32, i32, i32) {
    %c0_i32 = arith.constant 0 : i32
    %c0_i32_0 = arith.constant 0 : i32
    %c0_i32_1 = arith.constant 0 : i32
    return %arg0, %c0_i32, %c0_i32_0 : i32, i32, i32
  }
  func.func @transform_11(%arg0: i32) -> (i32, i32, i32) {
    %c0_i32 = arith.constant 0 : i32
    %c0_i32_0 = arith.constant 0 : i32
    %c0_i32_1 = arith.constant 0 : i32
    return %arg0, %c0_i32, %c0_i32_0 : i32, i32, i32
  }
  func.func @transform_12(%arg0: i32) -> (i32, i32, i32) {
    %c0_i32 = arith.constant 0 : i32
    %c0_i32_0 = arith.constant 0 : i32
    %c0_i32_1 = arith.constant 0 : i32
    return %arg0, %c0_i32, %c0_i32_0 : i32, i32, i32
  }
  func.func @transform_13(%arg0: i32) -> (i32, i32, i32) {
    %c0_i32 = arith.constant 0 : i32
    %c0_i32_0 = arith.constant 0 : i32
    %c0_i32_1 = arith.constant 0 : i32
    %c0_i32_2 = arith.constant 0 : i32
    return %c0_i32, %c0_i32_0, %c0_i32_1 : i32, i32, i32
  }
}

</mosaic_0001>

<llo_original>
// kernel: transformer_forward.3
$region0: #{transformer_forward.3}
  #allocation0 [shape = 'u32[]', space=smem, size = 0x4, offset = 0x4, fixed_abs, tag = 'smem constant byte address 0x4 - core index']
  #allocation1 [shape = 'u32[144,128]{1,0:T(1,128)}', space=vmem, size = 0x12000, scoped, tag = 'internal scratch']
  %s0 = inlined_call_operand.vmem [shape: f32[16,128], index: 0, kind: input, shape index: {}]
  %s1 = inlined_call_operand.hbm [shape: bf16[128,30720], index: 1, kind: input, shape index: {}]
  %s2 = inlined_call_operand.hbm [shape: f32[1,30720], index: 2, kind: input, shape index: {}]
  %s3 = inlined_call_operand.vmem [shape: f32[16,30720], index: 3, kind: output, shape index: {}]
  %s4 = sld [smem:[#allocation0]]
  $region72: #{transformer_forward.3} parent=0
    _
  %s6 = ssub.s32 1, %s4
  %s7 = scalar_select 0, %s6, %s4
  $region1: #{transformer_forward.3} parent=0
    #allocation2 [shape = 'u8[1048576]{0}', space=vmem, size = 0x100000, scoped, tag = 'input window, operand 1']
    #allocation3 [shape = 's32[2]{0}', space=sflag, size = 0x8, scoped, tag = 'scoped memory for transformer_forward.3']
    #allocation4 [shape = 'u8[16384]{0}', space=vmem, size = 0x4000, scoped, tag = 'input window, operand 2']
    #allocation5 [shape = 's32[2]{0}', space=sflag, size = 0x8, scoped, tag = 'scoped memory for transformer_forward.3']
    #allocation6 [shape = 'u8[262144]{0}', space=vmem, size = 0x40000, scoped, tag = 'output window, operand 0']
    %8 = vsyncpa [#allocation3], 0
    %s9 = scalar_lea.sflag [#allocation3], 1
    %10 = vsyncpa %s9, 0
    %11 = vsyncpa [#allocation5], 0
    %s12 = scalar_lea.sflag [#allocation5], 1
    %13 = vsyncpa %s12, 0
    loop: start=0, step=1, limit=17
    $region2: #{transformer_forward.3} parent=1 // loop_pre_header
      _
    $region3: #{transformer_forward.3} parent=1 // loop_header
      %s15 = sphi 0, %s19
      %p16 = scmp.ge.s32.totalorder %s15, 17
      %s23 = sphi 0, %s23
      %s25 = sphi 0, %s23
      %s26 = sphi 0, %s25
      %s40 = sphi 0, %s26
      %s46 = sphi 0, %s48
      %s49 = sphi 0, %s46
      %s50 = sphi 0, %s49
      %s66 = sphi 0, %s50
      %s72 = sphi 0, %s74
      %s75 = sphi 0, %s72
      %s76 = sphi 0, %s75
      %s92 = sphi 0, %s76
      %s98 = sphi 0, %s100
      %s101 = sphi 0, %s98
      %s102 = sphi 0, %s101
      %s118 = sphi 0, %s102
    $region4: #{transformer_forward.3} parent=1 // loop_header_branch
      %18 = sbr.rel (%p16) target = $region8
    $region5: #{transformer_forward.3} parent=1 // loop_body
      %s20 = ssub.s32 %s15, 1
      %s21 = ssub.s32 %s15, 2
      %s22 = sadd.s32 %s15, 1
      %s24 = sadd.s32 %s23, 1
      %p27 = scmp.eq.s32.totalorder %s15, 14
      %p28 = scmp.ne.s32.totalorder %s23, %s25
      %p29 = scmp.eq.s32.totalorder %s15, 0
      %p30 = por %p28, %p29
      %p31 = scmp.ne.s32.totalorder %s23, %s25
      %p32 = scmp.eq.s32.totalorder %s20, 14
      %p33 = por %p31, %p32
      %p34 = scmp.ne.s32.totalorder %s25, %s26
      %p35 = scmp.eq.s32.totalorder %s20, 0
      %p36 = por %p34, %p35
      %p37 = scmp.ne.s32.totalorder %s25, %s26
      %p38 = scmp.eq.s32.totalorder %s21, 14
      %p39 = por %p37, %p38
      %p41 = scmp.ne.s32.totalorder %s26, %s40
      %p42 = scmp.eq.s32.totalorder %s21, 0
      %p43 = por %p41, %p42
      %s44 = ssub.s32 %s15, %s22
      %p45 = scmp.eq.s32.totalorder %s44, 0
      %s47 = sadd.s32 %s46, 1
      %s48 = scalar_select %p45, %s46, %s47
      %p51 = pneg %p45
      %p52 = scmp.eq.s32.totalorder %s15, 14
      %p53 = por %p51, %p52
      %p54 = scmp.ne.s32.totalorder %s46, %s49
      %p55 = scmp.eq.s32.totalorder %s15, 0
      %p56 = por %p54, %p55
      %p57 = scmp.ne.s32.totalorder %s46, %s49
      %p58 = scmp.eq.s32.totalorder %s20, 14
      %p59 = por %p57, %p58
      %p60 = scmp.ne.s32.totalorder %s49, %s50
      %p61 = scmp.eq.s32.totalorder %s20, 0
      %p62 = por %p60, %p61
      %p63 = scmp.ne.s32.totalorder %s49, %s50
      %p64 = scmp.eq.s32.totalorder %s21, 14
      %p65 = por %p63, %p64
      %p67 = scmp.ne.s32.totalorder %s50, %s66
      %p68 = scmp.eq.s32.totalorder %s21, 0
      %p69 = por %p67, %p68
      %s70 = ssub.s32 %s15, %s22
      %p71 = scmp.eq.s32.totalorder %s70, 0
      %s73 = sadd.s32 %s72, 1
      %s74 = scalar_select %p71, %s72, %s73
      %p77 = pneg %p71
      %p78 = scmp.eq.s32.totalorder %s15, 14
      %p79 = por %p77, %p78
      %p80 = scmp.ne.s32.totalorder %s72, %s75
      %p81 = scmp.eq.s32.totalorder %s15, 0
      %p82 = por %p80, %p81
      %p83 = scmp.ne.s32.totalorder %s72, %s75
      %p84 = scmp.eq.s32.totalorder %s20, 14
      %p85 = por %p83, %p84
      %p86 = scmp.ne.s32.totalorder %s75, %s76
      %p87 = scmp.eq.s32.totalorder %s20, 0
      %p88 = por %p86, %p87
      %p89 = scmp.ne.s32.totalorder %s75, %s76
      %p90 = scmp.eq.s32.totalorder %s21, 14
      %p91 = por %p89, %p90
      %p93 = scmp.ne.s32.totalorder %s76, %s92
      %p94 = scmp.eq.s32.totalorder %s21, 0
      %p95 = por %p93, %p94
      %s96 = ssub.s32 %s15, %s22
      %p97 = scmp.eq.s32.totalorder %s96, 0
      %s99 = sadd.s32 %s98, 1
      %s100 = scalar_select %p97, %s98, %s99
      %p103 = pneg %p97
      %p104 = scmp.eq.s32.totalorder %s15, 14
      %p105 = por %p103, %p104
      %p106 = scmp.ne.s32.totalorder %s98, %s101
      %p107 = scmp.eq.s32.totalorder %s15, 0
      %p108 = por %p106, %p107
      %p109 = scmp.ne.s32.totalorder %s98, %s101
      %p110 = scmp.eq.s32.totalorder %s20, 14
      %p111 = por %p109, %p110
      %p112 = scmp.ne.s32.totalorder %s101, %s102
      %p113 = scmp.eq.s32.totalorder %s20, 0
      %p114 = por %p112, %p113
      %p115 = scmp.ne.s32.totalorder %s101, %s102
      %p116 = scmp.eq.s32.totalorder %s21, 14
      %p117 = por %p115, %p116
      %p119 = scmp.ne.s32.totalorder %s102, %s118
      %p120 = scmp.eq.s32.totalorder %s21, 0
      %p121 = por %p119, %p120
      %p122 = scmp.le.s32.totalorder 1, %s15
      %p123 = scmp.lt.s32.totalorder %s15, 16
      %p124 = pnand %p122, %p123
      %p125 = pneg %p124
      // Predicated region
      $region9: #{transformer_forward.3} parent=5 // pred_check
        _
      $region10: #{transformer_forward.3} parent=5 // pred_check_branch
        %127 = sbr.rel (%p124) target = $region12
      $region11: #{transformer_forward.3} parent=5 // pred_region
        %s128 = ssub.s32 %s15, 1
        // Predicated region
        $region13: #{transformer_forward.3} parent=11 // pred_check
          %p129 = pneg %p36
        $region14: #{transformer_forward.3} parent=11 // pred_check_branch
          %131 = sbr.rel (%p129) target = $region16
        $region15: #{transformer_forward.3} parent=11 // pred_region
          _
        $region16: #{transformer_forward.3} parent=11 // pred_fallthru
          _
      $region12: #{transformer_forward.3} parent=5 // pred_fallthru
        _
      %p132 = scmp.lt.s32.totalorder %s15, 15
      // Predicated region
      $region17: #{transformer_forward.3} parent=5 // pred_check
        %p133 = pneg %p132
      $region18: #{transformer_forward.3} parent=5 // pred_check_branch
        %135 = sbr.rel (%p133) target = $region20
      $region19: #{transformer_forward.3} parent=5 // pred_region
        // Predicated region
        $region21: #{transformer_forward.3} parent=19 // pred_check
          %p136 = pneg %p56
        $region22: #{transformer_forward.3} parent=19 // pred_check_branch
          %138 = sbr.rel (%p136) target = $region24
        $region23: #{transformer_forward.3} parent=19 // pred_region
          %s139 = sand.u32 %s46, 1
          %s140 = scalar_lea.sflag [#allocation3], %s139
          %s141 = sand.u32 %s46, 1
          %s142 = smul.addr %s141, 1024
          %s143 = scalar_lea.vmem [#allocation2], %s142
          %s144 = smul.u32 16, %s15
          %s146 = ssub.s32 16384, 16384
          %147 = vsyncadd %s140, %s146
          %s148 = smul.addr %s144, 64
          %s149 = scalar_lea.hbm %s1, %s148
          %s150 = sshll.u32 %s143, 4
          %s151 = int_to_ptr.vmem [resolvable:$true] %s150
          %156 = dma.hbm_to_vmem [thread:$0]  %s149, 16384, %s151, %s140, 15360, 1024, 64
        $region24: #{transformer_forward.3} parent=19 // pred_fallthru
          _
        // Predicated region
        $region25: #{transformer_forward.3} parent=19 // pred_check
          %p157 = pneg %p82
        $region26: #{transformer_forward.3} parent=19 // pred_check_branch
          %159 = sbr.rel (%p157) target = $region28
        $region27: #{transformer_forward.3} parent=19 // pred_region
          %s160 = sand.u32 %s72, 1
          %s161 = scalar_lea.sflag [#allocation5], %s160
          %s162 = sand.u32 %s72, 1
          %s163 = smul.addr %s162, 16
          %s164 = scalar_lea.vmem [#allocation4], %s163
          %s165 = smul.u32 16, %s15
          %s167 = ssub.s32 256, 256
          %168 = vsyncadd %s161, %s167
          %s169 = smul.addr %s165, 16
          %s170 = scalar_lea.hbm %s2, %s169
          %s172 = sshll.u32 %s164, 4
          %s173 = int_to_ptr.vmem [resolvable:$true] %s172
          %175 = dma.hbm_to_vmem [thread:$0]  %s170, 256, %s173, %s161
        $region28: #{transformer_forward.3} parent=19 // pred_fallthru
          _
      $region20: #{transformer_forward.3} parent=5 // pred_fallthru
        _
      %p176 = scmp.le.s32.totalorder 1, %s15
      %p177 = scmp.lt.s32.totalorder %s15, 16
      %p178 = pnand %p176, %p177
      %p179 = pneg %p178
      // Predicated region
      $region29: #{transformer_forward.3} parent=5 // pred_check
        _
      $region30: #{transformer_forward.3} parent=5 // pred_check_branch
        %181 = sbr.rel (%p178) target = $region32
      $region31: #{transformer_forward.3} parent=5 // pred_region
        %s182 = ssub.s32 %s15, 1
        %s183 = sand.u32 %s49, 1
        %s184 = scalar_lea.sflag [#allocation3], %s183
        %s185 = sand.u32 %s49, 1
        %s186 = smul.addr %s185, 1024
        %s187 = scalar_lea.vmem [#allocation2], %s186
        // Predicated region
        $region33: #{transformer_forward.3} parent=31 // pred_check
          %p188 = pneg %p62
        $region34: #{transformer_forward.3} parent=31 // pred_check_branch
          %190 = sbr.rel (%p188) target = $region36
        $region35: #{transformer_forward.3} parent=31 // pred_region
          %191 = dma.done %s184, 16384
        $region36: #{transformer_forward.3} parent=31 // pred_fallthru
          _
        %s192 = sand.u32 %s75, 1
        %s193 = scalar_lea.sflag [#allocation5], %s192
        %s194 = sand.u32 %s75, 1
        %s195 = smul.addr %s194, 16
        %s196 = scalar_lea.vmem [#allocation4], %s195
        // Predicated region
        $region37: #{transformer_forward.3} parent=31 // pred_check
          %p197 = pneg %p88
        $region38: #{transformer_forward.3} parent=31 // pred_check_branch
          %199 = sbr.rel (%p197) target = $region40
        $region39: #{transformer_forward.3} parent=31 // pred_region
          %200 = dma.done %s193, 256
        $region40: #{transformer_forward.3} parent=31 // pred_fallthru
          _
        %p201 = pneg %p36
        %p202 = pneg %p33
        %s203 = sand.u32 %s49, 1
        %s204 = scalar_lea.sflag [#allocation3], %s203
        %s205 = sand.u32 %s49, 1
        %s206 = smul.addr %s205, 1024
        %s207 = scalar_lea.vmem [#allocation2], %s206
        %p208 = pneg %p62
        %p209 = pneg %p59
        %s210 = sand.u32 %s75, 1
        %s211 = scalar_lea.sflag [#allocation5], %s210
        %s212 = sand.u32 %s75, 1
        %s213 = smul.addr %s212, 16
        %s214 = scalar_lea.vmem [#allocation4], %s213
        %p215 = pneg %p88
        %p216 = pneg %p85
        %p217 = pneg %p114
        %p218 = pneg %p111
        %s219 = sand.u32 %s101, 1
        %s220 = sand.u32 %s101, 1
        %s221 = smul.addr %s220, 256
        %s222 = scalar_lea.vmem [#allocation6], %s221
        %s223 = smul.u32 16, %s20
        %s224 = smul.u32 16, %s20
        %s225 = smul.u32 16, %s20
        %v227 = vld [vmem:[%s0] sm:$0xff]
        %v228 = vld [vmem:[%s0 + $0x8] sm:$0xff]
        %v229 = vpack.c.bf16 %v228, %v227
        %v230 = vld [vmem:[%s187] sm:$0xff]
        %v231 = vld [vmem:[%s187 + $0x8] sm:$0xff]
        %v232 = vld [vmem:[%s187 + $0x10] sm:$0xff]
        %v233 = vld [vmem:[%s187 + $0x18] sm:$0xff]
        %v234 = vld [vmem:[%s187 + $0x20] sm:$0xff]
        %v235 = vld [vmem:[%s187 + $0x28] sm:$0xff]
        %v236 = vld [vmem:[%s187 + $0x30] sm:$0xff]
        %v237 = vld [vmem:[%s187 + $0x38] sm:$0xff]
        %v238 = vld [vmem:[%s187 + $0x40] sm:$0xff]
        %v239 = vld [vmem:[%s187 + $0x48] sm:$0xff]
        %v240 = vld [vmem:[%s187 + $0x50] sm:$0xff]
        %v241 = vld [vmem:[%s187 + $0x58] sm:$0xff]
        %v242 = vld [vmem:[%s187 + $0x60] sm:$0xff]
        %v243 = vld [vmem:[%s187 + $0x68] sm:$0xff]
        %v244 = vld [vmem:[%s187 + $0x70] sm:$0xff]
        %v245 = vld [vmem:[%s187 + $0x78] sm:$0xff]
        %v246 = vld [vmem:[%s187 + $0x80] sm:$0xff]
        %v247 = vld [vmem:[%s187 + $0x88] sm:$0xff]
        %v248 = vld [vmem:[%s187 + $0x90] sm:$0xff]
        %v249 = vld [vmem:[%s187 + $0x98] sm:$0xff]
        %v250 = vld [vmem:[%s187 + $0xa0] sm:$0xff]
        %v251 = vld [vmem:[%s187 + $0xa8] sm:$0xff]
        %v252 = vld [vmem:[%s187 + $0xb0] sm:$0xff]
        %v253 = vld [vmem:[%s187 + $0xb8] sm:$0xff]
        %v254 = vld [vmem:[%s187 + $0xc0] sm:$0xff]
        %v255 = vld [vmem:[%s187 + $0xc8] sm:$0xff]
        %v256 = vld [vmem:[%s187 + $0xd0] sm:$0xff]
        %v257 = vld [vmem:[%s187 + $0xd8] sm:$0xff]
        %v258 = vld [vmem:[%s187 + $0xe0] sm:$0xff]
        %v259 = vld [vmem:[%s187 + $0xe8] sm:$0xff]
        %v260 = vld [vmem:[%s187 + $0xf0] sm:$0xff]
        %v261 = vld [vmem:[%s187 + $0xf8] sm:$0xff]
        %v262 = vld [vmem:[%s187 + $0x100] sm:$0xff]
        %v263 = vld [vmem:[%s187 + $0x108] sm:$0xff]
        %v264 = vld [vmem:[%s187 + $0x110] sm:$0xff]
        %v265 = vld [vmem:[%s187 + $0x118] sm:$0xff]
        %v266 = vld [vmem:[%s187 + $0x120] sm:$0xff]
        %v267 = vld [vmem:[%s187 + $0x128] sm:$0xff]
        %v268 = vld [vmem:[%s187 + $0x130] sm:$0xff]
        %v269 = vld [vmem:[%s187 + $0x138] sm:$0xff]
        %v270 = vld [vmem:[%s187 + $0x140] sm:$0xff]
        %v271 = vld [vmem:[%s187 + $0x148] sm:$0xff]
        %v272 = vld [vmem:[%s187 + $0x150] sm:$0xff]
        %v273 = vld [vmem:[%s187 + $0x158] sm:$0xff]
        %v274 = vld [vmem:[%s187 + $0x160] sm:$0xff]
        %v275 = vld [vmem:[%s187 + $0x168] sm:$0xff]
        %v276 = vld [vmem:[%s187 + $0x170] sm:$0xff]
        %v277 = vld [vmem:[%s187 + $0x178] sm:$0xff]
        %v278 = vld [vmem:[%s187 + $0x180] sm:$0xff]
        %v279 = vld [vmem:[%s187 + $0x188] sm:$0xff]
        %v280 = vld [vmem:[%s187 + $0x190] sm:$0xff]
        %v281 = vld [vmem:[%s187 + $0x198] sm:$0xff]
        %v282 = vld [vmem:[%s187 + $0x1a0] sm:$0xff]
        %v283 = vld [vmem:[%s187 + $0x1a8] sm:$0xff]
        %v284 = vld [vmem:[%s187 + $0x1b0] sm:$0xff]
        %v285 = vld [vmem:[%s187 + $0x1b8] sm:$0xff]
        %v286 = vld [vmem:[%s187 + $0x1c0] sm:$0xff]
        %v287 = vld [vmem:[%s187 + $0x1c8] sm:$0xff]
        %v288 = vld [vmem:[%s187 + $0x1d0] sm:$0xff]
        %v289 = vld [vmem:[%s187 + $0x1d8] sm:$0xff]
        %v290 = vld [vmem:[%s187 + $0x1e0] sm:$0xff]
        %v291 = vld [vmem:[%s187 + $0x1e8] sm:$0xff]
        %v292 = vld [vmem:[%s187 + $0x1f0] sm:$0xff]
        %v293 = vld [vmem:[%s187 + $0x1f8] sm:$0xff]
        %v294 = vld [vmem:[%s187 + $0x200] sm:$0xff]
        %v295 = vld [vmem:[%s187 + $0x208] sm:$0xff]
        %v296 = vld [vmem:[%s187 + $0x210] sm:$0xff]
        %v297 = vld [vmem:[%s187 + $0x218] sm:$0xff]
        %v298 = vld [vmem:[%s187 + $0x220] sm:$0xff]
        %v299 = vld [vmem:[%s187 + $0x228] sm:$0xff]
        %v300 = vld [vmem:[%s187 + $0x230] sm:$0xff]
        %v301 = vld [vmem:[%s187 + $0x238] sm:$0xff]
        %v302 = vld [vmem:[%s187 + $0x240] sm:$0xff]
        %v303 = vld [vmem:[%s187 + $0x248] sm:$0xff]
        %v304 = vld [vmem:[%s187 + $0x250] sm:$0xff]
        %v305 = vld [vmem:[%s187 + $0x258] sm:$0xff]
        %v306 = vld [vmem:[%s187 + $0x260] sm:$0xff]
        %v307 = vld [vmem:[%s187 + $0x268] sm:$0xff]
        %v308 = vld [vmem:[%s187 + $0x270] sm:$0xff]
        %v309 = vld [vmem:[%s187 + $0x278] sm:$0xff]
        %v310 = vld [vmem:[%s187 + $0x280] sm:$0xff]
        %v311 = vld [vmem:[%s187 + $0x288] sm:$0xff]
        %v312 = vld [vmem:[%s187 + $0x290] sm:$0xff]
        %v313 = vld [vmem:[%s187 + $0x298] sm:$0xff]
        %v314 = vld [vmem:[%s187 + $0x2a0] sm:$0xff]
        %v315 = vld [vmem:[%s187 + $0x2a8] sm:$0xff]
        %v316 = vld [vmem:[%s187 + $0x2b0] sm:$0xff]
        %v317 = vld [vmem:[%s187 + $0x2b8] sm:$0xff]
        %v318 = vld [vmem:[%s187 + $0x2c0] sm:$0xff]
        %v319 = vld [vmem:[%s187 + $0x2c8] sm:$0xff]
        %v320 = vld [vmem:[%s187 + $0x2d0] sm:$0xff]
        %v321 = vld [vmem:[%s187 + $0x2d8] sm:$0xff]
        %v322 = vld [vmem:[%s187 + $0x2e0] sm:$0xff]
        %v323 = vld [vmem:[%s187 + $0x2e8] sm:$0xff]
        %v324 = vld [vmem:[%s187 + $0x2f0] sm:$0xff]
        %v325 = vld [vmem:[%s187 + $0x2f8] sm:$0xff]
        %v326 = vld [vmem:[%s187 + $0x300] sm:$0xff]
        %v327 = vld [vmem:[%s187 + $0x308] sm:$0xff]
        %v328 = vld [vmem:[%s187 + $0x310] sm:$0xff]
        %v329 = vld [vmem:[%s187 + $0x318] sm:$0xff]
        %v330 = vld [vmem:[%s187 + $0x320] sm:$0xff]
        %v331 = vld [vmem:[%s187 + $0x328] sm:$0xff]
        %v332 = vld [vmem:[%s187 + $0x330] sm:$0xff]
        %v333 = vld [vmem:[%s187 + $0x338] sm:$0xff]
        %v334 = vld [vmem:[%s187 + $0x340] sm:$0xff]
        %v335 = vld [vmem:[%s187 + $0x348] sm:$0xff]
        %v336 = vld [vmem:[%s187 + $0x350] sm:$0xff]
        %v337 = vld [vmem:[%s187 + $0x358] sm:$0xff]
        %v338 = vld [vmem:[%s187 + $0x360] sm:$0xff]
        %v339 = vld [vmem:[%s187 + $0x368] sm:$0xff]
        %v340 = vld [vmem:[%s187 + $0x370] sm:$0xff]
        %v341 = vld [vmem:[%s187 + $0x378] sm:$0xff]
        %v342 = vld [vmem:[%s187 + $0x380] sm:$0xff]
        %v343 = vld [vmem:[%s187 + $0x388] sm:$0xff]
        %v344 = vld [vmem:[%s187 + $0x390] sm:$0xff]
        %v345 = vld [vmem:[%s187 + $0x398] sm:$0xff]
        %v346 = vld [vmem:[%s187 + $0x3a0] sm:$0xff]
        %v347 = vld [vmem:[%s187 + $0x3a8] sm:$0xff]
        %v348 = vld [vmem:[%s187 + $0x3b0] sm:$0xff]
        %v349 = vld [vmem:[%s187 + $0x3b8] sm:$0xff]
        %v350 = vld [vmem:[%s187 + $0x3c0] sm:$0xff]
        %v351 = vld [vmem:[%s187 + $0x3c8] sm:$0xff]
        %v352 = vld [vmem:[%s187 + $0x3d0] sm:$0xff]
        %v353 = vld [vmem:[%s187 + $0x3d8] sm:$0xff]
        %v354 = vld [vmem:[%s187 + $0x3e0] sm:$0xff]
        %v355 = vld [vmem:[%s187 + $0x3e8] sm:$0xff]
        %v356 = vld [vmem:[%s187 + $0x3f0] sm:$0xff]
        %v357 = vld [vmem:[%s187 + $0x3f8] sm:$0xff]
        %v358 = vld [vmem:[%s196] sm:$0xff]
        %v359 = vld [vmem:[%s196 + $0x8] sm:$0xff]
        %v362 = vlaneseq
        %v363 = vshrl.u32 %v362, 7
        %v364 = vsub.s32 0, %v363
        %v365 = vrot.slane %v358, %v364
        %v366 = vlaneseq
        %v367 = vshrl.u32 %v366, 7
        %v368 = vsub.s32 1, %v367
        %v369 = vrot.slane %v358, %v368
        %v370 = vlaneseq
        %v371 = vshrl.u32 %v370, 7
        %v372 = vsub.s32 2, %v371
        %v373 = vrot.slane %v358, %v372
        %v374 = vlaneseq
        %v375 = vshrl.u32 %v374, 7
        %v376 = vsub.s32 3, %v375
        %v377 = vrot.slane %v358, %v376
        %v378 = vlaneseq
        %v379 = vshrl.u32 %v378, 7
        %v380 = vsub.s32 4, %v379
        %v381 = vrot.slane %v358, %v380
        %v382 = vlaneseq
        %v383 = vshrl.u32 %v382, 7
        %v384 = vsub.s32 5, %v383
        %v385 = vrot.slane %v358, %v384
        %v386 = vlaneseq
        %v387 = vshrl.u32 %v386, 7
        %v388 = vsub.s32 6, %v387
        %v389 = vrot.slane %v358, %v388
        %v390 = vlaneseq
        %v391 = vshrl.u32 %v390, 7
        %v392 = vsub.s32 7, %v391
        %v393 = vrot.slane %v358, %v392
        %v394 = vlaneseq
        %v395 = vshrl.u32 %v394, 7
        %v396 = vsub.s32 0, %v395
        %v397 = vrot.slane %v359, %v396
        %v398 = vlaneseq
        %v399 = vshrl.u32 %v398, 7
        %v400 = vsub.s32 1, %v399
        %v401 = vrot.slane %v359, %v400
        %v402 = vlaneseq
        %v403 = vshrl.u32 %v402, 7
        %v404 = vsub.s32 2, %v403
        %v405 = vrot.slane %v359, %v404
        %v406 = vlaneseq
        %v407 = vshrl.u32 %v406, 7
        %v408 = vsub.s32 3, %v407
        %v409 = vrot.slane %v359, %v408
        %v410 = vlaneseq
        %v411 = vshrl.u32 %v410, 7
        %v412 = vsub.s32 4, %v411
        %v413 = vrot.slane %v359, %v412
        %v414 = vlaneseq
        %v415 = vshrl.u32 %v414, 7
        %v416 = vsub.s32 5, %v415
        %v417 = vrot.slane %v359, %v416
        %v418 = vlaneseq
        %v419 = vshrl.u32 %v418, 7
        %v420 = vsub.s32 6, %v419
        %v421 = vrot.slane %v359, %v420
        %v422 = vlaneseq
        %v423 = vshrl.u32 %v422, 7
        %v424 = vsub.s32 7, %v423
        %v425 = vrot.slane %v359, %v424
        %v570 = vunpack.c.l.b16 %v230
        %v571 = vunpack.c.h.b16 %v230
        %v572 = vunpack.c.l.b16 %v231
        %v573 = vunpack.c.h.b16 %v231
        %v574 = vunpack.c.l.b16 %v232
        %v575 = vunpack.c.h.b16 %v232
        %v576 = vunpack.c.l.b16 %v233
        %v577 = vunpack.c.h.b16 %v233
        %v578 = vunpack.c.l.b16 %v234
        %v579 = vunpack.c.h.b16 %v234
        %v580 = vunpack.c.l.b16 %v235
        %v581 = vunpack.c.h.b16 %v235
        %v582 = vunpack.c.l.b16 %v236
        %v583 = vunpack.c.h.b16 %v236
        %v584 = vunpack.c.l.b16 %v237
        %v585 = vunpack.c.h.b16 %v237
        %v586 = vunpack.c.l.b16 %v238
        %v587 = vunpack.c.h.b16 %v238
        %v588 = vunpack.c.l.b16 %v239
        %v589 = vunpack.c.h.b16 %v239
        %v590 = vunpack.c.l.b16 %v240
        %v591 = vunpack.c.h.b16 %v240
        %v592 = vunpack.c.l.b16 %v241
        %v593 = vunpack.c.h.b16 %v241
        %v594 = vunpack.c.l.b16 %v242
        %v595 = vunpack.c.h.b16 %v242
        %v596 = vunpack.c.l.b16 %v243
        %v597 = vunpack.c.h.b16 %v243
        %v598 = vunpack.c.l.b16 %v244
        %v599 = vunpack.c.h.b16 %v244
        %v600 = vunpack.c.l.b16 %v245
        %v601 = vunpack.c.h.b16 %v245
        %v602 = vunpack.c.l.b16 %v246
        %v603 = vunpack.c.h.b16 %v246
        %v604 = vunpack.c.l.b16 %v247
        %v605 = vunpack.c.h.b16 %v247
        %v606 = vunpack.c.l.b16 %v248
        %v607 = vunpack.c.h.b16 %v248
        %v608 = vunpack.c.l.b16 %v249
        %v609 = vunpack.c.h.b16 %v249
        %v610 = vunpack.c.l.b16 %v250
        %v611 = vunpack.c.h.b16 %v250
        %v612 = vunpack.c.l.b16 %v251
        %v613 = vunpack.c.h.b16 %v251
        %v614 = vunpack.c.l.b16 %v252
        %v615 = vunpack.c.h.b16 %v252
        %v616 = vunpack.c.l.b16 %v253
        %v617 = vunpack.c.h.b16 %v253
        %v618 = vunpack.c.l.b16 %v254
        %v619 = vunpack.c.h.b16 %v254
        %v620 = vunpack.c.l.b16 %v255
        %v621 = vunpack.c.h.b16 %v255
        %v622 = vunpack.c.l.b16 %v256
        %v623 = vunpack.c.h.b16 %v256
        %v624 = vunpack.c.l.b16 %v257
        %v625 = vunpack.c.h.b16 %v257
        %v626 = vunpack.c.l.b16 %v258
        %v627 = vunpack.c.h.b16 %v258
        %v628 = vunpack.c.l.b16 %v259
        %v629 = vunpack.c.h.b16 %v259
        %v630 = vunpack.c.l.b16 %v260
        %v631 = vunpack.c.h.b16 %v260
        %v632 = vunpack.c.l.b16 %v261
        %v633 = vunpack.c.h.b16 %v261
        %v634 = vunpack.c.l.b16 %v262
        %v635 = vunpack.c.h.b16 %v262
        %v636 = vunpack.c.l.b16 %v263
        %v637 = vunpack.c.h.b16 %v263
        %v638 = vunpack.c.l.b16 %v264
        %v639 = vunpack.c.h.b16 %v264
        %v640 = vunpack.c.l.b16 %v265
        %v641 = vunpack.c.h.b16 %v265
        %v642 = vunpack.c.l.b16 %v266
        %v643 = vunpack.c.h.b16 %v266
        %v644 = vunpack.c.l.b16 %v267
        %v645 = vunpack.c.h.b16 %v267
        %v646 = vunpack.c.l.b16 %v268
        %v647 = vunpack.c.h.b16 %v268
        %v648 = vunpack.c.l.b16 %v269
        %v649 = vunpack.c.h.b16 %v269
        %v650 = vunpack.c.l.b16 %v270
        %v651 = vunpack.c.h.b16 %v270
        %v652 = vunpack.c.l.b16 %v271
        %v653 = vunpack.c.h.b16 %v271
        %v654 = vunpack.c.l.b16 %v272
        %v655 = vunpack.c.h.b16 %v272
        %v656 = vunpack.c.l.b16 %v273
        %v657 = vunpack.c.h.b16 %v273
        %v658 = vunpack.c.l.b16 %v274
        %v659 = vunpack.c.h.b16 %v274
        %v660 = vunpack.c.l.b16 %v275
        %v661 = vunpack.c.h.b16 %v275
        %v662 = vunpack.c.l.b16 %v276
        %v663 = vunpack.c.h.b16 %v276
        %v664 = vunpack.c.l.b16 %v277
        %v665 = vunpack.c.h.b16 %v277
        %v666 = vunpack.c.l.b16 %v278
        %v667 = vunpack.c.h.b16 %v278
        %v668 = vunpack.c.l.b16 %v279
        %v669 = vunpack.c.h.b16 %v279
        %v670 = vunpack.c.l.b16 %v280
        %v671 = vunpack.c.h.b16 %v280
        %v672 = vunpack.c.l.b16 %v281
        %v673 = vunpack.c.h.b16 %v281
        %v674 = vunpack.c.l.b16 %v282
        %v675 = vunpack.c.h.b16 %v282
        %v676 = vunpack.c.l.b16 %v283
        %v677 = vunpack.c.h.b16 %v283
        %v678 = vunpack.c.l.b16 %v284
        %v679 = vunpack.c.h.b16 %v284
        %v680 = vunpack.c.l.b16 %v285
        %v681 = vunpack.c.h.b16 %v285
        %v682 = vunpack.c.l.b16 %v286
        %v683 = vunpack.c.h.b16 %v286
        %v684 = vunpack.c.l.b16 %v287
        %v685 = vunpack.c.h.b16 %v287
        %v686 = vunpack.c.l.b16 %v288
        %v687 = vunpack.c.h.b16 %v288
        %v688 = vunpack.c.l.b16 %v289
        %v689 = vunpack.c.h.b16 %v289
        %v690 = vunpack.c.l.b16 %v290
        %v691 = vunpack.c.h.b16 %v290
        %v692 = vunpack.c.l.b16 %v291
        %v693 = vunpack.c.h.b16 %v291
        %v694 = vunpack.c.l.b16 %v292
        %v695 = vunpack.c.h.b16 %v292
        %v696 = vunpack.c.l.b16 %v293
        %v697 = vunpack.c.h.b16 %v293
        %v698 = vunpack.c.l.b16 %v294
        %v699 = vunpack.c.h.b16 %v294
        %v700 = vunpack.c.l.b16 %v295
        %v701 = vunpack.c.h.b16 %v295
        %v702 = vunpack.c.l.b16 %v296
        %v703 = vunpack.c.h.b16 %v296
        %v704 = vunpack.c.l.b16 %v297
        %v705 = vunpack.c.h.b16 %v297
        %v706 = vunpack.c.l.b16 %v298
        %v707 = vunpack.c.h.b16 %v298
        %v708 = vunpack.c.l.b16 %v299
        %v709 = vunpack.c.h.b16 %v299
        %v710 = vunpack.c.l.b16 %v300
        %v711 = vunpack.c.h.b16 %v300
        %v712 = vunpack.c.l.b16 %v301
        %v713 = vunpack.c.h.b16 %v301
        %v714 = vunpack.c.l.b16 %v302
        %v715 = vunpack.c.h.b16 %v302
        %v716 = vunpack.c.l.b16 %v303
        %v717 = vunpack.c.h.b16 %v303
        %v718 = vunpack.c.l.b16 %v304
        %v719 = vunpack.c.h.b16 %v304
        %v720 = vunpack.c.l.b16 %v305
        %v721 = vunpack.c.h.b16 %v305
        %v722 = vunpack.c.l.b16 %v306
        %v723 = vunpack.c.h.b16 %v306
        %v724 = vunpack.c.l.b16 %v307
        %v725 = vunpack.c.h.b16 %v307
        %v726 = vunpack.c.l.b16 %v308
        %v727 = vunpack.c.h.b16 %v308
        %v728 = vunpack.c.l.b16 %v309
        %v729 = vunpack.c.h.b16 %v309
        %v730 = vunpack.c.l.b16 %v310
        %v731 = vunpack.c.h.b16 %v310
        %v732 = vunpack.c.l.b16 %v311
        %v733 = vunpack.c.h.b16 %v311
        %v734 = vunpack.c.l.b16 %v312
        %v735 = vunpack.c.h.b16 %v312
        %v736 = vunpack.c.l.b16 %v313
        %v737 = vunpack.c.h.b16 %v313
        %v738 = vunpack.c.l.b16 %v314
        %v739 = vunpack.c.h.b16 %v314
        %v740 = vunpack.c.l.b16 %v315
        %v741 = vunpack.c.h.b16 %v315
        %v742 = vunpack.c.l.b16 %v316
        %v743 = vunpack.c.h.b16 %v316
        %v744 = vunpack.c.l.b16 %v317
        %v745 = vunpack.c.h.b16 %v317
        %v746 = vunpack.c.l.b16 %v318
        %v747 = vunpack.c.h.b16 %v318
        %v748 = vunpack.c.l.b16 %v319
        %v749 = vunpack.c.h.b16 %v319
        %v750 = vunpack.c.l.b16 %v320
        %v751 = vunpack.c.h.b16 %v320
        %v752 = vunpack.c.l.b16 %v321
        %v753 = vunpack.c.h.b16 %v321
        %v754 = vunpack.c.l.b16 %v322
        %v755 = vunpack.c.h.b16 %v322
        %v756 = vunpack.c.l.b16 %v323
        %v757 = vunpack.c.h.b16 %v323
        %v758 = vunpack.c.l.b16 %v324
        %v759 = vunpack.c.h.b16 %v324
        %v760 = vunpack.c.l.b16 %v325
        %v761 = vunpack.c.h.b16 %v325
        %v762 = vunpack.c.l.b16 %v326
        %v763 = vunpack.c.h.b16 %v326
        %v764 = vunpack.c.l.b16 %v327
        %v765 = vunpack.c.h.b16 %v327
        %v766 = vunpack.c.l.b16 %v328
        %v767 = vunpack.c.h.b16 %v328
        %v768 = vunpack.c.l.b16 %v329
        %v769 = vunpack.c.h.b16 %v329
        %v770 = vunpack.c.l.b16 %v330
        %v771 = vunpack.c.h.b16 %v330
        %v772 = vunpack.c.l.b16 %v331
        %v773 = vunpack.c.h.b16 %v331
        %v774 = vunpack.c.l.b16 %v332
        %v775 = vunpack.c.h.b16 %v332
        %v776 = vunpack.c.l.b16 %v333
        %v777 = vunpack.c.h.b16 %v333
        %v778 = vunpack.c.l.b16 %v334
        %v779 = vunpack.c.h.b16 %v334
        %v780 = vunpack.c.l.b16 %v335
        %v781 = vunpack.c.h.b16 %v335
        %v782 = vunpack.c.l.b16 %v336
        %v783 = vunpack.c.h.b16 %v336
        %v784 = vunpack.c.l.b16 %v337
        %v785 = vunpack.c.h.b16 %v337
        %v786 = vunpack.c.l.b16 %v338
        %v787 = vunpack.c.h.b16 %v338
        %v788 = vunpack.c.l.b16 %v339
        %v789 = vunpack.c.h.b16 %v339
        %v790 = vunpack.c.l.b16 %v340
        %v791 = vunpack.c.h.b16 %v340
        %v792 = vunpack.c.l.b16 %v341
        %v793 = vunpack.c.h.b16 %v341
        %v794 = vunpack.c.l.b16 %v342
        %v795 = vunpack.c.h.b16 %v342
        %v796 = vunpack.c.l.b16 %v343
        %v797 = vunpack.c.h.b16 %v343
        %v798 = vunpack.c.l.b16 %v344
        %v799 = vunpack.c.h.b16 %v344
        %v800 = vunpack.c.l.b16 %v345
        %v801 = vunpack.c.h.b16 %v345
        %v802 = vunpack.c.l.b16 %v346
        %v803 = vunpack.c.h.b16 %v346
        %v804 = vunpack.c.l.b16 %v347
        %v805 = vunpack.c.h.b16 %v347
        %v806 = vunpack.c.l.b16 %v348
        %v807 = vunpack.c.h.b16 %v348
        %v808 = vunpack.c.l.b16 %v349
        %v809 = vunpack.c.h.b16 %v349
        %v810 = vunpack.c.l.b16 %v350
        %v811 = vunpack.c.h.b16 %v350
        %v812 = vunpack.c.l.b16 %v351
        %v813 = vunpack.c.h.b16 %v351
        %v814 = vunpack.c.l.b16 %v352
        %v815 = vunpack.c.h.b16 %v352
        %v816 = vunpack.c.l.b16 %v353
        %v817 = vunpack.c.h.b16 %v353
        %v818 = vunpack.c.l.b16 %v354
        %v819 = vunpack.c.h.b16 %v354
        %v820 = vunpack.c.l.b16 %v355
        %v821 = vunpack.c.h.b16 %v355
        %v822 = vunpack.c.l.b16 %v356
        %v823 = vunpack.c.h.b16 %v356
        %v824 = vunpack.c.l.b16 %v357
        %v825 = vunpack.c.h.b16 %v357
        %v826 = vpack.c.b16 %v586, %v570
        %v827 = vpack.c.b16 %v587, %v571
        %v828 = vpack.c.b16 %v588, %v572
        %v829 = vpack.c.b16 %v589, %v573
        %v830 = vpack.c.b16 %v590, %v574
        %v831 = vpack.c.b16 %v591, %v575
        %v832 = vpack.c.b16 %v592, %v576
        %v833 = vpack.c.b16 %v593, %v577
        %v834 = vpack.c.b16 %v594, %v578
        %v835 = vpack.c.b16 %v595, %v579
        %v836 = vpack.c.b16 %v596, %v580
        %v837 = vpack.c.b16 %v597, %v581
        %v838 = vpack.c.b16 %v598, %v582
        %v839 = vpack.c.b16 %v599, %v583
        %v840 = vpack.c.b16 %v600, %v584
        %v841 = vpack.c.b16 %v601, %v585
        %v842 = vpack.c.b16 %v618, %v602
        %v843 = vpack.c.b16 %v619, %v603
        %v844 = vpack.c.b16 %v620, %v604
        %v845 = vpack.c.b16 %v621, %v605
        %v846 = vpack.c.b16 %v622, %v606
        %v847 = vpack.c.b16 %v623, %v607
        %v848 = vpack.c.b16 %v624, %v608
        %v849 = vpack.c.b16 %v625, %v609
        %v850 = vpack.c.b16 %v626, %v610
        %v851 = vpack.c.b16 %v627, %v611
        %v852 = vpack.c.b16 %v628, %v612
        %v853 = vpack.c.b16 %v629, %v613
        %v854 = vpack.c.b16 %v630, %v614
        %v855 = vpack.c.b16 %v631, %v615
        %v856 = vpack.c.b16 %v632, %v616
        %v857 = vpack.c.b16 %v633, %v617
        %v858 = vpack.c.b16 %v650, %v634
        %v859 = vpack.c.b16 %v651, %v635
        %v860 = vpack.c.b16 %v652, %v636
        %v861 = vpack.c.b16 %v653, %v637
        %v862 = vpack.c.b16 %v654, %v638
        %v863 = vpack.c.b16 %v655, %v639
        %v864 = vpack.c.b16 %v656, %v640
        %v865 = vpack.c.b16 %v657, %v641
        %v866 = vpack.c.b16 %v658, %v642
        %v867 = vpack.c.b16 %v659, %v643
        %v868 = vpack.c.b16 %v660, %v644
        %v869 = vpack.c.b16 %v661, %v645
        %v870 = vpack.c.b16 %v662, %v646
        %v871 = vpack.c.b16 %v663, %v647
        %v872 = vpack.c.b16 %v664, %v648
        %v873 = vpack.c.b16 %v665, %v649
        %v874 = vpack.c.b16 %v682, %v666
        %v875 = vpack.c.b16 %v683, %v667
        %v876 = vpack.c.b16 %v684, %v668
        %v877 = vpack.c.b16 %v685, %v669
        %v878 = vpack.c.b16 %v686, %v670
        %v879 = vpack.c.b16 %v687, %v671
        %v880 = vpack.c.b16 %v688, %v672
        %v881 = vpack.c.b16 %v689, %v673
        %v882 = vpack.c.b16 %v690, %v674
        %v883 = vpack.c.b16 %v691, %v675
        %v884 = vpack.c.b16 %v692, %v676
        %v885 = vpack.c.b16 %v693, %v677
        %v886 = vpack.c.b16 %v694, %v678
        %v887 = vpack.c.b16 %v695, %v679
        %v888 = vpack.c.b16 %v696, %v680
        %v889 = vpack.c.b16 %v697, %v681
        %v890 = vpack.c.b16 %v714, %v698
        %v891 = vpack.c.b16 %v715, %v699
        %v892 = vpack.c.b16 %v716, %v700
        %v893 = vpack.c.b16 %v717, %v701
        %v894 = vpack.c.b16 %v718, %v702
        %v895 = vpack.c.b16 %v719, %v703
        %v896 = vpack.c.b16 %v720, %v704
        %v897 = vpack.c.b16 %v721, %v705
        %v898 = vpack.c.b16 %v722, %v706
        %v899 = vpack.c.b16 %v723, %v707
        %v900 = vpack.c.b16 %v724, %v708
        %v901 = vpack.c.b16 %v725, %v709
        %v902 = vpack.c.b16 %v726, %v710
        %v903 = vpack.c.b16 %v727, %v711
        %v904 = vpack.c.b16 %v728, %v712
        %v905 = vpack.c.b16 %v729, %v713
        %v906 = vpack.c.b16 %v746, %v730
        %v907 = vpack.c.b16 %v747, %v731
        %v908 = vpack.c.b16 %v748, %v732
        %v909 = vpack.c.b16 %v749, %v733
        %v910 = vpack.c.b16 %v750, %v734
        %v911 = vpack.c.b16 %v751, %v735
        %v912 = vpack.c.b16 %v752, %v736
        %v913 = vpack.c.b16 %v753, %v737
        %v914 = vpack.c.b16 %v754, %v738
        %v915 = vpack.c.b16 %v755, %v739
        %v916 = vpack.c.b16 %v756, %v740
        %v917 = vpack.c.b16 %v757, %v741
        %v918 = vpack.c.b16 %v758, %v742
        %v919 = vpack.c.b16 %v759, %v743
        %v920 = vpack.c.b16 %v760, %v744
        %v921 = vpack.c.b16 %v761, %v745
        %v922 = vpack.c.b16 %v778, %v762
        %v923 = vpack.c.b16 %v779, %v763
        %v924 = vpack.c.b16 %v780, %v764
        %v925 = vpack.c.b16 %v781, %v765
        %v926 = vpack.c.b16 %v782, %v766
        %v927 = vpack.c.b16 %v783, %v767
        %v928 = vpack.c.b16 %v784, %v768
        %v929 = vpack.c.b16 %v785, %v769
        %v930 = vpack.c.b16 %v786, %v770
        %v931 = vpack.c.b16 %v787, %v771
        %v932 = vpack.c.b16 %v788, %v772
        %v933 = vpack.c.b16 %v789, %v773
        %v934 = vpack.c.b16 %v790, %v774
        %v935 = vpack.c.b16 %v791, %v775
        %v936 = vpack.c.b16 %v792, %v776
        %v937 = vpack.c.b16 %v793, %v777
        %v938 = vpack.c.b16 %v810, %v794
        %v939 = vpack.c.b16 %v811, %v795
        %v940 = vpack.c.b16 %v812, %v796
        %v941 = vpack.c.b16 %v813, %v797
        %v942 = vpack.c.b16 %v814, %v798
        %v943 = vpack.c.b16 %v815, %v799
        %v944 = vpack.c.b16 %v816, %v800
        %v945 = vpack.c.b16 %v817, %v801
        %v946 = vpack.c.b16 %v818, %v802
        %v947 = vpack.c.b16 %v819, %v803
        %v948 = vpack.c.b16 %v820, %v804
        %v949 = vpack.c.b16 %v821, %v805
        %v950 = vpack.c.b16 %v822, %v806
        %v951 = vpack.c.b16 %v823, %v807
        %v952 = vpack.c.b16 %v824, %v808
        %v953 = vpack.c.b16 %v825, %v809
        %1082 = vmatprep.subr.bf16.mxu0 %v827
        %1083 = vmatpush1.bf16.msra.mxu0 %v826
        %1084 = vmatprep.subr.bf16.mxu0 %v843
        %1085 = vmatpush1.bf16.msra.mxu0 %v842
        %1086 = vmatprep.subr.bf16.mxu0 %v859
        %1087 = vmatpush1.bf16.msra.mxu0 %v858
        %1088 = vmatprep.subr.bf16.mxu0 %v875
        %1089 = vmatpush1.bf16.msra.mxu0 %v874
        %1090 = vmatprep.subr.bf16.mxu0 %v891
        %1091 = vmatpush1.bf16.msra.mxu0 %v890
        %1092 = vmatprep.subr.bf16.mxu0 %v907
        %1093 = vmatpush1.bf16.msra.mxu0 %v906
        %1094 = vmatprep.subr.bf16.mxu0 %v923
        %1095 = vmatpush1.bf16.msra.mxu0 %v922
        %1096 = vmatprep.subr.bf16.mxu0 %v939
        %1097 = vmatpush1.bf16.msra.mxu0 %v938
        %1098 = vmatprep.subr.bf16.mxu0 0
        %1099 = vmatpush1.bf16.msra.mxu0 0
        %1100 = vmatprep.subr.bf16.mxu0 0
        %1101 = vmatpush1.bf16.msra.mxu0 0
        %1102 = vmatprep.subr.bf16.mxu0 0
        %1103 = vmatpush1.bf16.msra.mxu0 0
        %1104 = vmatprep.subr.bf16.mxu0 0
        %1105 = vmatpush1.bf16.msra.mxu0 0
        %1106 = vmatprep.subr.bf16.mxu0 0
        %1107 = vmatpush1.bf16.msra.mxu0 0
        %1108 = vmatprep.subr.bf16.mxu0 0
        %1109 = vmatpush1.bf16.msra.mxu0 0
        %1110 = vmatprep.subr.bf16.mxu0 0
        %1111 = vmatpush1.bf16.msra.mxu0 0
        %1112 = vmatprep.subr.bf16.mxu0 0
        %1113 = vmatpush1.bf16.msra.mxu0 0
        %1114 = vmatprep.mubr.bf16.mxu0 0
        %1115 = vmatmul.mubr.bf16.gmra.mrb[0].mxu0 %v229
        %v1116 = vpop.f32.mrb[0].mxu0
        %v1117 = vadd.f32 %v365, %v1116
        %v1118 = vpop.f32.mrb[0].mxu0
        %v1119 = vadd.f32 %v369, %v1118
        %v1120 = vpop.f32.mrb[0].mxu0
        %v1121 = vadd.f32 %v365, %v1120
        %v1122 = vpop.f32.mrb[0].mxu0
        %v1123 = vadd.f32 %v369, %v1122
        %1124 = vdwg.mxu0
        %1125 = vmatprep.subr.bf16.mxu0 %v829
        %1126 = vmatpush1.bf16.msra.mxu0 %v828
        %1127 = vmatprep.subr.bf16.mxu0 %v845
        %1128 = vmatpush1.bf16.msra.mxu0 %v844
        %1129 = vmatprep.subr.bf16.mxu0 %v861
        %1130 = vmatpush1.bf16.msra.mxu0 %v860
        %1131 = vmatprep.subr.bf16.mxu0 %v877
        %1132 = vmatpush1.bf16.msra.mxu0 %v876
        %1133 = vmatprep.subr.bf16.mxu0 %v893
        %1134 = vmatpush1.bf16.msra.mxu0 %v892
        %1135 = vmatprep.subr.bf16.mxu0 %v909
        %1136 = vmatpush1.bf16.msra.mxu0 %v908
        %1137 = vmatprep.subr.bf16.mxu0 %v925
        %1138 = vmatpush1.bf16.msra.mxu0 %v924
        %1139 = vmatprep.subr.bf16.mxu0 %v941
        %1140 = vmatpush1.bf16.msra.mxu0 %v940
        %1141 = vmatprep.subr.bf16.mxu0 0
        %1142 = vmatpush1.bf16.msra.mxu0 0
        %1143 = vmatprep.subr.bf16.mxu0 0
        %1144 = vmatpush1.bf16.msra.mxu0 0
        %1145 = vmatprep.subr.bf16.mxu0 0
        %1146 = vmatpush1.bf16.msra.mxu0 0
        %1147 = vmatprep.subr.bf16.mxu0 0
        %1148 = vmatpush1.bf16.msra.mxu0 0
        %1149 = vmatprep.subr.bf16.mxu0 0
        %1150 = vmatpush1.bf16.msra.mxu0 0
        %1151 = vmatprep.subr.bf16.mxu0 0
        %1152 = vmatpush1.bf16.msra.mxu0 0
        %1153 = vmatprep.subr.bf16.mxu0 0
        %1154 = vmatpush1.bf16.msra.mxu0 0
        %1155 = vmatprep.subr.bf16.mxu0 0
        %1156 = vmatpush1.bf16.msra.mxu0 0
        %1157 = vmatprep.mubr.bf16.mxu0 0
        %1158 = vmatmul.mubr.bf16.gmra.mrb[0].mxu0 %v229
        %v1159 = vpop.f32.mrb[0].mxu0
        %v1160 = vadd.f32 %v373, %v1159
        %v1161 = vpop.f32.mrb[0].mxu0
        %v1162 = vadd.f32 %v377, %v1161
        %v1163 = vpop.f32.mrb[0].mxu0
        %v1164 = vadd.f32 %v373, %v1163
        %v1165 = vpop.f32.mrb[0].mxu0
        %v1166 = vadd.f32 %v377, %v1165
        %1167 = vdwg.mxu0
        %1168 = vmatprep.subr.bf16.mxu0 %v831
        %1169 = vmatpush1.bf16.msra.mxu0 %v830
        %1170 = vmatprep.subr.bf16.mxu0 %v847
        %1171 = vmatpush1.bf16.msra.mxu0 %v846
        %1172 = vmatprep.subr.bf16.mxu0 %v863
        %1173 = vmatpush1.bf16.msra.mxu0 %v862
        %1174 = vmatprep.subr.bf16.mxu0 %v879
        %1175 = vmatpush1.bf16.msra.mxu0 %v878
        %1176 = vmatprep.subr.bf16.mxu0 %v895
        %1177 = vmatpush1.bf16.msra.mxu0 %v894
        %1178 = vmatprep.subr.bf16.mxu0 %v911
        %1179 = vmatpush1.bf16.msra.mxu0 %v910
        %1180 = vmatprep.subr.bf16.mxu0 %v927
        %1181 = vmatpush1.bf16.msra.mxu0 %v926
        %1182 = vmatprep.subr.bf16.mxu0 %v943
        %1183 = vmatpush1.bf16.msra.mxu0 %v942
        %1184 = vmatprep.subr.bf16.mxu0 0
        %1185 = vmatpush1.bf16.msra.mxu0 0
        %1186 = vmatprep.subr.bf16.mxu0 0
        %1187 = vmatpush1.bf16.msra.mxu0 0
        %1188 = vmatprep.subr.bf16.mxu0 0
        %1189 = vmatpush1.bf16.msra.mxu0 0
        %1190 = vmatprep.subr.bf16.mxu0 0
        %1191 = vmatpush1.bf16.msra.mxu0 0
        %1192 = vmatprep.subr.bf16.mxu0 0
        %1193 = vmatpush1.bf16.msra.mxu0 0
        %1194 = vmatprep.subr.bf16.mxu0 0
        %1195 = vmatpush1.bf16.msra.mxu0 0
        %1196 = vmatprep.subr.bf16.mxu0 0
        %1197 = vmatpush1.bf16.msra.mxu0 0
        %1198 = vmatprep.subr.bf16.mxu0 0
        %1199 = vmatpush1.bf16.msra.mxu0 0
        %1200 = vmatprep.mubr.bf16.mxu0 0
        %1201 = vmatmul.mubr.bf16.gmra.mrb[0].mxu0 %v229
        %v1202 = vpop.f32.mrb[0].mxu0
        %v1203 = vadd.f32 %v381, %v1202
        %v1204 = vpop.f32.mrb[0].mxu0
        %v1205 = vadd.f32 %v385, %v1204
        %v1206 = vpop.f32.mrb[0].mxu0
        %v1207 = vadd.f32 %v381, %v1206
        %v1208 = vpop.f32.mrb[0].mxu0
        %v1209 = vadd.f32 %v385, %v1208
        %1210 = vdwg.mxu0
        %1211 = vmatprep.subr.bf16.mxu0 %v833
        %1212 = vmatpush1.bf16.msra.mxu0 %v832
        %1213 = vmatprep.subr.bf16.mxu0 %v849
        %1214 = vmatpush1.bf16.msra.mxu0 %v848
        %1215 = vmatprep.subr.bf16.mxu0 %v865
        %1216 = vmatpush1.bf16.msra.mxu0 %v864
        %1217 = vmatprep.subr.bf16.mxu0 %v881
        %1218 = vmatpush1.bf16.msra.mxu0 %v880
        %1219 = vmatprep.subr.bf16.mxu0 %v897
        %1220 = vmatpush1.bf16.msra.mxu0 %v896
        %1221 = vmatprep.subr.bf16.mxu0 %v913
        %1222 = vmatpush1.bf16.msra.mxu0 %v912
        %1223 = vmatprep.subr.bf16.mxu0 %v929
        %1224 = vmatpush1.bf16.msra.mxu0 %v928
        %1225 = vmatprep.subr.bf16.mxu0 %v945
        %1226 = vmatpush1.bf16.msra.mxu0 %v944
        %1227 = vmatprep.subr.bf16.mxu0 0
        %1228 = vmatpush1.bf16.msra.mxu0 0
        %1229 = vmatprep.subr.bf16.mxu0 0
        %1230 = vmatpush1.bf16.msra.mxu0 0
        %1231 = vmatprep.subr.bf16.mxu0 0
        %1232 = vmatpush1.bf16.msra.mxu0 0
        %1233 = vmatprep.subr.bf16.mxu0 0
        %1234 = vmatpush1.bf16.msra.mxu0 0
        %1235 = vmatprep.subr.bf16.mxu0 0
        %1236 = vmatpush1.bf16.msra.mxu0 0
        %1237 = vmatprep.subr.bf16.mxu0 0
        %1238 = vmatpush1.bf16.msra.mxu0 0
        %1239 = vmatprep.subr.bf16.mxu0 0
        %1240 = vmatpush1.bf16.msra.mxu0 0
        %1241 = vmatprep.subr.bf16.mxu0 0
        %1242 = vmatpush1.bf16.msra.mxu0 0
        %1243 = vmatprep.mubr.bf16.mxu0 0
        %1244 = vmatmul.mubr.bf16.gmra.mrb[0].mxu0 %v229
        %v1245 = vpop.f32.mrb[0].mxu0
        %v1246 = vadd.f32 %v389, %v1245
        %v1247 = vpop.f32.mrb[0].mxu0
        %v1248 = vadd.f32 %v393, %v1247
        %v1249 = vpop.f32.mrb[0].mxu0
        %v1250 = vadd.f32 %v389, %v1249
        %v1251 = vpop.f32.mrb[0].mxu0
        %v1252 = vadd.f32 %v393, %v1251
        %1253 = vdwg.mxu0
        %1254 = vmatprep.subr.bf16.mxu0 %v835
        %1255 = vmatpush1.bf16.msra.mxu0 %v834
        %1256 = vmatprep.subr.bf16.mxu0 %v851
        %1257 = vmatpush1.bf16.msra.mxu0 %v850
        %1258 = vmatprep.subr.bf16.mxu0 %v867
        %1259 = vmatpush1.bf16.msra.mxu0 %v866
        %1260 = vmatprep.subr.bf16.mxu0 %v883
        %1261 = vmatpush1.bf16.msra.mxu0 %v882
        %1262 = vmatprep.subr.bf16.mxu0 %v899
        %1263 = vmatpush1.bf16.msra.mxu0 %v898
        %1264 = vmatprep.subr.bf16.mxu0 %v915
        %1265 = vmatpush1.bf16.msra.mxu0 %v914
        %1266 = vmatprep.subr.bf16.mxu0 %v931
        %1267 = vmatpush1.bf16.msra.mxu0 %v930
        %1268 = vmatprep.subr.bf16.mxu0 %v947
        %1269 = vmatpush1.bf16.msra.mxu0 %v946
        %1270 = vmatprep.subr.bf16.mxu0 0
        %1271 = vmatpush1.bf16.msra.mxu0 0
        %1272 = vmatprep.subr.bf16.mxu0 0
        %1273 = vmatpush1.bf16.msra.mxu0 0
        %1274 = vmatprep.subr.bf16.mxu0 0
        %1275 = vmatpush1.bf16.msra.mxu0 0
        %1276 = vmatprep.subr.bf16.mxu0 0
        %1277 = vmatpush1.bf16.msra.mxu0 0
        %1278 = vmatprep.subr.bf16.mxu0 0
        %1279 = vmatpush1.bf16.msra.mxu0 0
        %1280 = vmatprep.subr.bf16.mxu0 0
        %1281 = vmatpush1.bf16.msra.mxu0 0
        %1282 = vmatprep.subr.bf16.mxu0 0
        %1283 = vmatpush1.bf16.msra.mxu0 0
        %1284 = vmatprep.subr.bf16.mxu0 0
        %1285 = vmatpush1.bf16.msra.mxu0 0
        %1286 = vmatprep.mubr.bf16.mxu0 0
        %1287 = vmatmul.mubr.bf16.gmra.mrb[0].mxu0 %v229
        %v1288 = vpop.f32.mrb[0].mxu0
        %v1289 = vadd.f32 %v397, %v1288
        %v1290 = vpop.f32.mrb[0].mxu0
        %v1291 = vadd.f32 %v401, %v1290
        %v1292 = vpop.f32.mrb[0].mxu0
        %v1293 = vadd.f32 %v397, %v1292
        %v1294 = vpop.f32.mrb[0].mxu0
        %v1295 = vadd.f32 %v401, %v1294
        %1296 = vdwg.mxu0
        %1297 = vmatprep.subr.bf16.mxu0 %v837
        %1298 = vmatpush1.bf16.msra.mxu0 %v836
        %1299 = vmatprep.subr.bf16.mxu0 %v853
        %1300 = vmatpush1.bf16.msra.mxu0 %v852
        %1301 = vmatprep.subr.bf16.mxu0 %v869
        %1302 = vmatpush1.bf16.msra.mxu0 %v868
        %1303 = vmatprep.subr.bf16.mxu0 %v885
        %1304 = vmatpush1.bf16.msra.mxu0 %v884
        %1305 = vmatprep.subr.bf16.mxu0 %v901
        %1306 = vmatpush1.bf16.msra.mxu0 %v900
        %1307 = vmatprep.subr.bf16.mxu0 %v917
        %1308 = vmatpush1.bf16.msra.mxu0 %v916
        %1309 = vmatprep.subr.bf16.mxu0 %v933
        %1310 = vmatpush1.bf16.msra.mxu0 %v932
        %1311 = vmatprep.subr.bf16.mxu0 %v949
        %1312 = vmatpush1.bf16.msra.mxu0 %v948
        %1313 = vmatprep.subr.bf16.mxu0 0
        %1314 = vmatpush1.bf16.msra.mxu0 0
        %1315 = vmatprep.subr.bf16.mxu0 0
        %1316 = vmatpush1.bf16.msra.mxu0 0
        %1317 = vmatprep.subr.bf16.mxu0 0
        %1318 = vmatpush1.bf16.msra.mxu0 0
        %1319 = vmatprep.subr.bf16.mxu0 0
        %1320 = vmatpush1.bf16.msra.mxu0 0
        %1321 = vmatprep.subr.bf16.mxu0 0
        %1322 = vmatpush1.bf16.msra.mxu0 0
        %1323 = vmatprep.subr.bf16.mxu0 0
        %1324 = vmatpush1.bf16.msra.mxu0 0
        %1325 = vmatprep.subr.bf16.mxu0 0
        %1326 = vmatpush1.bf16.msra.mxu0 0
        %1327 = vmatprep.subr.bf16.mxu0 0
        %1328 = vmatpush1.bf16.msra.mxu0 0
        %1329 = vmatprep.mubr.bf16.mxu0 0
        %1330 = vmatmul.mubr.bf16.gmra.mrb[0].mxu0 %v229
        %v1331 = vpop.f32.mrb[0].mxu0
        %v1332 = vadd.f32 %v405, %v1331
        %v1333 = vpop.f32.mrb[0].mxu0
        %v1334 = vadd.f32 %v409, %v1333
        %v1335 = vpop.f32.mrb[0].mxu0
        %v1336 = vadd.f32 %v405, %v1335
        %v1337 = vpop.f32.mrb[0].mxu0
        %v1338 = vadd.f32 %v409, %v1337
        %1339 = vdwg.mxu0
        %1340 = vmatprep.subr.bf16.mxu0 %v839
        %1341 = vmatpush1.bf16.msra.mxu0 %v838
        %1342 = vmatprep.subr.bf16.mxu0 %v855
        %1343 = vmatpush1.bf16.msra.mxu0 %v854
        %1344 = vmatprep.subr.bf16.mxu0 %v871
        %1345 = vmatpush1.bf16.msra.mxu0 %v870
        %1346 = vmatprep.subr.bf16.mxu0 %v887
        %1347 = vmatpush1.bf16.msra.mxu0 %v886
        %1348 = vmatprep.subr.bf16.mxu0 %v903
        %1349 = vmatpush1.bf16.msra.mxu0 %v902
        %1350 = vmatprep.subr.bf16.mxu0 %v919
        %1351 = vmatpush1.bf16.msra.mxu0 %v918
        %1352 = vmatprep.subr.bf16.mxu0 %v935
        %1353 = vmatpush1.bf16.msra.mxu0 %v934
        %1354 = vmatprep.subr.bf16.mxu0 %v951
        %1355 = vmatpush1.bf16.msra.mxu0 %v950
        %1356 = vmatprep.subr.bf16.mxu0 0
        %1357 = vmatpush1.bf16.msra.mxu0 0
        %1358 = vmatprep.subr.bf16.mxu0 0
        %1359 = vmatpush1.bf16.msra.mxu0 0
        %1360 = vmatprep.subr.bf16.mxu0 0
        %1361 = vmatpush1.bf16.msra.mxu0 0
        %1362 = vmatprep.subr.bf16.mxu0 0
        %1363 = vmatpush1.bf16.msra.mxu0 0
        %1364 = vmatprep.subr.bf16.mxu0 0
        %1365 = vmatpush1.bf16.msra.mxu0 0
        %1366 = vmatprep.subr.bf16.mxu0 0
        %1367 = vmatpush1.bf16.msra.mxu0 0
        %1368 = vmatprep.subr.bf16.mxu0 0
        %1369 = vmatpush1.bf16.msra.mxu0 0
        %1370 = vmatprep.subr.bf16.mxu0 0
        %1371 = vmatpush1.bf16.msra.mxu0 0
        %1372 = vmatprep.mubr.bf16.mxu0 0
        %1373 = vmatmul.mubr.bf16.gmra.mrb[0].mxu0 %v229
        %v1374 = vpop.f32.mrb[0].mxu0
        %v1375 = vadd.f32 %v413, %v1374
        %v1376 = vpop.f32.mrb[0].mxu0
        %v1377 = vadd.f32 %v417, %v1376
        %v1378 = vpop.f32.mrb[0].mxu0
        %v1379 = vadd.f32 %v413, %v1378
        %v1380 = vpop.f32.mrb[0].mxu0
        %v1381 = vadd.f32 %v417, %v1380
        %1382 = vdwg.mxu0
        %1383 = vmatprep.subr.bf16.mxu0 %v841
        %1384 = vmatpush1.bf16.msra.mxu0 %v840
        %1385 = vmatprep.subr.bf16.mxu0 %v857
        %1386 = vmatpush1.bf16.msra.mxu0 %v856
        %1387 = vmatprep.subr.bf16.mxu0 %v873
        %1388 = vmatpush1.bf16.msra.mxu0 %v872
        %1389 = vmatprep.subr.bf16.mxu0 %v889
        %1390 = vmatpush1.bf16.msra.mxu0 %v888
        %1391 = vmatprep.subr.bf16.mxu0 %v905
        %1392 = vmatpush1.bf16.msra.mxu0 %v904
        %1393 = vmatprep.subr.bf16.mxu0 %v921
        %1394 = vmatpush1.bf16.msra.mxu0 %v920
        %1395 = vmatprep.subr.bf16.mxu0 %v937
        %1396 = vmatpush1.bf16.msra.mxu0 %v936
        %1397 = vmatprep.subr.bf16.mxu0 %v953
        %1398 = vmatpush1.bf16.msra.mxu0 %v952
        %1399 = vmatprep.subr.bf16.mxu0 0
        %1400 = vmatpush1.bf16.msra.mxu0 0
        %1401 = vmatprep.subr.bf16.mxu0 0
        %1402 = vmatpush1.bf16.msra.mxu0 0
        %1403 = vmatprep.subr.bf16.mxu0 0
        %1404 = vmatpush1.bf16.msra.mxu0 0
        %1405 = vmatprep.subr.bf16.mxu0 0
        %1406 = vmatpush1.bf16.msra.mxu0 0
        %1407 = vmatprep.subr.bf16.mxu0 0
        %1408 = vmatpush1.bf16.msra.mxu0 0
        %1409 = vmatprep.subr.bf16.mxu0 0
        %1410 = vmatpush1.bf16.msra.mxu0 0
        %1411 = vmatprep.subr.bf16.mxu0 0
        %1412 = vmatpush1.bf16.msra.mxu0 0
        %1413 = vmatprep.subr.bf16.mxu0 0
        %1414 = vmatpush1.bf16.msra.mxu0 0
        %1415 = vmatprep.mubr.bf16.mxu0 0
        %1416 = vmatmul.mubr.bf16.gmra.mrb[0].mxu0 %v229
        %v1417 = vpop.f32.mrb[0].mxu0
        %v1418 = vadd.f32 %v421, %v1417
        %v1419 = vpop.f32.mrb[0].mxu0
        %v1420 = vadd.f32 %v425, %v1419
        %v1421 = vpop.f32.mrb[0].mxu0
        %v1422 = vadd.f32 %v421, %v1421
        %v1423 = vpop.f32.mrb[0].mxu0
        %v1424 = vadd.f32 %v425, %v1423
        %1425 = vdwg.mxu0
        %1426 = vst [vmem:[%s222] sm:$0xff] %v1117
        %1427 = vst [vmem:[%s222 + $0x8] sm:$0xff] %v1119
        %1428 = vst [vmem:[%s222 + $0x10] sm:$0xff] %v1160
        %1429 = vst [vmem:[%s222 + $0x18] sm:$0xff] %v1162
        %1430 = vst [vmem:[%s222 + $0x20] sm:$0xff] %v1203
        %1431 = vst [vmem:[%s222 + $0x28] sm:$0xff] %v1205
        %1432 = vst [vmem:[%s222 + $0x30] sm:$0xff] %v1246
        %1433 = vst [vmem:[%s222 + $0x38] sm:$0xff] %v1248
        %1434 = vst [vmem:[%s222 + $0x40] sm:$0xff] %v1289
        %1435 = vst [vmem:[%s222 + $0x48] sm:$0xff] %v1291
        %1436 = vst [vmem:[%s222 + $0x50] sm:$0xff] %v1332
        %1437 = vst [vmem:[%s222 + $0x58] sm:$0xff] %v1334
        %1438 = vst [vmem:[%s222 + $0x60] sm:$0xff] %v1375
        %1439 = vst [vmem:[%s222 + $0x68] sm:$0xff] %v1377
        %1440 = vst [vmem:[%s222 + $0x70] sm:$0xff] %v1418
        %1441 = vst [vmem:[%s222 + $0x78] sm:$0xff] %v1420
        %1442 = vst [vmem:[%s222 + $0x80] sm:$0xff] %v1121
        %1443 = vst [vmem:[%s222 + $0x88] sm:$0xff] %v1123
        %1444 = vst [vmem:[%s222 + $0x90] sm:$0xff] %v1164
        %1445 = vst [vmem:[%s222 + $0x98] sm:$0xff] %v1166
        %1446 = vst [vmem:[%s222 + $0xa0] sm:$0xff] %v1207
        %1447 = vst [vmem:[%s222 + $0xa8] sm:$0xff] %v1209
        %1448 = vst [vmem:[%s222 + $0xb0] sm:$0xff] %v1250
        %1449 = vst [vmem:[%s222 + $0xb8] sm:$0xff] %v1252
        %1450 = vst [vmem:[%s222 + $0xc0] sm:$0xff] %v1293
        %1451 = vst [vmem:[%s222 + $0xc8] sm:$0xff] %v1295
        %1452 = vst [vmem:[%s222 + $0xd0] sm:$0xff] %v1336
        %1453 = vst [vmem:[%s222 + $0xd8] sm:$0xff] %v1338
        %1454 = vst [vmem:[%s222 + $0xe0] sm:$0xff] %v1379
        %1455 = vst [vmem:[%s222 + $0xe8] sm:$0xff] %v1381
        %1456 = vst [vmem:[%s222 + $0xf0] sm:$0xff] %v1422
        %1457 = vst [vmem:[%s222 + $0xf8] sm:$0xff] %v1424
        %s1458 = sand.u32 %s101, 1
        %s1459 = sand.u32 %s101, 1
        %s1460 = smul.addr %s1459, 256
        %s1461 = scalar_lea.vmem [#allocation6], %s1460
        // Predicated region
        $region41: #{transformer_forward.3} parent=31 // pred_check
          %p1462 = pneg %p111
        $region42: #{transformer_forward.3} parent=31 // pred_check_branch
          %1464 = sbr.rel (%p1462) target = $region44
        $region43: #{transformer_forward.3} parent=31 // pred_region
          %s1465 = smul.u32 16, %s20
          %s1466 = smul.addr %s1465, 8
          %s1467 = scalar_lea.vmem %s3, %s1466
          // Predicated region
          $region45: #{transformer_forward.3} parent=43 // pred_check
            _
          $region46: #{transformer_forward.3} parent=43 // pred_check_branch
            %1469 = sbr.rel (0) target = $region48
          $region47: #{transformer_forward.3} parent=43 // pred_region
            // Predicated region
            $region49: #{transformer_forward.3} parent=47 // pred_check
              _
            $region50: #{transformer_forward.3} parent=47 // pred_check_branch
              %1471 = sbr.rel (0) target = $region52
            $region51: #{transformer_forward.3} parent=47 // pred_region
              loop: start=0, step=1, limit=1
              $region53: #{transformer_forward.3} parent=51 // loop_pre_header
                _
              $region54: #{transformer_forward.3} parent=51 // loop_header
                %s1473 = sphi 0, %s1477
                %p1474 = scmp.ge.s32.totalorder %s1473, 1
                %s1478 = sphi %s1461, %s1461
                %s1479 = sphi %s1467, %s1467
              $region55: #{transformer_forward.3} parent=51 // loop_header_branch
                %1476 = sbr.rel (%p1474) target = $region59
              $region56: #{transformer_forward.3} parent=51 // loop_body
                %v1480 = vld [vmem:[%s1478] sm:$0xff]
                %1481 = vst [vmem:[%s1479] sm:$0xff] %v1480
                %v1482 = vld [vmem:[%s1478 + $0x8] sm:$0xff]
                %1483 = vst [vmem:[%s1479 + $0x8] sm:$0xff] %v1482
                %v1484 = vld [vmem:[%s1478 + $0x10] sm:$0xff]
                %1485 = vst [vmem:[%s1479 + $0x10] sm:$0xff] %v1484
                %v1486 = vld [vmem:[%s1478 + $0x18] sm:$0xff]
                %1487 = vst [vmem:[%s1479 + $0x18] sm:$0xff] %v1486
                %v1488 = vld [vmem:[%s1478 + $0x20] sm:$0xff]
                %1489 = vst [vmem:[%s1479 + $0x20] sm:$0xff] %v1488
                %v1490 = vld [vmem:[%s1478 + $0x28] sm:$0xff]
                %1491 = vst [vmem:[%s1479 + $0x28] sm:$0xff] %v1490
                %v1492 = vld [vmem:[%s1478 + $0x30] sm:$0xff]
                %1493 = vst [vmem:[%s1479 + $0x30] sm:$0xff] %v1492
                %v1494 = vld [vmem:[%s1478 + $0x38] sm:$0xff]
                %1495 = vst [vmem:[%s1479 + $0x38] sm:$0xff] %v1494
                %v1496 = vld [vmem:[%s1478 + $0x40] sm:$0xff]
                %1497 = vst [vmem:[%s1479 + $0x40] sm:$0xff] %v1496
                %v1498 = vld [vmem:[%s1478 + $0x48] sm:$0xff]
                %1499 = vst [vmem:[%s1479 + $0x48] sm:$0xff] %v1498
                %v1500 = vld [vmem:[%s1478 + $0x50] sm:$0xff]
                %1501 = vst [vmem:[%s1479 + $0x50] sm:$0xff] %v1500
                %v1502 = vld [vmem:[%s1478 + $0x58] sm:$0xff]
                %1503 = vst [vmem:[%s1479 + $0x58] sm:$0xff] %v1502
                %v1504 = vld [vmem:[%s1478 + $0x60] sm:$0xff]
                %1505 = vst [vmem:[%s1479 + $0x60] sm:$0xff] %v1504
                %v1506 = vld [vmem:[%s1478 + $0x68] sm:$0xff]
                %1507 = vst [vmem:[%s1479 + $0x68] sm:$0xff] %v1506
                %v1508 = vld [vmem:[%s1478 + $0x70] sm:$0xff]
                %1509 = vst [vmem:[%s1479 + $0x70] sm:$0xff] %v1508
                %v1510 = vld [vmem:[%s1478 + $0x78] sm:$0xff]
                %1511 = vst [vmem:[%s1479 + $0x78] sm:$0xff] %v1510
                %v1512 = vld [vmem:[%s1478 + $0x80] sm:$0xff]
                %1513 = vst [vmem:[%s1479 + $0x780] sm:$0xff] %v1512
                %v1514 = vld [vmem:[%s1478 + $0x88] sm:$0xff]
                %1515 = vst [vmem:[%s1479 + $0x788] sm:$0xff] %v1514
                %v1516 = vld [vmem:[%s1478 + $0x90] sm:$0xff]
                %1517 = vst [vmem:[%s1479 + $0x790] sm:$0xff] %v1516
                %v1518 = vld [vmem:[%s1478 + $0x98] sm:$0xff]
                %1519 = vst [vmem:[%s1479 + $0x798] sm:$0xff] %v1518
                %v1520 = vld [vmem:[%s1478 + $0xa0] sm:$0xff]
                %1521 = vst [vmem:[%s1479 + $0x7a0] sm:$0xff] %v1520
                %v1522 = vld [vmem:[%s1478 + $0xa8] sm:$0xff]
                %1523 = vst [vmem:[%s1479 + $0x7a8] sm:$0xff] %v1522
                %v1524 = vld [vmem:[%s1478 + $0xb0] sm:$0xff]
                %1525 = vst [vmem:[%s1479 + $0x7b0] sm:$0xff] %v1524
                %v1526 = vld [vmem:[%s1478 + $0xb8] sm:$0xff]
                %1527 = vst [vmem:[%s1479 + $0x7b8] sm:$0xff] %v1526
                %v1528 = vld [vmem:[%s1478 + $0xc0] sm:$0xff]
                %1529 = vst [vmem:[%s1479 + $0x7c0] sm:$0xff] %v1528
                %v1530 = vld [vmem:[%s1478 + $0xc8] sm:$0xff]
                %1531 = vst [vmem:[%s1479 + $0x7c8] sm:$0xff] %v1530
                %v1532 = vld [vmem:[%s1478 + $0xd0] sm:$0xff]
                %1533 = vst [vmem:[%s1479 + $0x7d0] sm:$0xff] %v1532
                %v1534 = vld [vmem:[%s1478 + $0xd8] sm:$0xff]
                %1535 = vst [vmem:[%s1479 + $0x7d8] sm:$0xff] %v1534
                %v1536 = vld [vmem:[%s1478 + $0xe0] sm:$0xff]
                %1537 = vst [vmem:[%s1479 + $0x7e0] sm:$0xff] %v1536
                %v1538 = vld [vmem:[%s1478 + $0xe8] sm:$0xff]
                %1539 = vst [vmem:[%s1479 + $0x7e8] sm:$0xff] %v1538
                %v1540 = vld [vmem:[%s1478 + $0xf0] sm:$0xff]
                %1541 = vst [vmem:[%s1479 + $0x7f0] sm:$0xff] %v1540
                %v1542 = vld [vmem:[%s1478 + $0xf8] sm:$0xff]
                %1543 = vst [vmem:[%s1479 + $0x7f8] sm:$0xff] %v1542
              $region57: #{transformer_forward.3} parent=51 // loop_footer
                %s1477 = sadd.s32 1, %s1473
              $region58: #{transformer_forward.3} parent=51 // loop_footer_branch
                %1472 = sbr.rel target = $region54
              $region59: #{transformer_forward.3} parent=51 // loop_exit
                _
            $region52: #{transformer_forward.3} parent=47 // pred_fallthru
              _
            // Predicated region
            $region60: #{transformer_forward.3} parent=47 // pred_check
              _
            $region61: #{transformer_forward.3} parent=47 // pred_check_branch
              %1545 = sbr.rel target = $region63
            $region62: #{transformer_forward.3} parent=47 // pred_region
              _
            $region63: #{transformer_forward.3} parent=47 // pred_fallthru
              _
          $region48: #{transformer_forward.3} parent=43 // pred_fallthru
            _
          %1546 = vnop
        $region44: #{transformer_forward.3} parent=31 // pred_fallthru
          _
      $region32: #{transformer_forward.3} parent=5 // pred_fallthru
        _
      %p1547 = scmp.le.s32.totalorder 2, %s15
      // Predicated region
      $region64: #{transformer_forward.3} parent=5 // pred_check
        %p1548 = pneg %p1547
      $region65: #{transformer_forward.3} parent=5 // pred_check_branch
        %1550 = sbr.rel (%p1548) target = $region67
      $region66: #{transformer_forward.3} parent=5 // pred_region
        %s1551 = ssub.s32 %s15, 2
        // Predicated region
        $region68: #{transformer_forward.3} parent=66 // pred_check
          %p1552 = pneg %p117
        $region69: #{transformer_forward.3} parent=66 // pred_check_branch
          %1554 = sbr.rel (%p1552) target = $region71
        $region70: #{transformer_forward.3} parent=66 // pred_region
          %s1555 = sand.u32 %s102, 1
          %s1556 = sand.u32 %s102, 1
          %s1557 = smul.addr %s1556, 256
          %s1558 = scalar_lea.vmem [#allocation6], %s1557
        $region71: #{transformer_forward.3} parent=66 // pred_fallthru
          _
      $region67: #{transformer_forward.3} parent=5 // pred_fallthru
        _
    $region6: #{transformer_forward.3} parent=1 // loop_footer
      %s19 = sadd.s32 1, %s15
    $region7: #{transformer_forward.3} parent=1 // loop_footer_branch
      %14 = sbr.rel target = $region3
    $region8: #{transformer_forward.3} parent=1 // loop_exit
      _
    %1559 = vsyncpa [#allocation3], 1
    %s1560 = scalar_lea.sflag [#allocation3], 1
    %1561 = vsyncpa %s1560, 1
    %1562 = vsyncpa [#allocation5], 1
    %s1563 = scalar_lea.sflag [#allocation5], 1
    %1564 = vsyncpa %s1563, 1

// kernel: transformer_forward.2
$region0: #{transformer_forward.2}
  #allocation0 [shape = 'u32[]', space=smem, size = 0x4, offset = 0x4, fixed_abs, tag = 'smem constant byte address 0x4 - core index']
  #allocation1 [shape = 'u32[144,128]{1,0:T(1,128)}', space=vmem, size = 0x12000, scoped, tag = 'internal scratch']
  %s0 = inlined_call_operand.vmem [shape: f32[2,8,128], index: 0, kind: input, shape index: {}]
  %s1 = inlined_call_operand.hbm [shape: bf16[2,128,384], index: 1, kind: input, shape index: {}]
  %s2 = inlined_call_operand.hbm [shape: f32[2,1,384], index: 2, kind: input, shape index: {}]
  %s3 = inlined_call_operand.hbm [shape: bf16[2,128,128], index: 3, kind: input, shape index: {}]
  %s4 = inlined_call_operand.hbm [shape: f32[2,1,128], index: 4, kind: input, shape index: {}]
  %s5 = inlined_call_operand.hbm [shape: f32[2,1,128], index: 5, kind: input, shape index: {}]
  %s6 = inlined_call_operand.hbm [shape: f32[2,1,128], index: 6, kind: input, shape index: {}]
  %s7 = inlined_call_operand.hbm [shape: bf16[2,128,512], index: 7, kind: input, shape index: {}]
  %s8 = inlined_call_operand.hbm [shape: f32[2,1,512], index: 8, kind: input, shape index: {}]
  %s9 = inlined_call_operand.hbm [shape: bf16[2,512,128], index: 9, kind: input, shape index: {}]
  %s10 = inlined_call_operand.hbm [shape: f32[2,1,128], index: 10, kind: input, shape index: {}]
  %s11 = inlined_call_operand.hbm [shape: f32[2,1,128], index: 11, kind: input, shape index: {}]
  %s12 = inlined_call_operand.hbm [shape: f32[2,1,128], index: 12, kind: input, shape index: {}]
  %s13 = inlined_call_operand.vmem [shape: f32[2,8,128], index: 13, kind: output, shape index: {}]
  %s14 = sld [smem:[#allocation0]]
  $region137: #{transformer_forward.2} parent=0
    _
  %s16 = ssub.s32 1, %s14
  %s17 = scalar_select 0, %s16, %s14
  $region1: #{transformer_forward.2} parent=0
    #allocation2 [shape = 'u8[196608]{0}', space=vmem, size = 0x30000, scoped, tag = 'input window, operand 1']
    #allocation3 [shape = 's32[2]{0}', space=sflag, size = 0x8, scoped, tag = 'scoped memory for transformer_forward.2']
    #allocation4 [shape = 'u8[3072]{0}', space=vmem, size = 0xc00, scoped, tag = 'input window, operand 2']
    #allocation5 [shape = 's32[2]{0}', space=sflag, size = 0x8, scoped, tag = 'scoped memory for transformer_forward.2']
    #allocation6 [shape = 'u8[65536]{0}', space=vmem, size = 0x10000, scoped, tag = 'input window, operand 3']
    #allocation7 [shape = 'u8[1024]{0}', space=vmem, size = 0x400, scoped, tag = 'input window, operand 4']
    #allocation8 [shape = 's32[2]{0}', space=sflag, size = 0x8, scoped, tag = 'scoped memory for transformer_forward.2']
    #allocation9 [shape = 'u8[1024]{0}', space=vmem, size = 0x400, scoped, tag = 'input window, operand 5']
    #allocation10 [shape = 'u8[1024]{0}', space=vmem, size = 0x400, scoped, tag = 'input window, operand 6']
    #allocation11 [shape = 's32[2]{0}', space=sflag, size = 0x8, scoped, tag = 'scoped memory for transformer_forward.2']
    #allocation12 [shape = 'u8[262144]{0}', space=vmem, size = 0x40000, scoped, tag = 'input window, operand 7']
    #allocation13 [shape = 'u8[4096]{0}', space=vmem, size = 0x1000, scoped, tag = 'input window, operand 8']
    #allocation14 [shape = 's32[2]{0}', space=sflag, size = 0x8, scoped, tag = 'scoped memory for transformer_forward.2']
    #allocation15 [shape = 'u8[262144]{0}', space=vmem, size = 0x40000, scoped, tag = 'input window, operand 9']
    #allocation16 [shape = 'u8[1024]{0}', space=vmem, size = 0x400, scoped, tag = 'input window, operand 10']
    #allocation17 [shape = 's32[2]{0}', space=sflag, size = 0x8, scoped, tag = 'scoped memory for transformer_forward.2']
    #allocation18 [shape = 'u8[1024]{0}', space=vmem, size = 0x400, scoped, tag = 'input window, operand 11']
    #allocation19 [shape = 'u8[1024]{0}', space=vmem, size = 0x400, scoped, tag = 'input window, operand 12']
    #allocation20 [shape = 's32[2]{0}', space=sflag, size = 0x8, scoped, tag = 'scoped memory for transformer_forward.2']
    %18 = vsyncpa [#allocation3], 0
    %s19 = scalar_lea.sflag [#allocation3], 1
    %20 = vsyncpa %s19, 0
    %21 = vsyncpa [#allocation5], 0
    %s22 = scalar_lea.sflag [#allocation5], 1
    %23 = vsyncpa %s22, 0
    %24 = vsyncpa [#allocation8], 0
    %s25 = scalar_lea.sflag [#allocation8], 1
    %26 = vsyncpa %s25, 0
    %27 = vsyncpa [#allocation11], 0
    %s28 = scalar_lea.sflag [#allocation11], 1
    %29 = vsyncpa %s28, 0
    %30 = vsyncpa [#allocation14], 0
    %s31 = scalar_lea.sflag [#allocation14], 1
    %32 = vsyncpa %s31, 0
    %33 = vsyncpa [#allocation17], 0
    %s34 = scalar_lea.sflag [#allocation17], 1
    %35 = vsyncpa %s34, 0
    %36 = vsyncpa [#allocation20], 0
    %s37 = scalar_lea.sflag [#allocation20], 1
    %38 = vsyncpa %s37, 0
    loop: start=0, step=1, limit=4
    $region2: #{transformer_forward.2} parent=1 // loop_pre_header
      _
    $region3: #{transformer_forward.2} parent=1 // loop_header
      %s40 = sphi 0, %s44
      %p41 = scmp.ge.s32.totalorder %s40, 4
      %s48 = sphi 0, %s48
      %s50 = sphi 0, %s48
      %s51 = sphi 0, %s50
      %s65 = sphi 0, %s51
      %s71 = sphi 0, %s73
      %s74 = sphi 0, %s71
      %s75 = sphi 0, %s74
      %s91 = sphi 0, %s75
      %s97 = sphi 0, %s99
      %s100 = sphi 0, %s97
      %s101 = sphi 0, %s100
      %s117 = sphi 0, %s101
      %s123 = sphi 0, %s125
      %s126 = sphi 0, %s123
      %s127 = sphi 0, %s126
      %s143 = sphi 0, %s127
      %s149 = sphi 0, %s151
      %s152 = sphi 0, %s149
      %s153 = sphi 0, %s152
      %s169 = sphi 0, %s153
      %s175 = sphi 0, %s177
      %s178 = sphi 0, %s175
      %s179 = sphi 0, %s178
      %s195 = sphi 0, %s179
      %s201 = sphi 0, %s203
      %s204 = sphi 0, %s201
      %s205 = sphi 0, %s204
      %s221 = sphi 0, %s205
      %s227 = sphi 0, %s229
      %s230 = sphi 0, %s227
      %s231 = sphi 0, %s230
      %s247 = sphi 0, %s231
      %s253 = sphi 0, %s255
      %s256 = sphi 0, %s253
      %s257 = sphi 0, %s256
      %s273 = sphi 0, %s257
      %s279 = sphi 0, %s281
      %s282 = sphi 0, %s279
      %s283 = sphi 0, %s282
      %s299 = sphi 0, %s283
      %s305 = sphi 0, %s307
      %s308 = sphi 0, %s305
      %s309 = sphi 0, %s308
      %s325 = sphi 0, %s309
      %s331 = sphi 0, %s333
      %s334 = sphi 0, %s331
      %s335 = sphi 0, %s334
      %s351 = sphi 0, %s335
      %s357 = sphi 0, %s359
      %s360 = sphi 0, %s357
      %s361 = sphi 0, %s360
      %s377 = sphi 0, %s361
      %s381 = sphi 0, %s381
      %s383 = sphi 0, %s381
      %s384 = sphi 0, %s383
      %s398 = sphi 0, %s384
    $region4: #{transformer_forward.2} parent=1 // loop_header_branch
      %43 = sbr.rel (%p41) target = $region8
    $region5: #{transformer_forward.2} parent=1 // loop_body
      %s45 = ssub.s32 %s40, 1
      %s46 = ssub.s32 %s40, 2
      %s47 = sadd.s32 %s40, 1
      %s49 = sadd.s32 %s48, 1
      %p52 = scmp.eq.s32.totalorder %s40, 1
      %p53 = scmp.ne.s32.totalorder %s48, %s50
      %p54 = scmp.eq.s32.totalorder %s40, 0
      %p55 = por %p53, %p54
      %p56 = scmp.ne.s32.totalorder %s48, %s50
      %p57 = scmp.eq.s32.totalorder %s45, 1
      %p58 = por %p56, %p57
      %p59 = scmp.ne.s32.totalorder %s50, %s51
      %p60 = scmp.eq.s32.totalorder %s45, 0
      %p61 = por %p59, %p60
      %p62 = scmp.ne.s32.totalorder %s50, %s51
      %p63 = scmp.eq.s32.totalorder %s46, 1
      %p64 = por %p62, %p63
      %p66 = scmp.ne.s32.totalorder %s51, %s65
      %p67 = scmp.eq.s32.totalorder %s46, 0
      %p68 = por %p66, %p67
      %s69 = ssub.s32 %s40, %s47
      %p70 = scmp.eq.s32.totalorder %s69, 0
      %s72 = sadd.s32 %s71, 1
      %s73 = scalar_select %p70, %s71, %s72
      %p76 = pneg %p70
      %p77 = scmp.eq.s32.totalorder %s40, 1
      %p78 = por %p76, %p77
      %p79 = scmp.ne.s32.totalorder %s71, %s74
      %p80 = scmp.eq.s32.totalorder %s40, 0
      %p81 = por %p79, %p80
      %p82 = scmp.ne.s32.totalorder %s71, %s74
      %p83 = scmp.eq.s32.totalorder %s45, 1
      %p84 = por %p82, %p83
      %p85 = scmp.ne.s32.totalorder %s74, %s75
      %p86 = scmp.eq.s32.totalorder %s45, 0
      %p87 = por %p85, %p86
      %p88 = scmp.ne.s32.totalorder %s74, %s75
      %p89 = scmp.eq.s32.totalorder %s46, 1
      %p90 = por %p88, %p89
      %p92 = scmp.ne.s32.totalorder %s75, %s91
      %p93 = scmp.eq.s32.totalorder %s46, 0
      %p94 = por %p92, %p93
      %s95 = ssub.s32 %s40, %s47
      %p96 = scmp.eq.s32.totalorder %s95, 0
      %s98 = sadd.s32 %s97, 1
      %s99 = scalar_select %p96, %s97, %s98
      %p102 = pneg %p96
      %p103 = scmp.eq.s32.totalorder %s40, 1
      %p104 = por %p102, %p103
      %p105 = scmp.ne.s32.totalorder %s97, %s100
      %p106 = scmp.eq.s32.totalorder %s40, 0
      %p107 = por %p105, %p106
      %p108 = scmp.ne.s32.totalorder %s97, %s100
      %p109 = scmp.eq.s32.totalorder %s45, 1
      %p110 = por %p108, %p109
      %p111 = scmp.ne.s32.totalorder %s100, %s101
      %p112 = scmp.eq.s32.totalorder %s45, 0
      %p113 = por %p111, %p112
      %p114 = scmp.ne.s32.totalorder %s100, %s101
      %p115 = scmp.eq.s32.totalorder %s46, 1
      %p116 = por %p114, %p115
      %p118 = scmp.ne.s32.totalorder %s101, %s117
      %p119 = scmp.eq.s32.totalorder %s46, 0
      %p120 = por %p118, %p119
      %s121 = ssub.s32 %s40, %s47
      %p122 = scmp.eq.s32.totalorder %s121, 0
      %s124 = sadd.s32 %s123, 1
      %s125 = scalar_select %p122, %s123, %s124
      %p128 = pneg %p122
      %p129 = scmp.eq.s32.totalorder %s40, 1
      %p130 = por %p128, %p129
      %p131 = scmp.ne.s32.totalorder %s123, %s126
      %p132 = scmp.eq.s32.totalorder %s40, 0
      %p133 = por %p131, %p132
      %p134 = scmp.ne.s32.totalorder %s123, %s126
      %p135 = scmp.eq.s32.totalorder %s45, 1
      %p136 = por %p134, %p135
      %p137 = scmp.ne.s32.totalorder %s126, %s127
      %p138 = scmp.eq.s32.totalorder %s45, 0
      %p139 = por %p137, %p138
      %p140 = scmp.ne.s32.totalorder %s126, %s127
      %p141 = scmp.eq.s32.totalorder %s46, 1
      %p142 = por %p140, %p141
      %p144 = scmp.ne.s32.totalorder %s127, %s143
      %p145 = scmp.eq.s32.totalorder %s46, 0
      %p146 = por %p144, %p145
      %s147 = ssub.s32 %s40, %s47
      %p148 = scmp.eq.s32.totalorder %s147, 0
      %s150 = sadd.s32 %s149, 1
      %s151 = scalar_select %p148, %s149, %s150
      %p154 = pneg %p148
      %p155 = scmp.eq.s32.totalorder %s40, 1
      %p156 = por %p154, %p155
      %p157 = scmp.ne.s32.totalorder %s149, %s152
      %p158 = scmp.eq.s32.totalorder %s40, 0
      %p159 = por %p157, %p158
      %p160 = scmp.ne.s32.totalorder %s149, %s152
      %p161 = scmp.eq.s32.totalorder %s45, 1
      %p162 = por %p160, %p161
      %p163 = scmp.ne.s32.totalorder %s152, %s153
      %p164 = scmp.eq.s32.totalorder %s45, 0
      %p165 = por %p163, %p164
      %p166 = scmp.ne.s32.totalorder %s152, %s153
      %p167 = scmp.eq.s32.totalorder %s46, 1
      %p168 = por %p166, %p167
      %p170 = scmp.ne.s32.totalorder %s153, %s169
      %p171 = scmp.eq.s32.totalorder %s46, 0
      %p172 = por %p170, %p171
      %s173 = ssub.s32 %s40, %s47
      %p174 = scmp.eq.s32.totalorder %s173, 0
      %s176 = sadd.s32 %s175, 1
      %s177 = scalar_select %p174, %s175, %s176
      %p180 = pneg %p174
      %p181 = scmp.eq.s32.totalorder %s40, 1
      %p182 = por %p180, %p181
      %p183 = scmp.ne.s32.totalorder %s175, %s178
      %p184 = scmp.eq.s32.totalorder %s40, 0
      %p185 = por %p183, %p184
      %p186 = scmp.ne.s32.totalorder %s175, %s178
      %p187 = scmp.eq.s32.totalorder %s45, 1
      %p188 = por %p186, %p187
      %p189 = scmp.ne.s32.totalorder %s178, %s179
      %p190 = scmp.eq.s32.totalorder %s45, 0
      %p191 = por %p189, %p190
      %p192 = scmp.ne.s32.totalorder %s178, %s179
      %p193 = scmp.eq.s32.totalorder %s46, 1
      %p194 = por %p192, %p193
      %p196 = scmp.ne.s32.totalorder %s179, %s195
      %p197 = scmp.eq.s32.totalorder %s46, 0
      %p198 = por %p196, %p197
      %s199 = ssub.s32 %s40, %s47
      %p200 = scmp.eq.s32.totalorder %s199, 0
      %s202 = sadd.s32 %s201, 1
      %s203 = scalar_select %p200, %s201, %s202
      %p206 = pneg %p200
      %p207 = scmp.eq.s32.totalorder %s40, 1
      %p208 = por %p206, %p207
      %p209 = scmp.ne.s32.totalorder %s201, %s204
      %p210 = scmp.eq.s32.totalorder %s40, 0
      %p211 = por %p209, %p210
      %p212 = scmp.ne.s32.totalorder %s201, %s204
      %p213 = scmp.eq.s32.totalorder %s45, 1
      %p214 = por %p212, %p213
      %p215 = scmp.ne.s32.totalorder %s204, %s205
      %p216 = scmp.eq.s32.totalorder %s45, 0
      %p217 = por %p215, %p216
      %p218 = scmp.ne.s32.totalorder %s204, %s205
      %p219 = scmp.eq.s32.totalorder %s46, 1
      %p220 = por %p218, %p219
      %p222 = scmp.ne.s32.totalorder %s205, %s221
      %p223 = scmp.eq.s32.totalorder %s46, 0
      %p224 = por %p222, %p223
      %s225 = ssub.s32 %s40, %s47
      %p226 = scmp.eq.s32.totalorder %s225, 0
      %s228 = sadd.s32 %s227, 1
      %s229 = scalar_select %p226, %s227, %s228
      %p232 = pneg %p226
      %p233 = scmp.eq.s32.totalorder %s40, 1
      %p234 = por %p232, %p233
      %p235 = scmp.ne.s32.totalorder %s227, %s230
      %p236 = scmp.eq.s32.totalorder %s40, 0
      %p237 = por %p235, %p236
      %p238 = scmp.ne.s32.totalorder %s227, %s230
      %p239 = scmp.eq.s32.totalorder %s45, 1
      %p240 = por %p238, %p239
      %p241 = scmp.ne.s32.totalorder %s230, %s231
      %p242 = scmp.eq.s32.totalorder %s45, 0
      %p243 = por %p241, %p242
      %p244 = scmp.ne.s32.totalorder %s230, %s231
      %p245 = scmp.eq.s32.totalorder %s46, 1
      %p246 = por %p244, %p245
      %p248 = scmp.ne.s32.totalorder %s231, %s247
      %p249 = scmp.eq.s32.totalorder %s46, 0
      %p250 = por %p248, %p249
      %s251 = ssub.s32 %s40, %s47
      %p252 = scmp.eq.s32.totalorder %s251, 0
      %s254 = sadd.s32 %s253, 1
      %s255 = scalar_select %p252, %s253, %s254
      %p258 = pneg %p252
      %p259 = scmp.eq.s32.totalorder %s40, 1
      %p260 = por %p258, %p259
      %p261 = scmp.ne.s32.totalorder %s253, %s256
      %p262 = scmp.eq.s32.totalorder %s40, 0
      %p263 = por %p261, %p262
      %p264 = scmp.ne.s32.totalorder %s253, %s256
      %p265 = scmp.eq.s32.totalorder %s45, 1
      %p266 = por %p264, %p265
      %p267 = scmp.ne.s32.totalorder %s256, %s257
      %p268 = scmp.eq.s32.totalorder %s45, 0
      %p269 = por %p267, %p268
      %p270 = scmp.ne.s32.totalorder %s256, %s257
      %p271 = scmp.eq.s32.totalorder %s46, 1
      %p272 = por %p270, %p271
      %p274 = scmp.ne.s32.totalorder %s257, %s273
      %p275 = scmp.eq.s32.totalorder %s46, 0
      %p276 = por %p274, %p275
      %s277 = ssub.s32 %s40, %s47
      %p278 = scmp.eq.s32.totalorder %s277, 0
      %s280 = sadd.s32 %s279, 1
      %s281 = scalar_select %p278, %s279, %s280
      %p284 = pneg %p278
      %p285 = scmp.eq.s32.totalorder %s40, 1
      %p286 = por %p284, %p285
      %p287 = scmp.ne.s32.totalorder %s279, %s282
      %p288 = scmp.eq.s32.totalorder %s40, 0
      %p289 = por %p287, %p288
      %p290 = scmp.ne.s32.totalorder %s279, %s282
      %p291 = scmp.eq.s32.totalorder %s45, 1
      %p292 = por %p290, %p291
      %p293 = scmp.ne.s32.totalorder %s282, %s283
      %p294 = scmp.eq.s32.totalorder %s45, 0
      %p295 = por %p293, %p294
      %p296 = scmp.ne.s32.totalorder %s282, %s283
      %p297 = scmp.eq.s32.totalorder %s46, 1
      %p298 = por %p296, %p297
      %p300 = scmp.ne.s32.totalorder %s283, %s299
      %p301 = scmp.eq.s32.totalorder %s46, 0
      %p302 = por %p300, %p301
      %s303 = ssub.s32 %s40, %s47
      %p304 = scmp.eq.s32.totalorder %s303, 0
      %s306 = sadd.s32 %s305, 1
      %s307 = scalar_select %p304, %s305, %s306
      %p310 = pneg %p304
      %p311 = scmp.eq.s32.totalorder %s40, 1
      %p312 = por %p310, %p311
      %p313 = scmp.ne.s32.totalorder %s305, %s308
      %p314 = scmp.eq.s32.totalorder %s40, 0
      %p315 = por %p313, %p314
      %p316 = scmp.ne.s32.totalorder %s305, %s308
      %p317 = scmp.eq.s32.totalorder %s45, 1
      %p318 = por %p316, %p317
      %p319 = scmp.ne.s32.totalorder %s308, %s309
      %p320 = scmp.eq.s32.totalorder %s45, 0
      %p321 = por %p319, %p320
      %p322 = scmp.ne.s32.totalorder %s308, %s309
      %p323 = scmp.eq.s32.totalorder %s46, 1
      %p324 = por %p322, %p323
      %p326 = scmp.ne.s32.totalorder %s309, %s325
      %p327 = scmp.eq.s32.totalorder %s46, 0
      %p328 = por %p326, %p327
      %s329 = ssub.s32 %s40, %s47
      %p330 = scmp.eq.s32.totalorder %s329, 0
      %s332 = sadd.s32 %s331, 1
      %s333 = scalar_select %p330, %s331, %s332
      %p336 = pneg %p330
      %p337 = scmp.eq.s32.totalorder %s40, 1
      %p338 = por %p336, %p337
      %p339 = scmp.ne.s32.totalorder %s331, %s334
      %p340 = scmp.eq.s32.totalorder %s40, 0
      %p341 = por %p339, %p340
      %p342 = scmp.ne.s32.totalorder %s331, %s334
      %p343 = scmp.eq.s32.totalorder %s45, 1
      %p344 = por %p342, %p343
      %p345 = scmp.ne.s32.totalorder %s334, %s335
      %p346 = scmp.eq.s32.totalorder %s45, 0
      %p347 = por %p345, %p346
      %p348 = scmp.ne.s32.totalorder %s334, %s335
      %p349 = scmp.eq.s32.totalorder %s46, 1
      %p350 = por %p348, %p349
      %p352 = scmp.ne.s32.totalorder %s335, %s351
      %p353 = scmp.eq.s32.totalorder %s46, 0
      %p354 = por %p352, %p353
      %s355 = ssub.s32 %s40, %s47
      %p356 = scmp.eq.s32.totalorder %s355, 0
      %s358 = sadd.s32 %s357, 1
      %s359 = scalar_select %p356, %s357, %s358
      %p362 = pneg %p356
      %p363 = scmp.eq.s32.totalorder %s40, 1
      %p364 = por %p362, %p363
      %p365 = scmp.ne.s32.totalorder %s357, %s360
      %p366 = scmp.eq.s32.totalorder %s40, 0
      %p367 = por %p365, %p366
      %p368 = scmp.ne.s32.totalorder %s357, %s360
      %p369 = scmp.eq.s32.totalorder %s45, 1
      %p370 = por %p368, %p369
      %p371 = scmp.ne.s32.totalorder %s360, %s361
      %p372 = scmp.eq.s32.totalorder %s45, 0
      %p373 = por %p371, %p372
      %p374 = scmp.ne.s32.totalorder %s360, %s361
      %p375 = scmp.eq.s32.totalorder %s46, 1
      %p376 = por %p374, %p375
      %p378 = scmp.ne.s32.totalorder %s361, %s377
      %p379 = scmp.eq.s32.totalorder %s46, 0
      %p380 = por %p378, %p379
      %s382 = sadd.s32 %s381, 1
      %p385 = scmp.eq.s32.totalorder %s40, 1
      %p386 = scmp.ne.s32.totalorder %s381, %s383
      %p387 = scmp.eq.s32.totalorder %s40, 0
      %p388 = por %p386, %p387
      %p389 = scmp.ne.s32.totalorder %s381, %s383
      %p390 = scmp.eq.s32.totalorder %s45, 1
      %p391 = por %p389, %p390
      %p392 = scmp.ne.s32.totalorder %s383, %s384
      %p393 = scmp.eq.s32.totalorder %s45, 0
      %p394 = por %p392, %p393
      %p395 = scmp.ne.s32.totalorder %s383, %s384
      %p396 = scmp.eq.s32.totalorder %s46, 1
      %p397 = por %p395, %p396
      %p399 = scmp.ne.s32.totalorder %s384, %s398
      %p400 = scmp.eq.s32.totalorder %s46, 0
      %p401 = por %p399, %p400
      %p402 = scmp.le.s32.totalorder 1, %s40
      %p403 = scmp.lt.s32.totalorder %s40, 3
      %p404 = pnand %p402, %p403
      %p405 = pneg %p404
      // Predicated region
      $region9: #{transformer_forward.2} parent=5 // pred_check
        _
      $region10: #{transformer_forward.2} parent=5 // pred_check_branch
        %407 = sbr.rel (%p404) target = $region12
      $region11: #{transformer_forward.2} parent=5 // pred_region
        %s408 = ssub.s32 %s40, 1
        // Predicated region
        $region13: #{transformer_forward.2} parent=11 // pred_check
          %p409 = pneg %p61
        $region14: #{transformer_forward.2} parent=11 // pred_check_branch
          %411 = sbr.rel (%p409) target = $region16
        $region15: #{transformer_forward.2} parent=11 // pred_region
          _
        $region16: #{transformer_forward.2} parent=11 // pred_fallthru
          _
      $region12: #{transformer_forward.2} parent=5 // pred_fallthru
        _
      %p412 = scmp.lt.s32.totalorder %s40, 2
      // Predicated region
      $region17: #{transformer_forward.2} parent=5 // pred_check
        %p413 = pneg %p412
      $region18: #{transformer_forward.2} parent=5 // pred_check_branch
        %415 = sbr.rel (%p413) target = $region20
      $region19: #{transformer_forward.2} parent=5 // pred_region
        // Predicated region
        $region21: #{transformer_forward.2} parent=19 // pred_check
          %p416 = pneg %p81
        $region22: #{transformer_forward.2} parent=19 // pred_check_branch
          %418 = sbr.rel (%p416) target = $region24
        $region23: #{transformer_forward.2} parent=19 // pred_region
          %s419 = sand.u32 %s71, 1
          %s420 = scalar_lea.sflag [#allocation3], %s419
          %s421 = sand.u32 %s71, 1
          %s422 = smul.addr %s421, 192
          %s423 = scalar_lea.vmem [#allocation2], %s422
          %s425 = ssub.s32 3072, 3072
          %426 = vsyncadd %s420, %s425
          %s427 = smul.addr %s40, 48
          %s428 = smul.addr %s427, 64
          %s429 = scalar_lea.hbm %s1, %s428
          %s430 = sshll.u32 %s423, 4
          %s431 = int_to_ptr.vmem [resolvable:$true] %s430
          %436 = dma.hbm_to_vmem [thread:$0]  %s429, 3072, %s431, %s420, 192, 192, 12
        $region24: #{transformer_forward.2} parent=19 // pred_fallthru
          _
        // Predicated region
        $region25: #{transformer_forward.2} parent=19 // pred_check
          %p437 = pneg %p107
        $region26: #{transformer_forward.2} parent=19 // pred_check_branch
          %439 = sbr.rel (%p437) target = $region28
        $region27: #{transformer_forward.2} parent=19 // pred_region
          %s440 = sand.u32 %s40, 1
          %s441 = scalar_lea.sflag [#allocation5], %s440
          %s442 = sand.u32 %s97, 1
          %s443 = smul.addr %s442, 3
          %s444 = scalar_lea.vmem [#allocation4], %s443
          %s446 = ssub.s32 48, 48
          %447 = vsyncadd %s441, %s446
          %s448 = smul.addr %s40, 3
          %s449 = smul.addr %s448, 16
          %s450 = scalar_lea.hbm %s2, %s449
          %s452 = sshll.u32 %s444, 4
          %s453 = int_to_ptr.vmem [resolvable:$true] %s452
          %455 = dma.hbm_to_vmem [thread:$0]  %s450, 48, %s453, %s441
        $region28: #{transformer_forward.2} parent=19 // pred_fallthru
          _
        // Predicated region
        $region29: #{transformer_forward.2} parent=19 // pred_check
          %p456 = pneg %p133
        $region30: #{transformer_forward.2} parent=19 // pred_check_branch
          %458 = sbr.rel (%p456) target = $region32
        $region31: #{transformer_forward.2} parent=19 // pred_region
          %s459 = sand.u32 %s40, 1
          %s460 = scalar_lea.sflag [#allocation5], %s459
          %s461 = sand.u32 %s123, 1
          %s462 = smul.addr %s461, 64
          %s463 = scalar_lea.vmem [#allocation6], %s462
          %s465 = ssub.s32 1024, 1024
          %466 = vsyncadd %s460, %s465
          %s467 = smul.addr %s40, 16
          %s468 = smul.addr %s467, 64
          %s469 = scalar_lea.hbm %s3, %s468
          %s470 = sshll.u32 %s463, 4
          %s471 = int_to_ptr.vmem [resolvable:$true] %s470
          %476 = dma.hbm_to_vmem [thread:$0]  %s469, 1024, %s471, %s460, 64, 64, 4
        $region32: #{transformer_forward.2} parent=19 // pred_fallthru
          _
        // Predicated region
        $region33: #{transformer_forward.2} parent=19 // pred_check
          %p477 = pneg %p159
        $region34: #{transformer_forward.2} parent=19 // pred_check_branch
          %479 = sbr.rel (%p477) target = $region36
        $region35: #{transformer_forward.2} parent=19 // pred_region
          %s480 = sand.u32 %s40, 1
          %s481 = scalar_lea.sflag [#allocation8], %s480
          %s482 = sand.u32 %s149, 1
          %s483 = scalar_lea.vmem [#allocation7], %s482
          %s485 = ssub.s32 16, 16
          %486 = vsyncadd %s481, %s485
          %s487 = smul.addr %s40, 16
          %s488 = scalar_lea.hbm %s4, %s487
          %s490 = sshll.u32 %s483, 4
          %s491 = int_to_ptr.vmem [resolvable:$true] %s490
          %493 = dma.hbm_to_vmem [thread:$0]  %s488, 16, %s491, %s481
        $region36: #{transformer_forward.2} parent=19 // pred_fallthru
          _
        // Predicated region
        $region37: #{transformer_forward.2} parent=19 // pred_check
          %p494 = pneg %p185
        $region38: #{transformer_forward.2} parent=19 // pred_check_branch
          %496 = sbr.rel (%p494) target = $region40
        $region39: #{transformer_forward.2} parent=19 // pred_region
          %s497 = sand.u32 %s40, 1
          %s498 = scalar_lea.sflag [#allocation8], %s497
          %s499 = sand.u32 %s175, 1
          %s500 = scalar_lea.vmem [#allocation9], %s499
          %s502 = ssub.s32 16, 16
          %503 = vsyncadd %s498, %s502
          %s504 = smul.addr %s40, 16
          %s505 = scalar_lea.hbm %s5, %s504
          %s507 = sshll.u32 %s500, 4
          %s508 = int_to_ptr.vmem [resolvable:$true] %s507
          %510 = dma.hbm_to_vmem [thread:$0]  %s505, 16, %s508, %s498
        $region40: #{transformer_forward.2} parent=19 // pred_fallthru
          _
        // Predicated region
        $region41: #{transformer_forward.2} parent=19 // pred_check
          %p511 = pneg %p211
        $region42: #{transformer_forward.2} parent=19 // pred_check_branch
          %513 = sbr.rel (%p511) target = $region44
        $region43: #{transformer_forward.2} parent=19 // pred_region
          %s514 = sand.u32 %s40, 1
          %s515 = scalar_lea.sflag [#allocation11], %s514
          %s516 = sand.u32 %s201, 1
          %s517 = scalar_lea.vmem [#allocation10], %s516
          %s519 = ssub.s32 16, 16
          %520 = vsyncadd %s515, %s519
          %s521 = smul.addr %s40, 16
          %s522 = scalar_lea.hbm %s6, %s521
          %s524 = sshll.u32 %s517, 4
          %s525 = int_to_ptr.vmem [resolvable:$true] %s524
          %527 = dma.hbm_to_vmem [thread:$0]  %s522, 16, %s525, %s515
        $region44: #{transformer_forward.2} parent=19 // pred_fallthru
          _
        // Predicated region
        $region45: #{transformer_forward.2} parent=19 // pred_check
          %p528 = pneg %p237
        $region46: #{transformer_forward.2} parent=19 // pred_check_branch
          %530 = sbr.rel (%p528) target = $region48
        $region47: #{transformer_forward.2} parent=19 // pred_region
          %s531 = sand.u32 %s40, 1
          %s532 = scalar_lea.sflag [#allocation11], %s531
          %s533 = sand.u32 %s227, 1
          %s534 = smul.addr %s533, 256
          %s535 = scalar_lea.vmem [#allocation12], %s534
          %s537 = ssub.s32 4096, 4096
          %538 = vsyncadd %s532, %s537
          %s539 = smul.addr %s40, 64
          %s540 = smul.addr %s539, 64
          %s541 = scalar_lea.hbm %s7, %s540
          %s542 = sshll.u32 %s535, 4
          %s543 = int_to_ptr.vmem [resolvable:$true] %s542
          %548 = dma.hbm_to_vmem [thread:$0]  %s541, 4096, %s543, %s532, 256, 256, 16
        $region48: #{transformer_forward.2} parent=19 // pred_fallthru
          _
        // Predicated region
        $region49: #{transformer_forward.2} parent=19 // pred_check
          %p549 = pneg %p263
        $region50: #{transformer_forward.2} parent=19 // pred_check_branch
          %551 = sbr.rel (%p549) target = $region52
        $region51: #{transformer_forward.2} parent=19 // pred_region
          %s552 = sand.u32 %s40, 1
          %s553 = scalar_lea.sflag [#allocation14], %s552
          %s554 = sand.u32 %s253, 1
          %s555 = smul.addr %s554, 4
          %s556 = scalar_lea.vmem [#allocation13], %s555
          %s558 = ssub.s32 64, 64
          %559 = vsyncadd %s553, %s558
          %s560 = smul.addr %s40, 4
          %s561 = smul.addr %s560, 16
          %s562 = scalar_lea.hbm %s8, %s561
          %s564 = sshll.u32 %s556, 4
          %s565 = int_to_ptr.vmem [resolvable:$true] %s564
          %567 = dma.hbm_to_vmem [thread:$0]  %s562, 64, %s565, %s553
        $region52: #{transformer_forward.2} parent=19 // pred_fallthru
          _
        // Predicated region
        $region53: #{transformer_forward.2} parent=19 // pred_check
          %p568 = pneg %p289
        $region54: #{transformer_forward.2} parent=19 // pred_check_branch
          %570 = sbr.rel (%p568) target = $region56
        $region55: #{transformer_forward.2} parent=19 // pred_region
          %s571 = sand.u32 %s40, 1
          %s572 = scalar_lea.sflag [#allocation14], %s571
          %s573 = sand.u32 %s279, 1
          %s574 = smul.addr %s573, 256
          %s575 = scalar_lea.vmem [#allocation15], %s574
          %s577 = ssub.s32 4096, 4096
          %578 = vsyncadd %s572, %s577
          %s579 = smul.addr %s40, 64
          %s580 = smul.addr %s579, 64
          %s581 = scalar_lea.hbm %s9, %s580
          %s582 = sshll.u32 %s575, 4
          %s583 = int_to_ptr.vmem [resolvable:$true] %s582
          %588 = dma.hbm_to_vmem [thread:$0]  %s581, 4096, %s583, %s572, 64, 64, 4
        $region56: #{transformer_forward.2} parent=19 // pred_fallthru
          _
        // Predicated region
        $region57: #{transformer_forward.2} parent=19 // pred_check
          %p589 = pneg %p315
        $region58: #{transformer_forward.2} parent=19 // pred_check_branch
          %591 = sbr.rel (%p589) target = $region60
        $region59: #{transformer_forward.2} parent=19 // pred_region
          %s592 = sand.u32 %s40, 1
          %s593 = scalar_lea.sflag [#allocation17], %s592
          %s594 = sand.u32 %s305, 1
          %s595 = scalar_lea.vmem [#allocation16], %s594
          %s597 = ssub.s32 16, 16
          %598 = vsyncadd %s593, %s597
          %s599 = smul.addr %s40, 16
          %s600 = scalar_lea.hbm %s10, %s599
          %s602 = sshll.u32 %s595, 4
          %s603 = int_to_ptr.vmem [resolvable:$true] %s602
          %605 = dma.hbm_to_vmem [thread:$0]  %s600, 16, %s603, %s593
        $region60: #{transformer_forward.2} parent=19 // pred_fallthru
          _
        // Predicated region
        $region61: #{transformer_forward.2} parent=19 // pred_check
          %p606 = pneg %p341
        $region62: #{transformer_forward.2} parent=19 // pred_check_branch
          %608 = sbr.rel (%p606) target = $region64
        $region63: #{transformer_forward.2} parent=19 // pred_region
          %s609 = sand.u32 %s40, 1
          %s610 = scalar_lea.sflag [#allocation17], %s609
          %s611 = sand.u32 %s331, 1
          %s612 = scalar_lea.vmem [#allocation18], %s611
          %s614 = ssub.s32 16, 16
          %615 = vsyncadd %s610, %s614
          %s616 = smul.addr %s40, 16
          %s617 = scalar_lea.hbm %s11, %s616
          %s619 = sshll.u32 %s612, 4
          %s620 = int_to_ptr.vmem [resolvable:$true] %s619
          %622 = dma.hbm_to_vmem [thread:$0]  %s617, 16, %s620, %s610
        $region64: #{transformer_forward.2} parent=19 // pred_fallthru
          _
        // Predicated region
        $region65: #{transformer_forward.2} parent=19 // pred_check
          %p623 = pneg %p367
        $region66: #{transformer_forward.2} parent=19 // pred_check_branch
          %625 = sbr.rel (%p623) target = $region68
        $region67: #{transformer_forward.2} parent=19 // pred_region
          %s626 = sand.u32 %s357, 1
          %s627 = scalar_lea.sflag [#allocation20], %s626
          %s628 = sand.u32 %s357, 1
          %s629 = scalar_lea.vmem [#allocation19], %s628
          %s631 = ssub.s32 16, 16
          %632 = vsyncadd %s627, %s631
          %s633 = smul.addr %s40, 16
          %s634 = scalar_lea.hbm %s12, %s633
          %s636 = sshll.u32 %s629, 4
          %s637 = int_to_ptr.vmem [resolvable:$true] %s636
          %639 = dma.hbm_to_vmem [thread:$0]  %s634, 16, %s637, %s627
        $region68: #{transformer_forward.2} parent=19 // pred_fallthru
          _
      $region20: #{transformer_forward.2} parent=5 // pred_fallthru
        _
      %p640 = scmp.le.s32.totalorder 1, %s40
      %p641 = scmp.lt.s32.totalorder %s40, 3
      %p642 = pnand %p640, %p641
      %p643 = pneg %p642
      // Predicated region
      $region69: #{transformer_forward.2} parent=5 // pred_check
        _
      $region70: #{transformer_forward.2} parent=5 // pred_check_branch
        %645 = sbr.rel (%p642) target = $region72
      $region71: #{transformer_forward.2} parent=5 // pred_region
        %s646 = ssub.s32 %s40, 1
        %s647 = sand.u32 %s74, 1
        %s648 = scalar_lea.sflag [#allocation3], %s647
        %s649 = sand.u32 %s74, 1
        %s650 = smul.addr %s649, 192
        %s651 = scalar_lea.vmem [#allocation2], %s650
        // Predicated region
        $region73: #{transformer_forward.2} parent=71 // pred_check
          %p652 = pneg %p87
        $region74: #{transformer_forward.2} parent=71 // pred_check_branch
          %654 = sbr.rel (%p652) target = $region76
        $region75: #{transformer_forward.2} parent=71 // pred_region
          %655 = dma.done %s648, 3072
        $region76: #{transformer_forward.2} parent=71 // pred_fallthru
          _
        %s656 = sand.u32 %s45, 1
        %s657 = scalar_lea.sflag [#allocation5], %s656
        %s658 = sand.u32 %s100, 1
        %s659 = smul.addr %s658, 3
        %s660 = scalar_lea.vmem [#allocation4], %s659
        // Predicated region
        $region77: #{transformer_forward.2} parent=71 // pred_check
          %p661 = pneg %p113
        $region78: #{transformer_forward.2} parent=71 // pred_check_branch
          %663 = sbr.rel (%p661) target = $region80
        $region79: #{transformer_forward.2} parent=71 // pred_region
          %664 = dma.done %s657, 48
        $region80: #{transformer_forward.2} parent=71 // pred_fallthru
          _
        %s665 = sand.u32 %s45, 1
        %s666 = scalar_lea.sflag [#allocation5], %s665
        %s667 = sand.u32 %s126, 1
        %s668 = smul.addr %s667, 64
        %s669 = scalar_lea.vmem [#allocation6], %s668
        // Predicated region
        $region81: #{transformer_forward.2} parent=71 // pred_check
          %p670 = pneg %p139
        $region82: #{transformer_forward.2} parent=71 // pred_check_branch
          %672 = sbr.rel (%p670) target = $region84
        $region83: #{transformer_forward.2} parent=71 // pred_region
          %673 = dma.done %s666, 1024
        $region84: #{transformer_forward.2} parent=71 // pred_fallthru
          _
        %s674 = sand.u32 %s45, 1
        %s675 = scalar_lea.sflag [#allocation8], %s674
        %s676 = sand.u32 %s152, 1
        %s677 = scalar_lea.vmem [#allocation7], %s676
        // Predicated region
        $region85: #{transformer_forward.2} parent=71 // pred_check
          %p678 = pneg %p165
        $region86: #{transformer_forward.2} parent=71 // pred_check_branch
          %680 = sbr.rel (%p678) target = $region88
        $region87: #{transformer_forward.2} parent=71 // pred_region
          %681 = dma.done %s675, 16
        $region88: #{transformer_forward.2} parent=71 // pred_fallthru
          _
        %s682 = sand.u32 %s45, 1
        %s683 = scalar_lea.sflag [#allocation8], %s682
        %s684 = sand.u32 %s178, 1
        %s685 = scalar_lea.vmem [#allocation9], %s684
        // Predicated region
        $region89: #{transformer_forward.2} parent=71 // pred_check
          %p686 = pneg %p191
        $region90: #{transformer_forward.2} parent=71 // pred_check_branch
          %688 = sbr.rel (%p686) target = $region92
        $region91: #{transformer_forward.2} parent=71 // pred_region
          %689 = dma.done %s683, 16
        $region92: #{transformer_forward.2} parent=71 // pred_fallthru
          _
        %s690 = sand.u32 %s45, 1
        %s691 = scalar_lea.sflag [#allocation11], %s690
        %s692 = sand.u32 %s204, 1
        %s693 = scalar_lea.vmem [#allocation10], %s692
        // Predicated region
        $region93: #{transformer_forward.2} parent=71 // pred_check
          %p694 = pneg %p217
        $region94: #{transformer_forward.2} parent=71 // pred_check_branch
          %696 = sbr.rel (%p694) target = $region96
        $region95: #{transformer_forward.2} parent=71 // pred_region
          %697 = dma.done %s691, 16
        $region96: #{transformer_forward.2} parent=71 // pred_fallthru
          _
        %s698 = sand.u32 %s45, 1
        %s699 = scalar_lea.sflag [#allocation11], %s698
        %s700 = sand.u32 %s230, 1
        %s701 = smul.addr %s700, 256
        %s702 = scalar_lea.vmem [#allocation12], %s701
        // Predicated region
        $region97: #{transformer_forward.2} parent=71 // pred_check
          %p703 = pneg %p243
        $region98: #{transformer_forward.2} parent=71 // pred_check_branch
          %705 = sbr.rel (%p703) target = $region100
        $region99: #{transformer_forward.2} parent=71 // pred_region
          %706 = dma.done %s699, 4096
        $region100: #{transformer_forward.2} parent=71 // pred_fallthru
          _
        %s707 = sand.u32 %s45, 1
        %s708 = scalar_lea.sflag [#allocation14], %s707
        %s709 = sand.u32 %s256, 1
        %s710 = smul.addr %s709, 4
        %s711 = scalar_lea.vmem [#allocation13], %s710
        // Predicated region
        $region101: #{transformer_forward.2} parent=71 // pred_check
          %p712 = pneg %p269
        $region102: #{transformer_forward.2} parent=71 // pred_check_branch
          %714 = sbr.rel (%p712) target = $region104
        $region103: #{transformer_forward.2} parent=71 // pred_region
          %715 = dma.done %s708, 64
        $region104: #{transformer_forward.2} parent=71 // pred_fallthru
          _
        %s716 = sand.u32 %s45, 1
        %s717 = scalar_lea.sflag [#allocation14], %s716
        %s718 = sand.u32 %s282, 1
        %s719 = smul.addr %s718, 256
        %s720 = scalar_lea.vmem [#allocation15], %s719
        // Predicated region
        $region105: #{transformer_forward.2} parent=71 // pred_check
          %p721 = pneg %p295
        $region106: #{transformer_forward.2} parent=71 // pred_check_branch
          %723 = sbr.rel (%p721) target = $region108
        $region107: #{transformer_forward.2} parent=71 // pred_region
          %724 = dma.done %s717, 4096
        $region108: #{transformer_forward.2} parent=71 // pred_fallthru
          _
        %s725 = sand.u32 %s45, 1
        %s726 = scalar_lea.sflag [#allocation17], %s725
        %s727 = sand.u32 %s308, 1
        %s728 = scalar_lea.vmem [#allocation16], %s727
        // Predicated region
        $region109: #{transformer_forward.2} parent=71 // pred_check
          %p729 = pneg %p321
        $region110: #{transformer_forward.2} parent=71 // pred_check_branch
          %731 = sbr.rel (%p729) target = $region112
        $region111: #{transformer_forward.2} parent=71 // pred_region
          %732 = dma.done %s726, 16
        $region112: #{transformer_forward.2} parent=71 // pred_fallthru
          _
        %s733 = sand.u32 %s45, 1
        %s734 = scalar_lea.sflag [#allocation17], %s733
        %s735 = sand.u32 %s334, 1
        %s736 = scalar_lea.vmem [#allocation18], %s735
        // Predicated region
        $region113: #{transformer_forward.2} parent=71 // pred_check
          %p737 = pneg %p347
        $region114: #{transformer_forward.2} parent=71 // pred_check_branch
          %739 = sbr.rel (%p737) target = $region116
        $region115: #{transformer_forward.2} parent=71 // pred_region
          %740 = dma.done %s734, 16
        $region116: #{transformer_forward.2} parent=71 // pred_fallthru
          _
        %s741 = sand.u32 %s360, 1
        %s742 = scalar_lea.sflag [#allocation20], %s741
        %s743 = sand.u32 %s360, 1
        %s744 = scalar_lea.vmem [#allocation19], %s743
        // Predicated region
        $region117: #{transformer_forward.2} parent=71 // pred_check
          %p745 = pneg %p373
        $region118: #{transformer_forward.2} parent=71 // pred_check_branch
          %747 = sbr.rel (%p745) target = $region120
        $region119: #{transformer_forward.2} parent=71 // pred_region
          %748 = dma.done %s742, 16
        $region120: #{transformer_forward.2} parent=71 // pred_fallthru
          _
        %p749 = pneg %p61
        %p750 = pneg %p58
        %s751 = sand.u32 %s74, 1
        %s752 = scalar_lea.sflag [#allocation3], %s751
        %s753 = sand.u32 %s74, 1
        %s754 = smul.addr %s753, 192
        %s755 = scalar_lea.vmem [#allocation2], %s754
        %p756 = pneg %p87
        %p757 = pneg %p84
        %s758 = sand.u32 %s45, 1
        %s759 = scalar_lea.sflag [#allocation5], %s758
        %s760 = sand.u32 %s100, 1
        %s761 = smul.addr %s760, 3
        %s762 = scalar_lea.vmem [#allocation4], %s761
        %p763 = pneg %p113
        %p764 = pneg %p110
        %s765 = sand.u32 %s45, 1
        %s766 = scalar_lea.sflag [#allocation5], %s765
        %s767 = sand.u32 %s126, 1
        %s768 = smul.addr %s767, 64
        %s769 = scalar_lea.vmem [#allocation6], %s768
        %p770 = pneg %p139
        %p771 = pneg %p136
        %s772 = sand.u32 %s45, 1
        %s773 = scalar_lea.sflag [#allocation8], %s772
        %s774 = sand.u32 %s152, 1
        %s775 = scalar_lea.vmem [#allocation7], %s774
        %p776 = pneg %p165
        %p777 = pneg %p162
        %s778 = sand.u32 %s45, 1
        %s779 = scalar_lea.sflag [#allocation8], %s778
        %s780 = sand.u32 %s178, 1
        %s781 = scalar_lea.vmem [#allocation9], %s780
        %p782 = pneg %p191
        %p783 = pneg %p188
        %s784 = sand.u32 %s45, 1
        %s785 = scalar_lea.sflag [#allocation11], %s784
        %s786 = sand.u32 %s204, 1
        %s787 = scalar_lea.vmem [#allocation10], %s786
        %p788 = pneg %p217
        %p789 = pneg %p214
        %s790 = sand.u32 %s45, 1
        %s791 = scalar_lea.sflag [#allocation11], %s790
        %s792 = sand.u32 %s230, 1
        %s793 = smul.addr %s792, 256
        %s794 = scalar_lea.vmem [#allocation12], %s793
        %p795 = pneg %p243
        %p796 = pneg %p240
        %s797 = sand.u32 %s45, 1
        %s798 = scalar_lea.sflag [#allocation14], %s797
        %s799 = sand.u32 %s256, 1
        %s800 = smul.addr %s799, 4
        %s801 = scalar_lea.vmem [#allocation13], %s800
        %p802 = pneg %p269
        %p803 = pneg %p266
        %s804 = sand.u32 %s45, 1
        %s805 = scalar_lea.sflag [#allocation14], %s804
        %s806 = sand.u32 %s282, 1
        %s807 = smul.addr %s806, 256
        %s808 = scalar_lea.vmem [#allocation15], %s807
        %p809 = pneg %p295
        %p810 = pneg %p292
        %s811 = sand.u32 %s45, 1
        %s812 = scalar_lea.sflag [#allocation17], %s811
        %s813 = sand.u32 %s308, 1
        %s814 = scalar_lea.vmem [#allocation16], %s813
        %p815 = pneg %p321
        %p816 = pneg %p318
        %s817 = sand.u32 %s45, 1
        %s818 = scalar_lea.sflag [#allocation17], %s817
        %s819 = sand.u32 %s334, 1
        %s820 = scalar_lea.vmem [#allocation18], %s819
        %p821 = pneg %p347
        %p822 = pneg %p344
        %s823 = sand.u32 %s360, 1
        %s824 = scalar_lea.sflag [#allocation20], %s823
        %s825 = sand.u32 %s360, 1
        %s826 = scalar_lea.vmem [#allocation19], %s825
        %p827 = pneg %p373
        %p828 = pneg %p370
        %p829 = pneg %p394
        %p830 = pneg %p391
        %p832 = scmp.eq.s32.totalorder %s45, 0
        // Predicated region
        $region121: #{transformer_forward.2} parent=71 // pred_check
          %p833 = pneg %p832
        $region122: #{transformer_forward.2} parent=71 // pred_check_branch
          %835 = sbr.rel (%p833) target = $region124
        $region123: #{transformer_forward.2} parent=71 // pred_region
          %v836 = vld [vmem:[%s0] sm:$0xff]
          %v837 = vld [vmem:[%s0 + $0x8] sm:$0xff]
          %838 = vst [vmem:[%s13] sm:$0xff] %v836
          %839 = vst [vmem:[%s13 + $0x8] sm:$0xff] %v837
        $region124: #{transformer_forward.2} parent=71 // pred_fallthru
          _
        %v840 = vld [vmem:[%s13] sm:$0xff]
        %v841 = vld [vmem:[%s13 + $0x8] sm:$0xff]
        %v842 = vpack.c.bf16 %v841, %v840
        %v843 = vld [vmem:[%s651] sm:$0xff]
        %v844 = vld [vmem:[%s651 + $0x8] sm:$0xf]
        %v845 = vld [vmem:[%s651 + $0xc] sm:$0xff]
        %v846 = vld [vmem:[%s651 + $0x14] sm:$0xf]
        %v847 = vld [vmem:[%s651 + $0x18] sm:$0xff]
        %v848 = vld [vmem:[%s651 + $0x20] sm:$0xf]
        %v849 = vld [vmem:[%s651 + $0x24] sm:$0xff]
        %v850 = vld [vmem:[%s651 + $0x2c] sm:$0xf]
        %v851 = vld [vmem:[%s651 + $0x30] sm:$0xff]
        %v852 = vld [vmem:[%s651 + $0x38] sm:$0xf]
        %v853 = vld [vmem:[%s651 + $0x3c] sm:$0xff]
        %v854 = vld [vmem:[%s651 + $0x44] sm:$0xf]
        %v855 = vld [vmem:[%s651 + $0x48] sm:$0xff]
        %v856 = vld [vmem:[%s651 + $0x50] sm:$0xf]
        %v857 = vld [vmem:[%s651 + $0x54] sm:$0xff]
        %v858 = vld [vmem:[%s651 + $0x5c] sm:$0xf]
        %v859 = vld [vmem:[%s651 + $0x60] sm:$0xff]
        %v860 = vld [vmem:[%s651 + $0x68] sm:$0xf]
        %v861 = vld [vmem:[%s651 + $0x6c] sm:$0xff]
        %v862 = vld [vmem:[%s651 + $0x74] sm:$0xf]
        %v863 = vld [vmem:[%s651 + $0x78] sm:$0xff]
        %v864 = vld [vmem:[%s651 + $0x80] sm:$0xf]
        %v865 = vld [vmem:[%s651 + $0x84] sm:$0xff]
        %v866 = vld [vmem:[%s651 + $0x8c] sm:$0xf]
        %v867 = vld [vmem:[%s651 + $0x90] sm:$0xff]
        %v868 = vld [vmem:[%s651 + $0x98] sm:$0xf]
        %v869 = vld [vmem:[%s651 + $0x9c] sm:$0xff]
        %v870 = vld [vmem:[%s651 + $0xa4] sm:$0xf]
        %v871 = vld [vmem:[%s651 + $0xa8] sm:$0xff]
        %v872 = vld [vmem:[%s651 + $0xb0] sm:$0xf]
        %v873 = vld [vmem:[%s651 + $0xb4] sm:$0xff]
        %v874 = vld [vmem:[%s651 + $0xbc] sm:$0xf]
        %v875 = vld [vmem:[%s660] sm:$0x7]
        %v877 = vlaneseq
        %v878 = vshrl.u32 %v877, 7
        %v879 = vsub.s32 0, %v878
        %v880 = vrot.slane %v875, %v879
        %v881 = vlaneseq
        %v882 = vshrl.u32 %v881, 7
        %v883 = vsub.s32 1, %v882
        %v884 = vrot.slane %v875, %v883
        %v885 = vlaneseq
        %v886 = vshrl.u32 %v885, 7
        %v887 = vsub.s32 2, %v886
        %v888 = vrot.slane %v875, %v887
        %v924 = vunpack.c.l.b16 %v843
        %v925 = vunpack.c.h.b16 %v843
        %v926 = vunpack.c.l.b16 %v844
        %v927 = vunpack.c.l.b16 %v845
        %v928 = vunpack.c.h.b16 %v845
        %v929 = vunpack.c.l.b16 %v846
        %v930 = vunpack.c.l.b16 %v847
        %v931 = vunpack.c.h.b16 %v847
        %v932 = vunpack.c.l.b16 %v848
        %v933 = vunpack.c.l.b16 %v849
        %v934 = vunpack.c.h.b16 %v849
        %v935 = vunpack.c.l.b16 %v850
        %v936 = vunpack.c.l.b16 %v851
        %v937 = vunpack.c.h.b16 %v851
        %v938 = vunpack.c.l.b16 %v852
        %v939 = vunpack.c.l.b16 %v853
        %v940 = vunpack.c.h.b16 %v853
        %v941 = vunpack.c.l.b16 %v854
        %v942 = vunpack.c.l.b16 %v855
        %v943 = vunpack.c.h.b16 %v855
        %v944 = vunpack.c.l.b16 %v856
        %v945 = vunpack.c.l.b16 %v857
        %v946 = vunpack.c.h.b16 %v857
        %v947 = vunpack.c.l.b16 %v858
        %v948 = vunpack.c.l.b16 %v859
        %v949 = vunpack.c.h.b16 %v859
        %v950 = vunpack.c.l.b16 %v860
        %v951 = vunpack.c.l.b16 %v861
        %v952 = vunpack.c.h.b16 %v861
        %v953 = vunpack.c.l.b16 %v862
        %v954 = vunpack.c.l.b16 %v863
        %v955 = vunpack.c.h.b16 %v863
        %v956 = vunpack.c.l.b16 %v864
        %v957 = vunpack.c.l.b16 %v865
        %v958 = vunpack.c.h.b16 %v865
        %v959 = vunpack.c.l.b16 %v866
        %v960 = vunpack.c.l.b16 %v867
        %v961 = vunpack.c.h.b16 %v867
        %v962 = vunpack.c.l.b16 %v868
        %v963 = vunpack.c.l.b16 %v869
        %v964 = vunpack.c.h.b16 %v869
        %v965 = vunpack.c.l.b16 %v870
        %v966 = vunpack.c.l.b16 %v871
        %v967 = vunpack.c.h.b16 %v871
        %v968 = vunpack.c.l.b16 %v872
        %v969 = vunpack.c.l.b16 %v873
        %v970 = vunpack.c.h.b16 %v873
        %v971 = vunpack.c.l.b16 %v874
        %v972 = vpack.c.b16 %v927, %v924
        %v973 = vpack.c.b16 %v928, %v925
        %v974 = vpack.c.b16 %v929, %v926
        %v975 = vpack.c.b16 %v933, %v930
        %v976 = vpack.c.b16 %v934, %v931
        %v977 = vpack.c.b16 %v935, %v932
        %v978 = vpack.c.b16 %v939, %v936
        %v979 = vpack.c.b16 %v940, %v937
        %v980 = vpack.c.b16 %v941, %v938
        %v981 = vpack.c.b16 %v945, %v942
        %v982 = vpack.c.b16 %v946, %v943
        %v983 = vpack.c.b16 %v947, %v944
        %v984 = vpack.c.b16 %v951, %v948
        %v985 = vpack.c.b16 %v952, %v949
        %v986 = vpack.c.b16 %v953, %v950
        %v987 = vpack.c.b16 %v957, %v954
        %v988 = vpack.c.b16 %v958, %v955
        %v989 = vpack.c.b16 %v959, %v956
        %v990 = vpack.c.b16 %v963, %v960
        %v991 = vpack.c.b16 %v964, %v961
        %v992 = vpack.c.b16 %v965, %v962
        %v993 = vpack.c.b16 %v969, %v966
        %v994 = vpack.c.b16 %v970, %v967
        %v995 = vpack.c.b16 %v971, %v968
        %1020 = vmatprep.subr.bf16.mxu0 %v973
        %1021 = vmatpush1.bf16.msra.mxu0 %v972
        %1022 = vmatprep.subr.bf16.mxu0 %v976
        %1023 = vmatpush1.bf16.msra.mxu0 %v975
        %1024 = vmatprep.subr.bf16.mxu0 %v979
        %1025 = vmatpush1.bf16.msra.mxu0 %v978
        %1026 = vmatprep.subr.bf16.mxu0 %v982
        %1027 = vmatpush1.bf16.msra.mxu0 %v981
        %1028 = vmatprep.subr.bf16.mxu0 %v985
        %1029 = vmatpush1.bf16.msra.mxu0 %v984
        %1030 = vmatprep.subr.bf16.mxu0 %v988
        %1031 = vmatpush1.bf16.msra.mxu0 %v987
        %1032 = vmatprep.subr.bf16.mxu0 %v991
        %1033 = vmatpush1.bf16.msra.mxu0 %v990
        %1034 = vmatprep.subr.bf16.mxu0 %v994
        %1035 = vmatpush1.bf16.msra.mxu0 %v993
        %1036 = vmatprep.subr.bf16.mxu0 0
        %1037 = vmatpush1.bf16.msra.mxu0 0
        %1038 = vmatprep.subr.bf16.mxu0 0
        %1039 = vmatpush1.bf16.msra.mxu0 0
        %1040 = vmatprep.subr.bf16.mxu0 0
        %1041 = vmatpush1.bf16.msra.mxu0 0
        %1042 = vmatprep.subr.bf16.mxu0 0
        %1043 = vmatpush1.bf16.msra.mxu0 0
        %1044 = vmatprep.subr.bf16.mxu0 0
        %1045 = vmatpush1.bf16.msra.mxu0 0
        %1046 = vmatprep.subr.bf16.mxu0 0
        %1047 = vmatpush1.bf16.msra.mxu0 0
        %1048 = vmatprep.subr.bf16.mxu0 0
        %1049 = vmatpush1.bf16.msra.mxu0 0
        %1050 = vmatprep.subr.bf16.mxu0 0
        %1051 = vmatpush1.bf16.msra.mxu0 0
        %1052 = vmatprep.mubr.bf16.mxu0 0
        %1053 = vmatmul.mubr.bf16.gmra.mrb[0].mxu0 %v842
        %v1054 = vpop.f32.mrb[0].mxu0
        %v1055 = vadd.f32 %v880, %v1054
        %v1056 = vpop.f32.mrb[0].mxu0
        %v1057 = vadd.f32 %v884, %v1056
        %v1058 = vpop.f32.mrb[0].mxu0
        %v1059 = vadd.f32 %v880, %v1058
        %v1060 = vpop.f32.mrb[0].mxu0
        %v1061 = vadd.f32 %v884, %v1060
        %1062 = vdwg.mxu0
        %1063 = vmatprep.subr.bf16.mxu0 0
        %1064 = vmatpush1.bf16.msra.mxu0 %v974
        %1065 = vmatprep.subr.bf16.mxu0 0
        %1066 = vmatpush1.bf16.msra.mxu0 %v977
        %1067 = vmatprep.subr.bf16.mxu0 0
        %1068 = vmatpush1.bf16.msra.mxu0 %v980
        %1069 = vmatprep.subr.bf16.mxu0 0
        %1070 = vmatpush1.bf16.msra.mxu0 %v983
        %1071 = vmatprep.subr.bf16.mxu0 0
        %1072 = vmatpush1.bf16.msra.mxu0 %v986
        %1073 = vmatprep.subr.bf16.mxu0 0
        %1074 = vmatpush1.bf16.msra.mxu0 %v989
        %1075 = vmatprep.subr.bf16.mxu0 0
        %1076 = vmatpush1.bf16.msra.mxu0 %v992
        %1077 = vmatprep.subr.bf16.mxu0 0
        %1078 = vmatpush1.bf16.msra.mxu0 %v995
        %1079 = vmatprep.subr.bf16.mxu0 0
        %1080 = vmatpush1.bf16.msra.mxu0 0
        %1081 = vmatprep.subr.bf16.mxu0 0
        %1082 = vmatpush1.bf16.msra.mxu0 0
        %1083 = vmatprep.subr.bf16.mxu0 0
        %1084 = vmatpush1.bf16.msra.mxu0 0
        %1085 = vmatprep.subr.bf16.mxu0 0
        %1086 = vmatpush1.bf16.msra.mxu0 0
        %1087 = vmatprep.subr.bf16.mxu0 0
        %1088 = vmatpush1.bf16.msra.mxu0 0
        %1089 = vmatprep.subr.bf16.mxu0 0
        %1090 = vmatpush1.bf16.msra.mxu0 0
        %1091 = vmatprep.subr.bf16.mxu0 0
        %1092 = vmatpush1.bf16.msra.mxu0 0
        %1093 = vmatprep.subr.bf16.mxu0 0
        %1094 = vmatpush1.bf16.msra.mxu0 0
        %1095 = vmatprep.mubr.bf16.mxu0 0
        %1096 = vmatmul.mubr.bf16.gmra.mrb[0].mxu0 %v842
        %v1097 = vpop.f32.mrb[0].mxu0
        %v1098 = vadd.f32 %v888, %v1097
        %v1099 = vpop.f32.mrb[0].mxu0
        %v1100 = vpop.f32.mrb[0].mxu0
        %v1101 = vadd.f32 %v888, %v1100
        %v1102 = vpop.f32.mrb[0].mxu0
        %1103 = vdwg.mxu0
        %v1104 = vpack.c.bf16 %v1055, %v1055
        %v1105 = vpack.c.bf16 %v1059, %v1059
        %v1106 = vpack.c.bf16 %v1057, %v1057
        %v1107 = vpack.c.bf16 %v1061, %v1061
        %v1108 = vpack.c.bf16 %v1098, %v1098
        %v1109 = vpack.c.bf16 %v1101, %v1101
        %vm1110 = vcmask 130048
        %v1112 = vsel %vm1110, %v1104, 0
        %v1115 = vsel %vm1110, %v1106, 0
        %1117 = vmatprep.subr.bf16.mxu0 0
        %1118 = vmatpush1.bf16.xpose.msra.mxu0 %v1115
        %1119 = vmatprep.subr.bf16.mxu0 0
        %1120 = vmatpush1.bf16.xpose.msra.mxu0 0
        %1121 = vmatprep.subr.bf16.mxu0 0
        %1122 = vmatpush1.bf16.xpose.msra.mxu0 0
        %1123 = vmatprep.subr.bf16.mxu0 0
        %1124 = vmatpush1.bf16.xpose.msra.mxu0 0
        %1125 = vmatprep.subr.bf16.mxu0 0
        %1126 = vmatpush1.bf16.xpose.msra.mxu0 0
        %1127 = vmatprep.subr.bf16.mxu0 0
        %1128 = vmatpush1.bf16.xpose.msra.mxu0 0
        %1129 = vmatprep.subr.bf16.mxu0 0
        %1130 = vmatpush1.bf16.xpose.msra.mxu0 0
        %1131 = vmatprep.subr.bf16.mxu0 0
        %1132 = vmatpush1.bf16.xpose.msra.mxu0 0
        %1133 = vmatprep.subr.bf16.mxu0 0
        %1134 = vmatpush1.bf16.xpose.msra.mxu0 0
        %1135 = vmatprep.subr.bf16.mxu0 0
        %1136 = vmatpush1.bf16.xpose.msra.mxu0 0
        %1137 = vmatprep.subr.bf16.mxu0 0
        %1138 = vmatpush1.bf16.xpose.msra.mxu0 0
        %1139 = vmatprep.subr.bf16.mxu0 0
        %1140 = vmatpush1.bf16.xpose.msra.mxu0 0
        %1141 = vmatprep.subr.bf16.mxu0 0
        %1142 = vmatpush1.bf16.xpose.msra.mxu0 0
        %1143 = vmatprep.subr.bf16.mxu0 0
        %1144 = vmatpush1.bf16.xpose.msra.mxu0 0
        %1145 = vmatprep.subr.bf16.mxu0 0
        %1146 = vmatpush1.bf16.xpose.msra.mxu0 0
        %1147 = vmatprep.subr.bf16.mxu0 0
        %1148 = vmatpush1.bf16.xpose.msra.mxu0 0
        %1149 = vmatprep.mubr.bf16.mxu0 0
        %1150 = vmatmul.mubr.bf16.gmra.mrb[0].mxu0 %v1112
        %v1151 = vpop.f32.mrb[0].mxu0
        %v1152 = vadd.f32 0.0, %v1151
        %v1153 = vpop.f32.mrb[0].mxu0
        %v1154 = vpop.f32.mrb[0].mxu0
        %v1155 = vpop.f32.mrb[0].mxu0
        %1156 = vdwg.mxu0
        %v1158 = vsel %vm1110, %v1105, 0
        %v1161 = vsel %vm1110, %v1107, 0
        %1163 = vmatprep.subr.bf16.mxu0 0
        %1164 = vmatpush1.bf16.xpose.msra.mxu0 %v1161
        %1165 = vmatprep.subr.bf16.mxu0 0
        %1166 = vmatpush1.bf16.xpose.msra.mxu0 0
        %1167 = vmatprep.subr.bf16.mxu0 0
        %1168 = vmatpush1.bf16.xpose.msra.mxu0 0
        %1169 = vmatprep.subr.bf16.mxu0 0
        %1170 = vmatpush1.bf16.xpose.msra.mxu0 0
        %1171 = vmatprep.subr.bf16.mxu0 0
        %1172 = vmatpush1.bf16.xpose.msra.mxu0 0
        %1173 = vmatprep.subr.bf16.mxu0 0
        %1174 = vmatpush1.bf16.xpose.msra.mxu0 0
        %1175 = vmatprep.subr.bf16.mxu0 0
        %1176 = vmatpush1.bf16.xpose.msra.mxu0 0
        %1177 = vmatprep.subr.bf16.mxu0 0
        %1178 = vmatpush1.bf16.xpose.msra.mxu0 0
        %1179 = vmatprep.subr.bf16.mxu0 0
        %1180 = vmatpush1.bf16.xpose.msra.mxu0 0
        %1181 = vmatprep.subr.bf16.mxu0 0
        %1182 = vmatpush1.bf16.xpose.msra.mxu0 0
        %1183 = vmatprep.subr.bf16.mxu0 0
        %1184 = vmatpush1.bf16.xpose.msra.mxu0 0
        %1185 = vmatprep.subr.bf16.mxu0 0
        %1186 = vmatpush1.bf16.xpose.msra.mxu0 0
        %1187 = vmatprep.subr.bf16.mxu0 0
        %1188 = vmatpush1.bf16.xpose.msra.mxu0 0
        %1189 = vmatprep.subr.bf16.mxu0 0
        %1190 = vmatpush1.bf16.xpose.msra.mxu0 0
        %1191 = vmatprep.subr.bf16.mxu0 0
        %1192 = vmatpush1.bf16.xpose.msra.mxu0 0
        %1193 = vmatprep.subr.bf16.mxu0 0
        %1194 = vmatpush1.bf16.xpose.msra.mxu0 0
        %1195 = vmatprep.mubr.bf16.mxu0 0
        %1196 = vmatmul.mubr.bf16.gmra.mrb[0].mxu0 %v1158
        %v1197 = vpop.f32.mrb[0].mxu0
        %v1198 = vadd.f32 0.0, %v1197
        %v1199 = vpop.f32.mrb[0].mxu0
        %v1200 = vpop.f32.mrb[0].mxu0
        %v1201 = vpop.f32.mrb[0].mxu0
        %1202 = vdwg.mxu0
        %vm1203 = vcmask 64512
        %v1204 = vsel %vm1203, %v1152, -inf
        %1205 = vmax.xlane.f32.xlu0 %v1204
        %v1206 = vpop.xlane.xlu0 %1205
        %v1207 = vsel %vm1203, %v1198, -inf
        %1208 = vmax.xlane.f32.xlu0 %v1207
        %v1209 = vpop.xlane.xlu0 %1208
        %v1210 = vsub.f32 %v1152, %v1206
        %v1211 = vsub.f32 %v1198, %v1209
        %v1212 = vmul.f32 %v1210, 1.442695
        %v1213 = vpow.pop %v1212
        %v1214 = vmul.f32 %v1211, 1.442695
        %v1215 = vpow.pop %v1214
        %v1216 = vsel %vm1203, %v1213, 0.0
        %1217 = vadd.xlane.f32.xlu0 %v1216
        %v1218 = vpop.xlane.xlu0 %1217
        %v1219 = vsel %vm1203, %v1215, 0.0
        %1220 = vadd.xlane.f32.xlu0 %v1219
        %v1221 = vpop.xlane.xlu0 %1220
        %v1222 = vrcp.pop %v1218
        %v1223 = vrcp.pop %v1221
        %v1224 = vmul.f32 %v1213, %v1222
        %v1225 = vmul.f32 %v1215, %v1223
        %v1226 = vpack.c.bf16 %v1224, %v1224
        %v1227 = vpack.c.bf16 %v1225, %v1225
        %v1229 = vsel %vm1203, %v1226, 0
        %vm1231 = vcmask 1043456
        %v1233 = vsel %vm1231, %v1108, 0
        %1235 = vmatprep.subr.bf16.mxu0 0
        %1236 = vmatpush1.bf16.msra.mxu0 %v1233
        %1237 = vmatprep.subr.bf16.mxu0 0
        %1238 = vmatpush1.bf16.msra.mxu0 0
        %1239 = vmatprep.subr.bf16.mxu0 0
        %1240 = vmatpush1.bf16.msra.mxu0 0
        %1241 = vmatprep.subr.bf16.mxu0 0
        %1242 = vmatpush1.bf16.msra.mxu0 0
        %1243 = vmatprep.subr.bf16.mxu0 0
        %1244 = vmatpush1.bf16.msra.mxu0 0
        %1245 = vmatprep.subr.bf16.mxu0 0
        %1246 = vmatpush1.bf16.msra.mxu0 0
        %1247 = vmatprep.subr.bf16.mxu0 0
        %1248 = vmatpush1.bf16.msra.mxu0 0
        %1249 = vmatprep.subr.bf16.mxu0 0
        %1250 = vmatpush1.bf16.msra.mxu0 0
        %1251 = vmatprep.subr.bf16.mxu0 0
        %1252 = vmatpush1.bf16.msra.mxu0 0
        %1253 = vmatprep.subr.bf16.mxu0 0
        %1254 = vmatpush1.bf16.msra.mxu0 0
        %1255 = vmatprep.subr.bf16.mxu0 0
        %1256 = vmatpush1.bf16.msra.mxu0 0
        %1257 = vmatprep.subr.bf16.mxu0 0
        %1258 = vmatpush1.bf16.msra.mxu0 0
        %1259 = vmatprep.subr.bf16.mxu0 0
        %1260 = vmatpush1.bf16.msra.mxu0 0
        %1261 = vmatprep.subr.bf16.mxu0 0
        %1262 = vmatpush1.bf16.msra.mxu0 0
        %1263 = vmatprep.subr.bf16.mxu0 0
        %1264 = vmatpush1.bf16.msra.mxu0 0
        %1265 = vmatprep.subr.bf16.mxu0 0
        %1266 = vmatpush1.bf16.msra.mxu0 0
        %1267 = vmatprep.mubr.bf16.mxu0 0
        %1268 = vmatmul.mubr.bf16.gmra.mrb[0].mxu0 %v1229
        %v1269 = vpop.f32.mrb[0].mxu0
        %v1270 = vadd.f32 0.0, %v1269
        %v1271 = vpop.f32.mrb[0].mxu0
        %v1272 = vpop.f32.mrb[0].mxu0
        %v1273 = vpop.f32.mrb[0].mxu0
        %1274 = vdwg.mxu0
        %v1276 = vsel %vm1203, %v1227, 0
        %v1279 = vsel %vm1231, %v1109, 0
        %1281 = vmatprep.subr.bf16.mxu0 0
        %1282 = vmatpush1.bf16.msra.mxu0 %v1279
        %1283 = vmatprep.subr.bf16.mxu0 0
        %1284 = vmatpush1.bf16.msra.mxu0 0
        %1285 = vmatprep.subr.bf16.mxu0 0
        %1286 = vmatpush1.bf16.msra.mxu0 0
        %1287 = vmatprep.subr.bf16.mxu0 0
        %1288 = vmatpush1.bf16.msra.mxu0 0
        %1289 = vmatprep.subr.bf16.mxu0 0
        %1290 = vmatpush1.bf16.msra.mxu0 0
        %1291 = vmatprep.subr.bf16.mxu0 0
        %1292 = vmatpush1.bf16.msra.mxu0 0
        %1293 = vmatprep.subr.bf16.mxu0 0
        %1294 = vmatpush1.bf16.msra.mxu0 0
        %1295 = vmatprep.subr.bf16.mxu0 0
        %1296 = vmatpush1.bf16.msra.mxu0 0
        %1297 = vmatprep.subr.bf16.mxu0 0
        %1298 = vmatpush1.bf16.msra.mxu0 0
        %1299 = vmatprep.subr.bf16.mxu0 0
        %1300 = vmatpush1.bf16.msra.mxu0 0
        %1301 = vmatprep.subr.bf16.mxu0 0
        %1302 = vmatpush1.bf16.msra.mxu0 0
        %1303 = vmatprep.subr.bf16.mxu0 0
        %1304 = vmatpush1.bf16.msra.mxu0 0
        %1305 = vmatprep.subr.bf16.mxu0 0
        %1306 = vmatpush1.bf16.msra.mxu0 0
        %1307 = vmatprep.subr.bf16.mxu0 0
        %1308 = vmatpush1.bf16.msra.mxu0 0
        %1309 = vmatprep.subr.bf16.mxu0 0
        %1310 = vmatpush1.bf16.msra.mxu0 0
        %1311 = vmatprep.subr.bf16.mxu0 0
        %1312 = vmatpush1.bf16.msra.mxu0 0
        %1313 = vmatprep.mubr.bf16.mxu0 0
        %1314 = vmatmul.mubr.bf16.gmra.mrb[0].mxu0 %v1276
        %v1315 = vpop.f32.mrb[0].mxu0
        %v1316 = vadd.f32 0.0, %v1315
        %v1317 = vpop.f32.mrb[0].mxu0
        %v1318 = vpop.f32.mrb[0].mxu0
        %v1319 = vpop.f32.mrb[0].mxu0
        %1320 = vdwg.mxu0
        %1322 = vrot.lane.b32.xlu0 %v1104, 112
        %v1323 = vpop.permute.xlu0 %1322
        %1325 = vrot.lane.b32.xlu0 %v1106, 112
        %v1326 = vpop.permute.xlu0 %1325
        %v1328 = vsel %vm1110, %v1323, 0
        %v1331 = vsel %vm1110, %v1326, 0
        %1333 = vmatprep.subr.bf16.mxu0 0
        %1334 = vmatpush1.bf16.xpose.msra.mxu0 %v1331
        %1335 = vmatprep.subr.bf16.mxu0 0
        %1336 = vmatpush1.bf16.xpose.msra.mxu0 0
        %1337 = vmatprep.subr.bf16.mxu0 0
        %1338 = vmatpush1.bf16.xpose.msra.mxu0 0
        %1339 = vmatprep.subr.bf16.mxu0 0
        %1340 = vmatpush1.bf16.xpose.msra.mxu0 0
        %1341 = vmatprep.subr.bf16.mxu0 0
        %1342 = vmatpush1.bf16.xpose.msra.mxu0 0
        %1343 = vmatprep.subr.bf16.mxu0 0
        %1344 = vmatpush1.bf16.xpose.msra.mxu0 0
        %1345 = vmatprep.subr.bf16.mxu0 0
        %1346 = vmatpush1.bf16.xpose.msra.mxu0 0
        %1347 = vmatprep.subr.bf16.mxu0 0
        %1348 = vmatpush1.bf16.xpose.msra.mxu0 0
        %1349 = vmatprep.subr.bf16.mxu0 0
        %1350 = vmatpush1.bf16.xpose.msra.mxu0 0
        %1351 = vmatprep.subr.bf16.mxu0 0
        %1352 = vmatpush1.bf16.xpose.msra.mxu0 0
        %1353 = vmatprep.subr.bf16.mxu0 0
        %1354 = vmatpush1.bf16.xpose.msra.mxu0 0
        %1355 = vmatprep.subr.bf16.mxu0 0
        %1356 = vmatpush1.bf16.xpose.msra.mxu0 0
        %1357 = vmatprep.subr.bf16.mxu0 0
        %1358 = vmatpush1.bf16.xpose.msra.mxu0 0
        %1359 = vmatprep.subr.bf16.mxu0 0
        %1360 = vmatpush1.bf16.xpose.msra.mxu0 0
        %1361 = vmatprep.subr.bf16.mxu0 0
        %1362 = vmatpush1.bf16.xpose.msra.mxu0 0
        %1363 = vmatprep.subr.bf16.mxu0 0
        %1364 = vmatpush1.bf16.xpose.msra.mxu0 0
        %1365 = vmatprep.mubr.bf16.mxu0 0
        %1366 = vmatmul.mubr.bf16.gmra.mrb[0].mxu0 %v1328
        %v1367 = vpop.f32.mrb[0].mxu0
        %v1368 = vadd.f32 0.0, %v1367
        %v1369 = vpop.f32.mrb[0].mxu0
        %v1370 = vpop.f32.mrb[0].mxu0
        %v1371 = vpop.f32.mrb[0].mxu0
        %1372 = vdwg.mxu0
        %1374 = vrot.lane.b32.xlu0 %v1105, 112
        %v1375 = vpop.permute.xlu0 %1374
        %1377 = vrot.lane.b32.xlu0 %v1107, 112
        %v1378 = vpop.permute.xlu0 %1377
        %v1380 = vsel %vm1110, %v1375, 0
        %v1383 = vsel %vm1110, %v1378, 0
        %1385 = vmatprep.subr.bf16.mxu0 0
        %1386 = vmatpush1.bf16.xpose.msra.mxu0 %v1383
        %1387 = vmatprep.subr.bf16.mxu0 0
        %1388 = vmatpush1.bf16.xpose.msra.mxu0 0
        %1389 = vmatprep.subr.bf16.mxu0 0
        %1390 = vmatpush1.bf16.xpose.msra.mxu0 0
        %1391 = vmatprep.subr.bf16.mxu0 0
        %1392 = vmatpush1.bf16.xpose.msra.mxu0 0
        %1393 = vmatprep.subr.bf16.mxu0 0
        %1394 = vmatpush1.bf16.xpose.msra.mxu0 0
        %1395 = vmatprep.subr.bf16.mxu0 0
        %1396 = vmatpush1.bf16.xpose.msra.mxu0 0
        %1397 = vmatprep.subr.bf16.mxu0 0
        %1398 = vmatpush1.bf16.xpose.msra.mxu0 0
        %1399 = vmatprep.subr.bf16.mxu0 0
        %1400 = vmatpush1.bf16.xpose.msra.mxu0 0
        %1401 = vmatprep.subr.bf16.mxu0 0
        %1402 = vmatpush1.bf16.xpose.msra.mxu0 0
        %1403 = vmatprep.subr.bf16.mxu0 0
        %1404 = vmatpush1.bf16.xpose.msra.mxu0 0
        %1405 = vmatprep.subr.bf16.mxu0 0
        %1406 = vmatpush1.bf16.xpose.msra.mxu0 0
        %1407 = vmatprep.subr.bf16.mxu0 0
        %1408 = vmatpush1.bf16.xpose.msra.mxu0 0
        %1409 = vmatprep.subr.bf16.mxu0 0
        %1410 = vmatpush1.bf16.xpose.msra.mxu0 0
        %1411 = vmatprep.subr.bf16.mxu0 0
        %1412 = vmatpush1.bf16.xpose.msra.mxu0 0
        %1413 = vmatprep.subr.bf16.mxu0 0
        %1414 = vmatpush1.bf16.xpose.msra.mxu0 0
        %1415 = vmatprep.subr.bf16.mxu0 0
        %1416 = vmatpush1.bf16.xpose.msra.mxu0 0
        %1417 = vmatprep.mubr.bf16.mxu0 0
        %1418 = vmatmul.mubr.bf16.gmra.mrb[0].mxu0 %v1380
        %v1419 = vpop.f32.mrb[0].mxu0
        %v1420 = vadd.f32 0.0, %v1419
        %v1421 = vpop.f32.mrb[0].mxu0
        %v1422 = vpop.f32.mrb[0].mxu0
        %v1423 = vpop.f32.mrb[0].mxu0
        %1424 = vdwg.mxu0
        %v1425 = vsel %vm1203, %v1368, -inf
        %1426 = vmax.xlane.f32.xlu0 %v1425
        %v1427 = vpop.xlane.xlu0 %1426
        %v1428 = vsel %vm1203, %v1420, -inf
        %1429 = vmax.xlane.f32.xlu0 %v1428
        %v1430 = vpop.xlane.xlu0 %1429
        %v1431 = vsub.f32 %v1368, %v1427
        %v1432 = vsub.f32 %v1420, %v1430
        %v1433 = vmul.f32 %v1431, 1.442695
        %v1434 = vpow.pop %v1433
        %v1435 = vmul.f32 %v1432, 1.442695
        %v1436 = vpow.pop %v1435
        %v1437 = vsel %vm1203, %v1434, 0.0
        %1438 = vadd.xlane.f32.xlu0 %v1437
        %v1439 = vpop.xlane.xlu0 %1438
        %v1440 = vsel %vm1203, %v1436, 0.0
        %1441 = vadd.xlane.f32.xlu0 %v1440
        %v1442 = vpop.xlane.xlu0 %1441
        %v1443 = vrcp.pop %v1439
        %v1444 = vrcp.pop %v1442
        %v1445 = vmul.f32 %v1434, %v1443
        %v1446 = vmul.f32 %v1436, %v1444
        %v1447 = vpack.c.bf16 %v1445, %v1445
        %v1448 = vpack.c.bf16 %v1446, %v1446
        %1450 = vrot.lane.b32.xlu0 %v1108, 112
        %v1451 = vpop.permute.xlu0 %1450
        %v1453 = vsel %vm1203, %v1447, 0
        %v1456 = vsel %vm1231, %v1451, 0
        %1458 = vmatprep.subr.bf16.mxu0 0
        %1459 = vmatpush1.bf16.msra.mxu0 %v1456
        %1460 = vmatprep.subr.bf16.mxu0 0
        %1461 = vmatpush1.bf16.msra.mxu0 0
        %1462 = vmatprep.subr.bf16.mxu0 0
        %1463 = vmatpush1.bf16.msra.mxu0 0
        %1464 = vmatprep.subr.bf16.mxu0 0
        %1465 = vmatpush1.bf16.msra.mxu0 0
        %1466 = vmatprep.subr.bf16.mxu0 0
        %1467 = vmatpush1.bf16.msra.mxu0 0
        %1468 = vmatprep.subr.bf16.mxu0 0
        %1469 = vmatpush1.bf16.msra.mxu0 0
        %1470 = vmatprep.subr.bf16.mxu0 0
        %1471 = vmatpush1.bf16.msra.mxu0 0
        %1472 = vmatprep.subr.bf16.mxu0 0
        %1473 = vmatpush1.bf16.msra.mxu0 0
        %1474 = vmatprep.subr.bf16.mxu0 0
        %1475 = vmatpush1.bf16.msra.mxu0 0
        %1476 = vmatprep.subr.bf16.mxu0 0
        %1477 = vmatpush1.bf16.msra.mxu0 0
        %1478 = vmatprep.subr.bf16.mxu0 0
        %1479 = vmatpush1.bf16.msra.mxu0 0
        %1480 = vmatprep.subr.bf16.mxu0 0
        %1481 = vmatpush1.bf16.msra.mxu0 0
        %1482 = vmatprep.subr.bf16.mxu0 0
        %1483 = vmatpush1.bf16.msra.mxu0 0
        %1484 = vmatprep.subr.bf16.mxu0 0
        %1485 = vmatpush1.bf16.msra.mxu0 0
        %1486 = vmatprep.subr.bf16.mxu0 0
        %1487 = vmatpush1.bf16.msra.mxu0 0
        %1488 = vmatprep.subr.bf16.mxu0 0
        %1489 = vmatpush1.bf16.msra.mxu0 0
        %1490 = vmatprep.mubr.bf16.mxu0 0
        %1491 = vmatmul.mubr.bf16.gmra.mrb[0].mxu0 %v1453
        %v1492 = vpop.f32.mrb[0].mxu0
        %v1493 = vadd.f32 0.0, %v1492
        %v1494 = vpop.f32.mrb[0].mxu0
        %v1495 = vpop.f32.mrb[0].mxu0
        %v1496 = vpop.f32.mrb[0].mxu0
        %1497 = vdwg.mxu0
        %1499 = vrot.lane.b32.xlu0 %v1109, 112
        %v1500 = vpop.permute.xlu0 %1499
        %v1502 = vsel %vm1203, %v1448, 0
        %v1505 = vsel %vm1231, %v1500, 0
        %1507 = vmatprep.subr.bf16.mxu0 0
        %1508 = vmatpush1.bf16.msra.mxu0 %v1505
        %1509 = vmatprep.subr.bf16.mxu0 0
        %1510 = vmatpush1.bf16.msra.mxu0 0
        %1511 = vmatprep.subr.bf16.mxu0 0
        %1512 = vmatpush1.bf16.msra.mxu0 0
        %1513 = vmatprep.subr.bf16.mxu0 0
        %1514 = vmatpush1.bf16.msra.mxu0 0
        %1515 = vmatprep.subr.bf16.mxu0 0
        %1516 = vmatpush1.bf16.msra.mxu0 0
        %1517 = vmatprep.subr.bf16.mxu0 0
        %1518 = vmatpush1.bf16.msra.mxu0 0
        %1519 = vmatprep.subr.bf16.mxu0 0
        %1520 = vmatpush1.bf16.msra.mxu0 0
        %1521 = vmatprep.subr.bf16.mxu0 0
        %1522 = vmatpush1.bf16.msra.mxu0 0
        %1523 = vmatprep.subr.bf16.mxu0 0
        %1524 = vmatpush1.bf16.msra.mxu0 0
        %1525 = vmatprep.subr.bf16.mxu0 0
        %1526 = vmatpush1.bf16.msra.mxu0 0
        %1527 = vmatprep.subr.bf16.mxu0 0
        %1528 = vmatpush1.bf16.msra.mxu0 0
        %1529 = vmatprep.subr.bf16.mxu0 0
        %1530 = vmatpush1.bf16.msra.mxu0 0
        %1531 = vmatprep.subr.bf16.mxu0 0
        %1532 = vmatpush1.bf16.msra.mxu0 0
        %1533 = vmatprep.subr.bf16.mxu0 0
        %1534 = vmatpush1.bf16.msra.mxu0 0
        %1535 = vmatprep.subr.bf16.mxu0 0
        %1536 = vmatpush1.bf16.msra.mxu0 0
        %1537 = vmatprep.subr.bf16.mxu0 0
        %1538 = vmatpush1.bf16.msra.mxu0 0
        %1539 = vmatprep.mubr.bf16.mxu0 0
        %1540 = vmatmul.mubr.bf16.gmra.mrb[0].mxu0 %v1502
        %v1541 = vpop.f32.mrb[0].mxu0
        %v1542 = vadd.f32 0.0, %v1541
        %v1543 = vpop.f32.mrb[0].mxu0
        %v1544 = vpop.f32.mrb[0].mxu0
        %v1545 = vpop.f32.mrb[0].mxu0
        %1546 = vdwg.mxu0
        %1547 = vrot.lane.b32.xlu0 %v1104, 96
        %v1548 = vpop.permute.xlu0 %1547
        %1549 = vrot.lane.b32.xlu0 %v1106, 96
        %v1550 = vpop.permute.xlu0 %1549
        %v1552 = vsel %vm1110, %v1548, 0
        %v1555 = vsel %vm1110, %v1550, 0
        %1557 = vmatprep.subr.bf16.mxu0 0
        %1558 = vmatpush1.bf16.xpose.msra.mxu0 %v1555
        %1559 = vmatprep.subr.bf16.mxu0 0
        %1560 = vmatpush1.bf16.xpose.msra.mxu0 0
        %1561 = vmatprep.subr.bf16.mxu0 0
        %1562 = vmatpush1.bf16.xpose.msra.mxu0 0
        %1563 = vmatprep.subr.bf16.mxu0 0
        %1564 = vmatpush1.bf16.xpose.msra.mxu0 0
        %1565 = vmatprep.subr.bf16.mxu0 0
        %1566 = vmatpush1.bf16.xpose.msra.mxu0 0
        %1567 = vmatprep.subr.bf16.mxu0 0
        %1568 = vmatpush1.bf16.xpose.msra.mxu0 0
        %1569 = vmatprep.subr.bf16.mxu0 0
        %1570 = vmatpush1.bf16.xpose.msra.mxu0 0
        %1571 = vmatprep.subr.bf16.mxu0 0
        %1572 = vmatpush1.bf16.xpose.msra.mxu0 0
        %1573 = vmatprep.subr.bf16.mxu0 0
        %1574 = vmatpush1.bf16.xpose.msra.mxu0 0
        %1575 = vmatprep.subr.bf16.mxu0 0
        %1576 = vmatpush1.bf16.xpose.msra.mxu0 0
        %1577 = vmatprep.subr.bf16.mxu0 0
        %1578 = vmatpush1.bf16.xpose.msra.mxu0 0
        %1579 = vmatprep.subr.bf16.mxu0 0
        %1580 = vmatpush1.bf16.xpose.msra.mxu0 0
        %1581 = vmatprep.subr.bf16.mxu0 0
        %1582 = vmatpush1.bf16.xpose.msra.mxu0 0
        %1583 = vmatprep.subr.bf16.mxu0 0
        %1584 = vmatpush1.bf16.xpose.msra.mxu0 0
        %1585 = vmatprep.subr.bf16.mxu0 0
        %1586 = vmatpush1.bf16.xpose.msra.mxu0 0
        %1587 = vmatprep.subr.bf16.mxu0 0
        %1588 = vmatpush1.bf16.xpose.msra.mxu0 0
        %1589 = vmatprep.mubr.bf16.mxu0 0
        %1590 = vmatmul.mubr.bf16.gmra.mrb[0].mxu0 %v1552
        %v1591 = vpop.f32.mrb[0].mxu0
        %v1592 = vadd.f32 0.0, %v1591
        %v1593 = vpop.f32.mrb[0].mxu0
        %v1594 = vpop.f32.mrb[0].mxu0
        %v1595 = vpop.f32.mrb[0].mxu0
        %1596 = vdwg.mxu0
        %1597 = vrot.lane.b32.xlu0 %v1105, 96
        %v1598 = vpop.permute.xlu0 %1597
        %1599 = vrot.lane.b32.xlu0 %v1107, 96
        %v1600 = vpop.permute.xlu0 %1599
        %v1602 = vsel %vm1110, %v1598, 0
        %v1605 = vsel %vm1110, %v1600, 0
        %1607 = vmatprep.subr.bf16.mxu0 0
        %1608 = vmatpush1.bf16.xpose.msra.mxu0 %v1605
        %1609 = vmatprep.subr.bf16.mxu0 0
        %1610 = vmatpush1.bf16.xpose.msra.mxu0 0
        %1611 = vmatprep.subr.bf16.mxu0 0
        %1612 = vmatpush1.bf16.xpose.msra.mxu0 0
        %1613 = vmatprep.subr.bf16.mxu0 0
        %1614 = vmatpush1.bf16.xpose.msra.mxu0 0
        %1615 = vmatprep.subr.bf16.mxu0 0
        %1616 = vmatpush1.bf16.xpose.msra.mxu0 0
        %1617 = vmatprep.subr.bf16.mxu0 0
        %1618 = vmatpush1.bf16.xpose.msra.mxu0 0
        %1619 = vmatprep.subr.bf16.mxu0 0
        %1620 = vmatpush1.bf16.xpose.msra.mxu0 0
        %1621 = vmatprep.subr.bf16.mxu0 0
        %1622 = vmatpush1.bf16.xpose.msra.mxu0 0
        %1623 = vmatprep.subr.bf16.mxu0 0
        %1624 = vmatpush1.bf16.xpose.msra.mxu0 0
        %1625 = vmatprep.subr.bf16.mxu0 0
        %1626 = vmatpush1.bf16.xpose.msra.mxu0 0
        %1627 = vmatprep.subr.bf16.mxu0 0
        %1628 = vmatpush1.bf16.xpose.msra.mxu0 0
        %1629 = vmatprep.subr.bf16.mxu0 0
        %1630 = vmatpush1.bf16.xpose.msra.mxu0 0
        %1631 = vmatprep.subr.bf16.mxu0 0
        %1632 = vmatpush1.bf16.xpose.msra.mxu0 0
        %1633 = vmatprep.subr.bf16.mxu0 0
        %1634 = vmatpush1.bf16.xpose.msra.mxu0 0
        %1635 = vmatprep.subr.bf16.mxu0 0
        %1636 = vmatpush1.bf16.xpose.msra.mxu0 0
        %1637 = vmatprep.subr.bf16.mxu0 0
        %1638 = vmatpush1.bf16.xpose.msra.mxu0 0
        %1639 = vmatprep.mubr.bf16.mxu0 0
        %1640 = vmatmul.mubr.bf16.gmra.mrb[0].mxu0 %v1602
        %v1641 = vpop.f32.mrb[0].mxu0
        %v1642 = vadd.f32 0.0, %v1641
        %v1643 = vpop.f32.mrb[0].mxu0
        %v1644 = vpop.f32.mrb[0].mxu0
        %v1645 = vpop.f32.mrb[0].mxu0
        %1646 = vdwg.mxu0
        %v1647 = vsel %vm1203, %v1592, -inf
        %1648 = vmax.xlane.f32.xlu0 %v1647
        %v1649 = vpop.xlane.xlu0 %1648
        %v1650 = vsel %vm1203, %v1642, -inf
        %1651 = vmax.xlane.f32.xlu0 %v1650
        %v1652 = vpop.xlane.xlu0 %1651
        %v1653 = vsub.f32 %v1592, %v1649
        %v1654 = vsub.f32 %v1642, %v1652
        %v1655 = vmul.f32 %v1653, 1.442695
        %v1656 = vpow.pop %v1655
        %v1657 = vmul.f32 %v1654, 1.442695
        %v1658 = vpow.pop %v1657
        %v1659 = vsel %vm1203, %v1656, 0.0
        %1660 = vadd.xlane.f32.xlu0 %v1659
        %v1661 = vpop.xlane.xlu0 %1660
        %v1662 = vsel %vm1203, %v1658, 0.0
        %1663 = vadd.xlane.f32.xlu0 %v1662
        %v1664 = vpop.xlane.xlu0 %1663
        %v1665 = vrcp.pop %v1661
        %v1666 = vrcp.pop %v1664
        %v1667 = vmul.f32 %v1656, %v1665
        %v1668 = vmul.f32 %v1658, %v1666
        %v1669 = vpack.c.bf16 %v1667, %v1667
        %v1670 = vpack.c.bf16 %v1668, %v1668
        %1671 = vrot.lane.b32.xlu0 %v1108, 96
        %v1672 = vpop.permute.xlu0 %1671
        %v1674 = vsel %vm1203, %v1669, 0
        %v1677 = vsel %vm1231, %v1672, 0
        %1679 = vmatprep.subr.bf16.mxu0 0
        %1680 = vmatpush1.bf16.msra.mxu0 %v1677
        %1681 = vmatprep.subr.bf16.mxu0 0
        %1682 = vmatpush1.bf16.msra.mxu0 0
        %1683 = vmatprep.subr.bf16.mxu0 0
        %1684 = vmatpush1.bf16.msra.mxu0 0
        %1685 = vmatprep.subr.bf16.mxu0 0
        %1686 = vmatpush1.bf16.msra.mxu0 0
        %1687 = vmatprep.subr.bf16.mxu0 0
        %1688 = vmatpush1.bf16.msra.mxu0 0
        %1689 = vmatprep.subr.bf16.mxu0 0
        %1690 = vmatpush1.bf16.msra.mxu0 0
        %1691 = vmatprep.subr.bf16.mxu0 0
        %1692 = vmatpush1.bf16.msra.mxu0 0
        %1693 = vmatprep.subr.bf16.mxu0 0
        %1694 = vmatpush1.bf16.msra.mxu0 0
        %1695 = vmatprep.subr.bf16.mxu0 0
        %1696 = vmatpush1.bf16.msra.mxu0 0
        %1697 = vmatprep.subr.bf16.mxu0 0
        %1698 = vmatpush1.bf16.msra.mxu0 0
        %1699 = vmatprep.subr.bf16.mxu0 0
        %1700 = vmatpush1.bf16.msra.mxu0 0
        %1701 = vmatprep.subr.bf16.mxu0 0
        %1702 = vmatpush1.bf16.msra.mxu0 0
        %1703 = vmatprep.subr.bf16.mxu0 0
        %1704 = vmatpush1.bf16.msra.mxu0 0
        %1705 = vmatprep.subr.bf16.mxu0 0
        %1706 = vmatpush1.bf16.msra.mxu0 0
        %1707 = vmatprep.subr.bf16.mxu0 0
        %1708 = vmatpush1.bf16.msra.mxu0 0
        %1709 = vmatprep.subr.bf16.mxu0 0
        %1710 = vmatpush1.bf16.msra.mxu0 0
        %1711 = vmatprep.mubr.bf16.mxu0 0
        %1712 = vmatmul.mubr.bf16.gmra.mrb[0].mxu0 %v1674
        %v1713 = vpop.f32.mrb[0].mxu0
        %v1714 = vadd.f32 0.0, %v1713
        %v1715 = vpop.f32.mrb[0].mxu0
        %v1716 = vpop.f32.mrb[0].mxu0
        %v1717 = vpop.f32.mrb[0].mxu0
        %1718 = vdwg.mxu0
        %1719 = vrot.lane.b32.xlu0 %v1109, 96
        %v1720 = vpop.permute.xlu0 %1719
        %v1722 = vsel %vm1203, %v1670, 0
        %v1725 = vsel %vm1231, %v1720, 0
        %1727 = vmatprep.subr.bf16.mxu0 0
        %1728 = vmatpush1.bf16.msra.mxu0 %v1725
        %1729 = vmatprep.subr.bf16.mxu0 0
        %1730 = vmatpush1.bf16.msra.mxu0 0
        %1731 = vmatprep.subr.bf16.mxu0 0
        %1732 = vmatpush1.bf16.msra.mxu0 0
        %1733 = vmatprep.subr.bf16.mxu0 0
        %1734 = vmatpush1.bf16.msra.mxu0 0
        %1735 = vmatprep.subr.bf16.mxu0 0
        %1736 = vmatpush1.bf16.msra.mxu0 0
        %1737 = vmatprep.subr.bf16.mxu0 0
        %1738 = vmatpush1.bf16.msra.mxu0 0
        %1739 = vmatprep.subr.bf16.mxu0 0
        %1740 = vmatpush1.bf16.msra.mxu0 0
        %1741 = vmatprep.subr.bf16.mxu0 0
        %1742 = vmatpush1.bf16.msra.mxu0 0
        %1743 = vmatprep.subr.bf16.mxu0 0
        %1744 = vmatpush1.bf16.msra.mxu0 0
        %1745 = vmatprep.subr.bf16.mxu0 0
        %1746 = vmatpush1.bf16.msra.mxu0 0
        %1747 = vmatprep.subr.bf16.mxu0 0
        %1748 = vmatpush1.bf16.msra.mxu0 0
        %1749 = vmatprep.subr.bf16.mxu0 0
        %1750 = vmatpush1.bf16.msra.mxu0 0
        %1751 = vmatprep.subr.bf16.mxu0 0
        %1752 = vmatpush1.bf16.msra.mxu0 0
        %1753 = vmatprep.subr.bf16.mxu0 0
        %1754 = vmatpush1.bf16.msra.mxu0 0
        %1755 = vmatprep.subr.bf16.mxu0 0
        %1756 = vmatpush1.bf16.msra.mxu0 0
        %1757 = vmatprep.subr.bf16.mxu0 0
        %1758 = vmatpush1.bf16.msra.mxu0 0
        %1759 = vmatprep.mubr.bf16.mxu0 0
        %1760 = vmatmul.mubr.bf16.gmra.mrb[0].mxu0 %v1722
        %v1761 = vpop.f32.mrb[0].mxu0
        %v1762 = vadd.f32 0.0, %v1761
        %v1763 = vpop.f32.mrb[0].mxu0
        %v1764 = vpop.f32.mrb[0].mxu0
        %v1765 = vpop.f32.mrb[0].mxu0
        %1766 = vdwg.mxu0
        %1767 = vrot.lane.b32.xlu0 %v1104, 80
        %v1768 = vpop.permute.xlu0 %1767
        %1769 = vrot.lane.b32.xlu0 %v1106, 80
        %v1770 = vpop.permute.xlu0 %1769
        %v1772 = vsel %vm1110, %v1768, 0
        %v1775 = vsel %vm1110, %v1770, 0
        %1777 = vmatprep.subr.bf16.mxu0 0
        %1778 = vmatpush1.bf16.xpose.msra.mxu0 %v1775
        %1779 = vmatprep.subr.bf16.mxu0 0
        %1780 = vmatpush1.bf16.xpose.msra.mxu0 0
        %1781 = vmatprep.subr.bf16.mxu0 0
        %1782 = vmatpush1.bf16.xpose.msra.mxu0 0
        %1783 = vmatprep.subr.bf16.mxu0 0
        %1784 = vmatpush1.bf16.xpose.msra.mxu0 0
        %1785 = vmatprep.subr.bf16.mxu0 0
        %1786 = vmatpush1.bf16.xpose.msra.mxu0 0
        %1787 = vmatprep.subr.bf16.mxu0 0
        %1788 = vmatpush1.bf16.xpose.msra.mxu0 0
        %1789 = vmatprep.subr.bf16.mxu0 0
        %1790 = vmatpush1.bf16.xpose.msra.mxu0 0
        %1791 = vmatprep.subr.bf16.mxu0 0
        %1792 = vmatpush1.bf16.xpose.msra.mxu0 0
        %1793 = vmatprep.subr.bf16.mxu0 0
        %1794 = vmatpush1.bf16.xpose.msra.mxu0 0
        %1795 = vmatprep.subr.bf16.mxu0 0
        %1796 = vmatpush1.bf16.xpose.msra.mxu0 0
        %1797 = vmatprep.subr.bf16.mxu0 0
        %1798 = vmatpush1.bf16.xpose.msra.mxu0 0
        %1799 = vmatprep.subr.bf16.mxu0 0
        %1800 = vmatpush1.bf16.xpose.msra.mxu0 0
        %1801 = vmatprep.subr.bf16.mxu0 0
        %1802 = vmatpush1.bf16.xpose.msra.mxu0 0
        %1803 = vmatprep.subr.bf16.mxu0 0
        %1804 = vmatpush1.bf16.xpose.msra.mxu0 0
        %1805 = vmatprep.subr.bf16.mxu0 0
        %1806 = vmatpush1.bf16.xpose.msra.mxu0 0
        %1807 = vmatprep.subr.bf16.mxu0 0
        %1808 = vmatpush1.bf16.xpose.msra.mxu0 0
        %1809 = vmatprep.mubr.bf16.mxu0 0
        %1810 = vmatmul.mubr.bf16.gmra.mrb[0].mxu0 %v1772
        %v1811 = vpop.f32.mrb[0].mxu0
        %v1812 = vadd.f32 0.0, %v1811
        %v1813 = vpop.f32.mrb[0].mxu0
        %v1814 = vpop.f32.mrb[0].mxu0
        %v1815 = vpop.f32.mrb[0].mxu0
        %1816 = vdwg.mxu0
        %1817 = vrot.lane.b32.xlu0 %v1105, 80
        %v1818 = vpop.permute.xlu0 %1817
        %1819 = vrot.lane.b32.xlu0 %v1107, 80
        %v1820 = vpop.permute.xlu0 %1819
        %v1822 = vsel %vm1110, %v1818, 0
        %v1825 = vsel %vm1110, %v1820, 0
        %1827 = vmatprep.subr.bf16.mxu0 0
        %1828 = vmatpush1.bf16.xpose.msra.mxu0 %v1825
        %1829 = vmatprep.subr.bf16.mxu0 0
        %1830 = vmatpush1.bf16.xpose.msra.mxu0 0
        %1831 = vmatprep.subr.bf16.mxu0 0
        %1832 = vmatpush1.bf16.xpose.msra.mxu0 0
        %1833 = vmatprep.subr.bf16.mxu0 0
        %1834 = vmatpush1.bf16.xpose.msra.mxu0 0
        %1835 = vmatprep.subr.bf16.mxu0 0
        %1836 = vmatpush1.bf16.xpose.msra.mxu0 0
        %1837 = vmatprep.subr.bf16.mxu0 0
        %1838 = vmatpush1.bf16.xpose.msra.mxu0 0
        %1839 = vmatprep.subr.bf16.mxu0 0
        %1840 = vmatpush1.bf16.xpose.msra.mxu0 0
        %1841 = vmatprep.subr.bf16.mxu0 0
        %1842 = vmatpush1.bf16.xpose.msra.mxu0 0
        %1843 = vmatprep.subr.bf16.mxu0 0
        %1844 = vmatpush1.bf16.xpose.msra.mxu0 0
        %1845 = vmatprep.subr.bf16.mxu0 0
        %1846 = vmatpush1.bf16.xpose.msra.mxu0 0
        %1847 = vmatprep.subr.bf16.mxu0 0
        %1848 = vmatpush1.bf16.xpose.msra.mxu0 0
        %1849 = vmatprep.subr.bf16.mxu0 0
        %1850 = vmatpush1.bf16.xpose.msra.mxu0 0
        %1851 = vmatprep.subr.bf16.mxu0 0
        %1852 = vmatpush1.bf16.xpose.msra.mxu0 0
        %1853 = vmatprep.subr.bf16.mxu0 0
        %1854 = vmatpush1.bf16.xpose.msra.mxu0 0
        %1855 = vmatprep.subr.bf16.mxu0 0
        %1856 = vmatpush1.bf16.xpose.msra.mxu0 0
        %1857 = vmatprep.subr.bf16.mxu0 0
        %1858 = vmatpush1.bf16.xpose.msra.mxu0 0
        %1859 = vmatprep.mubr.bf16.mxu0 0
        %1860 = vmatmul.mubr.bf16.gmra.mrb[0].mxu0 %v1822
        %v1861 = vpop.f32.mrb[0].mxu0
        %v1862 = vadd.f32 0.0, %v1861
        %v1863 = vpop.f32.mrb[0].mxu0
        %v1864 = vpop.f32.mrb[0].mxu0
        %v1865 = vpop.f32.mrb[0].mxu0
        %1866 = vdwg.mxu0
        %v1867 = vsel %vm1203, %v1812, -inf
        %1868 = vmax.xlane.f32.xlu0 %v1867
        %v1869 = vpop.xlane.xlu0 %1868
        %v1870 = vsel %vm1203, %v1862, -inf
        %1871 = vmax.xlane.f32.xlu0 %v1870
        %v1872 = vpop.xlane.xlu0 %1871
        %v1873 = vsub.f32 %v1812, %v1869
        %v1874 = vsub.f32 %v1862, %v1872
        %v1875 = vmul.f32 %v1873, 1.442695
        %v1876 = vpow.pop %v1875
        %v1877 = vmul.f32 %v1874, 1.442695
        %v1878 = vpow.pop %v1877
        %v1879 = vsel %vm1203, %v1876, 0.0
        %1880 = vadd.xlane.f32.xlu0 %v1879
        %v1881 = vpop.xlane.xlu0 %1880
        %v1882 = vsel %vm1203, %v1878, 0.0
        %1883 = vadd.xlane.f32.xlu0 %v1882
        %v1884 = vpop.xlane.xlu0 %1883
        %v1885 = vrcp.pop %v1881
        %v1886 = vrcp.pop %v1884
        %v1887 = vmul.f32 %v1876, %v1885
        %v1888 = vmul.f32 %v1878, %v1886
        %v1889 = vpack.c.bf16 %v1887, %v1887
        %v1890 = vpack.c.bf16 %v1888, %v1888
        %1891 = vrot.lane.b32.xlu0 %v1108, 80
        %v1892 = vpop.permute.xlu0 %1891
        %v1894 = vsel %vm1203, %v1889, 0
        %v1897 = vsel %vm1231, %v1892, 0
        %1899 = vmatprep.subr.bf16.mxu0 0
        %1900 = vmatpush1.bf16.msra.mxu0 %v1897
        %1901 = vmatprep.subr.bf16.mxu0 0
        %1902 = vmatpush1.bf16.msra.mxu0 0
        %1903 = vmatprep.subr.bf16.mxu0 0
        %1904 = vmatpush1.bf16.msra.mxu0 0
        %1905 = vmatprep.subr.bf16.mxu0 0
        %1906 = vmatpush1.bf16.msra.mxu0 0
        %1907 = vmatprep.subr.bf16.mxu0 0
        %1908 = vmatpush1.bf16.msra.mxu0 0
        %1909 = vmatprep.subr.bf16.mxu0 0
        %1910 = vmatpush1.bf16.msra.mxu0 0
        %1911 = vmatprep.subr.bf16.mxu0 0
        %1912 = vmatpush1.bf16.msra.mxu0 0
        %1913 = vmatprep.subr.bf16.mxu0 0
        %1914 = vmatpush1.bf16.msra.mxu0 0
        %1915 = vmatprep.subr.bf16.mxu0 0
        %1916 = vmatpush1.bf16.msra.mxu0 0
        %1917 = vmatprep.subr.bf16.mxu0 0
        %1918 = vmatpush1.bf16.msra.mxu0 0
        %1919 = vmatprep.subr.bf16.mxu0 0
        %1920 = vmatpush1.bf16.msra.mxu0 0
        %1921 = vmatprep.subr.bf16.mxu0 0
        %1922 = vmatpush1.bf16.msra.mxu0 0
        %1923 = vmatprep.subr.bf16.mxu0 0
        %1924 = vmatpush1.bf16.msra.mxu0 0
        %1925 = vmatprep.subr.bf16.mxu0 0
        %1926 = vmatpush1.bf16.msra.mxu0 0
        %1927 = vmatprep.subr.bf16.mxu0 0
        %1928 = vmatpush1.bf16.msra.mxu0 0
        %1929 = vmatprep.subr.bf16.mxu0 0
        %1930 = vmatpush1.bf16.msra.mxu0 0
        %1931 = vmatprep.mubr.bf16.mxu0 0
        %1932 = vmatmul.mubr.bf16.gmra.mrb[0].mxu0 %v1894
        %v1933 = vpop.f32.mrb[0].mxu0
        %v1934 = vadd.f32 0.0, %v1933
        %v1935 = vpop.f32.mrb[0].mxu0
        %v1936 = vpop.f32.mrb[0].mxu0
        %v1937 = vpop.f32.mrb[0].mxu0
        %1938 = vdwg.mxu0
        %1939 = vrot.lane.b32.xlu0 %v1109, 80
        %v1940 = vpop.permute.xlu0 %1939
        %v1942 = vsel %vm1203, %v1890, 0
        %v1945 = vsel %vm1231, %v1940, 0
        %1947 = vmatprep.subr.bf16.mxu0 0
        %1948 = vmatpush1.bf16.msra.mxu0 %v1945
        %1949 = vmatprep.subr.bf16.mxu0 0
        %1950 = vmatpush1.bf16.msra.mxu0 0
        %1951 = vmatprep.subr.bf16.mxu0 0
        %1952 = vmatpush1.bf16.msra.mxu0 0
        %1953 = vmatprep.subr.bf16.mxu0 0
        %1954 = vmatpush1.bf16.msra.mxu0 0
        %1955 = vmatprep.subr.bf16.mxu0 0
        %1956 = vmatpush1.bf16.msra.mxu0 0
        %1957 = vmatprep.subr.bf16.mxu0 0
        %1958 = vmatpush1.bf16.msra.mxu0 0
        %1959 = vmatprep.subr.bf16.mxu0 0
        %1960 = vmatpush1.bf16.msra.mxu0 0
        %1961 = vmatprep.subr.bf16.mxu0 0
        %1962 = vmatpush1.bf16.msra.mxu0 0
        %1963 = vmatprep.subr.bf16.mxu0 0
        %1964 = vmatpush1.bf16.msra.mxu0 0
        %1965 = vmatprep.subr.bf16.mxu0 0
        %1966 = vmatpush1.bf16.msra.mxu0 0
        %1967 = vmatprep.subr.bf16.mxu0 0
        %1968 = vmatpush1.bf16.msra.mxu0 0
        %1969 = vmatprep.subr.bf16.mxu0 0
        %1970 = vmatpush1.bf16.msra.mxu0 0
        %1971 = vmatprep.subr.bf16.mxu0 0
        %1972 = vmatpush1.bf16.msra.mxu0 0
        %1973 = vmatprep.subr.bf16.mxu0 0
        %1974 = vmatpush1.bf16.msra.mxu0 0
        %1975 = vmatprep.subr.bf16.mxu0 0
        %1976 = vmatpush1.bf16.msra.mxu0 0
        %1977 = vmatprep.subr.bf16.mxu0 0
        %1978 = vmatpush1.bf16.msra.mxu0 0
        %1979 = vmatprep.mubr.bf16.mxu0 0
        %1980 = vmatmul.mubr.bf16.gmra.mrb[0].mxu0 %v1942
        %v1981 = vpop.f32.mrb[0].mxu0
        %v1982 = vadd.f32 0.0, %v1981
        %v1983 = vpop.f32.mrb[0].mxu0
        %v1984 = vpop.f32.mrb[0].mxu0
        %v1985 = vpop.f32.mrb[0].mxu0
        %1986 = vdwg.mxu0
        %1987 = vrot.lane.b32.xlu0 %v1104, 64
        %v1988 = vpop.permute.xlu0 %1987
        %1989 = vrot.lane.b32.xlu0 %v1106, 64
        %v1990 = vpop.permute.xlu0 %1989
        %v1992 = vsel %vm1110, %v1988, 0
        %v1995 = vsel %vm1110, %v1990, 0
        %1997 = vmatprep.subr.bf16.mxu0 0
        %1998 = vmatpush1.bf16.xpose.msra.mxu0 %v1995
        %1999 = vmatprep.subr.bf16.mxu0 0
        %2000 = vmatpush1.bf16.xpose.msra.mxu0 0
        %2001 = vmatprep.subr.bf16.mxu0 0
        %2002 = vmatpush1.bf16.xpose.msra.mxu0 0
        %2003 = vmatprep.subr.bf16.mxu0 0
        %2004 = vmatpush1.bf16.xpose.msra.mxu0 0
        %2005 = vmatprep.subr.bf16.mxu0 0
        %2006 = vmatpush1.bf16.xpose.msra.mxu0 0
        %2007 = vmatprep.subr.bf16.mxu0 0
        %2008 = vmatpush1.bf16.xpose.msra.mxu0 0
        %2009 = vmatprep.subr.bf16.mxu0 0
        %2010 = vmatpush1.bf16.xpose.msra.mxu0 0
        %2011 = vmatprep.subr.bf16.mxu0 0
        %2012 = vmatpush1.bf16.xpose.msra.mxu0 0
        %2013 = vmatprep.subr.bf16.mxu0 0
        %2014 = vmatpush1.bf16.xpose.msra.mxu0 0
        %2015 = vmatprep.subr.bf16.mxu0 0
        %2016 = vmatpush1.bf16.xpose.msra.mxu0 0
        %2017 = vmatprep.subr.bf16.mxu0 0
        %2018 = vmatpush1.bf16.xpose.msra.mxu0 0
        %2019 = vmatprep.subr.bf16.mxu0 0
        %2020 = vmatpush1.bf16.xpose.msra.mxu0 0
        %2021 = vmatprep.subr.bf16.mxu0 0
        %2022 = vmatpush1.bf16.xpose.msra.mxu0 0
        %2023 = vmatprep.subr.bf16.mxu0 0
        %2024 = vmatpush1.bf16.xpose.msra.mxu0 0
        %2025 = vmatprep.subr.bf16.mxu0 0
        %2026 = vmatpush1.bf16.xpose.msra.mxu0 0
        %2027 = vmatprep.subr.bf16.mxu0 0
        %2028 = vmatpush1.bf16.xpose.msra.mxu0 0
        %2029 = vmatprep.mubr.bf16.mxu0 0
        %2030 = vmatmul.mubr.bf16.gmra.mrb[0].mxu0 %v1992
        %v2031 = vpop.f32.mrb[0].mxu0
        %v2032 = vadd.f32 0.0, %v2031
        %v2033 = vpop.f32.mrb[0].mxu0
        %v2034 = vpop.f32.mrb[0].mxu0
        %v2035 = vpop.f32.mrb[0].mxu0
        %2036 = vdwg.mxu0
        %2037 = vrot.lane.b32.xlu0 %v1105, 64
        %v2038 = vpop.permute.xlu0 %2037
        %2039 = vrot.lane.b32.xlu0 %v1107, 64
        %v2040 = vpop.permute.xlu0 %2039
        %v2042 = vsel %vm1110, %v2038, 0
        %v2045 = vsel %vm1110, %v2040, 0
        %2047 = vmatprep.subr.bf16.mxu0 0
        %2048 = vmatpush1.bf16.xpose.msra.mxu0 %v2045
        %2049 = vmatprep.subr.bf16.mxu0 0
        %2050 = vmatpush1.bf16.xpose.msra.mxu0 0
        %2051 = vmatprep.subr.bf16.mxu0 0
        %2052 = vmatpush1.bf16.xpose.msra.mxu0 0
        %2053 = vmatprep.subr.bf16.mxu0 0
        %2054 = vmatpush1.bf16.xpose.msra.mxu0 0
        %2055 = vmatprep.subr.bf16.mxu0 0
        %2056 = vmatpush1.bf16.xpose.msra.mxu0 0
        %2057 = vmatprep.subr.bf16.mxu0 0
        %2058 = vmatpush1.bf16.xpose.msra.mxu0 0
        %2059 = vmatprep.subr.bf16.mxu0 0
        %2060 = vmatpush1.bf16.xpose.msra.mxu0 0
        %2061 = vmatprep.subr.bf16.mxu0 0
        %2062 = vmatpush1.bf16.xpose.msra.mxu0 0
        %2063 = vmatprep.subr.bf16.mxu0 0
        %2064 = vmatpush1.bf16.xpose.msra.mxu0 0
        %2065 = vmatprep.subr.bf16.mxu0 0
        %2066 = vmatpush1.bf16.xpose.msra.mxu0 0
        %2067 = vmatprep.subr.bf16.mxu0 0
        %2068 = vmatpush1.bf16.xpose.msra.mxu0 0
        %2069 = vmatprep.subr.bf16.mxu0 0
        %2070 = vmatpush1.bf16.xpose.msra.mxu0 0
        %2071 = vmatprep.subr.bf16.mxu0 0
        %2072 = vmatpush1.bf16.xpose.msra.mxu0 0
        %2073 = vmatprep.subr.bf16.mxu0 0
        %2074 = vmatpush1.bf16.xpose.msra.mxu0 0
        %2075 = vmatprep.subr.bf16.mxu0 0
        %2076 = vmatpush1.bf16.xpose.msra.mxu0 0
        %2077 = vmatprep.subr.bf16.mxu0 0
        %2078 = vmatpush1.bf16.xpose.msra.mxu0 0
        %2079 = vmatprep.mubr.bf16.mxu0 0
        %2080 = vmatmul.mubr.bf16.gmra.mrb[0].mxu0 %v2042
        %v2081 = vpop.f32.mrb[0].mxu0
        %v2082 = vadd.f32 0.0, %v2081
        %v2083 = vpop.f32.mrb[0].mxu0
        %v2084 = vpop.f32.mrb[0].mxu0
        %v2085 = vpop.f32.mrb[0].mxu0
        %2086 = vdwg.mxu0
        %v2087 = vsel %vm1203, %v2032, -inf
        %2088 = vmax.xlane.f32.xlu0 %v2087
        %v2089 = vpop.xlane.xlu0 %2088
        %v2090 = vsel %vm1203, %v2082, -inf
        %2091 = vmax.xlane.f32.xlu0 %v2090
        %v2092 = vpop.xlane.xlu0 %2091
        %v2093 = vsub.f32 %v2032, %v2089
        %v2094 = vsub.f32 %v2082, %v2092
        %v2095 = vmul.f32 %v2093, 1.442695
        %v2096 = vpow.pop %v2095
        %v2097 = vmul.f32 %v2094, 1.442695
        %v2098 = vpow.pop %v2097
        %v2099 = vsel %vm1203, %v2096, 0.0
        %2100 = vadd.xlane.f32.xlu0 %v2099
        %v2101 = vpop.xlane.xlu0 %2100
        %v2102 = vsel %vm1203, %v2098, 0.0
        %2103 = vadd.xlane.f32.xlu0 %v2102
        %v2104 = vpop.xlane.xlu0 %2103
        %v2105 = vrcp.pop %v2101
        %v2106 = vrcp.pop %v2104
        %v2107 = vmul.f32 %v2096, %v2105
        %v2108 = vmul.f32 %v2098, %v2106
        %v2109 = vpack.c.bf16 %v2107, %v2107
        %v2110 = vpack.c.bf16 %v2108, %v2108
        %2111 = vrot.lane.b32.xlu0 %v1108, 64
        %v2112 = vpop.permute.xlu0 %2111
        %v2114 = vsel %vm1203, %v2109, 0
        %v2117 = vsel %vm1231, %v2112, 0
        %2119 = vmatprep.subr.bf16.mxu0 0
        %2120 = vmatpush1.bf16.msra.mxu0 %v2117
        %2121 = vmatprep.subr.bf16.mxu0 0
        %2122 = vmatpush1.bf16.msra.mxu0 0
        %2123 = vmatprep.subr.bf16.mxu0 0
        %2124 = vmatpush1.bf16.msra.mxu0 0
        %2125 = vmatprep.subr.bf16.mxu0 0
        %2126 = vmatpush1.bf16.msra.mxu0 0
        %2127 = vmatprep.subr.bf16.mxu0 0
        %2128 = vmatpush1.bf16.msra.mxu0 0
        %2129 = vmatprep.subr.bf16.mxu0 0
        %2130 = vmatpush1.bf16.msra.mxu0 0
        %2131 = vmatprep.subr.bf16.mxu0 0
        %2132 = vmatpush1.bf16.msra.mxu0 0
        %2133 = vmatprep.subr.bf16.mxu0 0
        %2134 = vmatpush1.bf16.msra.mxu0 0
        %2135 = vmatprep.subr.bf16.mxu0 0
        %2136 = vmatpush1.bf16.msra.mxu0 0
        %2137 = vmatprep.subr.bf16.mxu0 0
        %2138 = vmatpush1.bf16.msra.mxu0 0
        %2139 = vmatprep.subr.bf16.mxu0 0
        %2140 = vmatpush1.bf16.msra.mxu0 0
        %2141 = vmatprep.subr.bf16.mxu0 0
        %2142 = vmatpush1.bf16.msra.mxu0 0
        %2143 = vmatprep.subr.bf16.mxu0 0
        %2144 = vmatpush1.bf16.msra.mxu0 0
        %2145 = vmatprep.subr.bf16.mxu0 0
        %2146 = vmatpush1.bf16.msra.mxu0 0
        %2147 = vmatprep.subr.bf16.mxu0 0
        %2148 = vmatpush1.bf16.msra.mxu0 0
        %2149 = vmatprep.subr.bf16.mxu0 0
        %2150 = vmatpush1.bf16.msra.mxu0 0
        %2151 = vmatprep.mubr.bf16.mxu0 0
        %2152 = vmatmul.mubr.bf16.gmra.mrb[0].mxu0 %v2114
        %v2153 = vpop.f32.mrb[0].mxu0
        %v2154 = vadd.f32 0.0, %v2153
        %v2155 = vpop.f32.mrb[0].mxu0
        %v2156 = vpop.f32.mrb[0].mxu0
        %v2157 = vpop.f32.mrb[0].mxu0
        %2158 = vdwg.mxu0
        %2159 = vrot.lane.b32.xlu0 %v1109, 64
        %v2160 = vpop.permute.xlu0 %2159
        %v2162 = vsel %vm1203, %v2110, 0
        %v2165 = vsel %vm1231, %v2160, 0
        %2167 = vmatprep.subr.bf16.mxu0 0
        %2168 = vmatpush1.bf16.msra.mxu0 %v2165
        %2169 = vmatprep.subr.bf16.mxu0 0
        %2170 = vmatpush1.bf16.msra.mxu0 0
        %2171 = vmatprep.subr.bf16.mxu0 0
        %2172 = vmatpush1.bf16.msra.mxu0 0
        %2173 = vmatprep.subr.bf16.mxu0 0
        %2174 = vmatpush1.bf16.msra.mxu0 0
        %2175 = vmatprep.subr.bf16.mxu0 0
        %2176 = vmatpush1.bf16.msra.mxu0 0
        %2177 = vmatprep.subr.bf16.mxu0 0
        %2178 = vmatpush1.bf16.msra.mxu0 0
        %2179 = vmatprep.subr.bf16.mxu0 0
        %2180 = vmatpush1.bf16.msra.mxu0 0
        %2181 = vmatprep.subr.bf16.mxu0 0
        %2182 = vmatpush1.bf16.msra.mxu0 0
        %2183 = vmatprep.subr.bf16.mxu0 0
        %2184 = vmatpush1.bf16.msra.mxu0 0
        %2185 = vmatprep.subr.bf16.mxu0 0
        %2186 = vmatpush1.bf16.msra.mxu0 0
        %2187 = vmatprep.subr.bf16.mxu0 0
        %2188 = vmatpush1.bf16.msra.mxu0 0
        %2189 = vmatprep.subr.bf16.mxu0 0
        %2190 = vmatpush1.bf16.msra.mxu0 0
        %2191 = vmatprep.subr.bf16.mxu0 0
        %2192 = vmatpush1.bf16.msra.mxu0 0
        %2193 = vmatprep.subr.bf16.mxu0 0
        %2194 = vmatpush1.bf16.msra.mxu0 0
        %2195 = vmatprep.subr.bf16.mxu0 0
        %2196 = vmatpush1.bf16.msra.mxu0 0
        %2197 = vmatprep.subr.bf16.mxu0 0
        %2198 = vmatpush1.bf16.msra.mxu0 0
        %2199 = vmatprep.mubr.bf16.mxu0 0
        %2200 = vmatmul.mubr.bf16.gmra.mrb[0].mxu0 %v2162
        %v2201 = vpop.f32.mrb[0].mxu0
        %v2202 = vadd.f32 0.0, %v2201
        %v2203 = vpop.f32.mrb[0].mxu0
        %v2204 = vpop.f32.mrb[0].mxu0
        %v2205 = vpop.f32.mrb[0].mxu0
        %2206 = vdwg.mxu0
        %2207 = vrot.lane.b32.xlu0 %v1104, 48
        %v2208 = vpop.permute.xlu0 %2207
        %2209 = vrot.lane.b32.xlu0 %v1106, 48
        %v2210 = vpop.permute.xlu0 %2209
        %v2212 = vsel %vm1110, %v2208, 0
        %v2215 = vsel %vm1110, %v2210, 0
        %2217 = vmatprep.subr.bf16.mxu0 0
        %2218 = vmatpush1.bf16.xpose.msra.mxu0 %v2215
        %2219 = vmatprep.subr.bf16.mxu0 0
        %2220 = vmatpush1.bf16.xpose.msra.mxu0 0
        %2221 = vmatprep.subr.bf16.mxu0 0
        %2222 = vmatpush1.bf16.xpose.msra.mxu0 0
        %2223 = vmatprep.subr.bf16.mxu0 0
        %2224 = vmatpush1.bf16.xpose.msra.mxu0 0
        %2225 = vmatprep.subr.bf16.mxu0 0
        %2226 = vmatpush1.bf16.xpose.msra.mxu0 0
        %2227 = vmatprep.subr.bf16.mxu0 0
        %2228 = vmatpush1.bf16.xpose.msra.mxu0 0
        %2229 = vmatprep.subr.bf16.mxu0 0
        %2230 = vmatpush1.bf16.xpose.msra.mxu0 0
        %2231 = vmatprep.subr.bf16.mxu0 0
        %2232 = vmatpush1.bf16.xpose.msra.mxu0 0
        %2233 = vmatprep.subr.bf16.mxu0 0
        %2234 = vmatpush1.bf16.xpose.msra.mxu0 0
        %2235 = vmatprep.subr.bf16.mxu0 0
        %2236 = vmatpush1.bf16.xpose.msra.mxu0 0
        %2237 = vmatprep.subr.bf16.mxu0 0
        %2238 = vmatpush1.bf16.xpose.msra.mxu0 0
        %2239 = vmatprep.subr.bf16.mxu0 0
        %2240 = vmatpush1.bf16.xpose.msra.mxu0 0
        %2241 = vmatprep.subr.bf16.mxu0 0
        %2242 = vmatpush1.bf16.xpose.msra.mxu0 0
        %2243 = vmatprep.subr.bf16.mxu0 0
        %2244 = vmatpush1.bf16.xpose.msra.mxu0 0
        %2245 = vmatprep.subr.bf16.mxu0 0
        %2246 = vmatpush1.bf16.xpose.msra.mxu0 0
        %2247 = vmatprep.subr.bf16.mxu0 0
        %2248 = vmatpush1.bf16.xpose.msra.mxu0 0
        %2249 = vmatprep.mubr.bf16.mxu0 0
        %2250 = vmatmul.mubr.bf16.gmra.mrb[0].mxu0 %v2212
        %v2251 = vpop.f32.mrb[0].mxu0
        %v2252 = vadd.f32 0.0, %v2251
        %v2253 = vpop.f32.mrb[0].mxu0
        %v2254 = vpop.f32.mrb[0].mxu0
        %v2255 = vpop.f32.mrb[0].mxu0
        %2256 = vdwg.mxu0
        %2257 = vrot.lane.b32.xlu0 %v1105, 48
        %v2258 = vpop.permute.xlu0 %2257
        %2259 = vrot.lane.b32.xlu0 %v1107, 48
        %v2260 = vpop.permute.xlu0 %2259
        %v2262 = vsel %vm1110, %v2258, 0
        %v2265 = vsel %vm1110, %v2260, 0
        %2267 = vmatprep.subr.bf16.mxu0 0
        %2268 = vmatpush1.bf16.xpose.msra.mxu0 %v2265
        %2269 = vmatprep.subr.bf16.mxu0 0
        %2270 = vmatpush1.bf16.xpose.msra.mxu0 0
        %2271 = vmatprep.subr.bf16.mxu0 0
        %2272 = vmatpush1.bf16.xpose.msra.mxu0 0
        %2273 = vmatprep.subr.bf16.mxu0 0
        %2274 = vmatpush1.bf16.xpose.msra.mxu0 0
        %2275 = vmatprep.subr.bf16.mxu0 0
        %2276 = vmatpush1.bf16.xpose.msra.mxu0 0
        %2277 = vmatprep.subr.bf16.mxu0 0
        %2278 = vmatpush1.bf16.xpose.msra.mxu0 0
        %2279 = vmatprep.subr.bf16.mxu0 0
        %2280 = vmatpush1.bf16.xpose.msra.mxu0 0
        %2281 = vmatprep.subr.bf16.mxu0 0
        %2282 = vmatpush1.bf16.xpose.msra.mxu0 0
        %2283 = vmatprep.subr.bf16.mxu0 0
        %2284 = vmatpush1.bf16.xpose.msra.mxu0 0
        %2285 = vmatprep.subr.bf16.mxu0 0
        %2286 = vmatpush1.bf16.xpose.msra.mxu0 0
        %2287 = vmatprep.subr.bf16.mxu0 0
        %2288 = vmatpush1.bf16.xpose.msra.mxu0 0
        %2289 = vmatprep.subr.bf16.mxu0 0
        %2290 = vmatpush1.bf16.xpose.msra.mxu0 0
        %2291 = vmatprep.subr.bf16.mxu0 0
        %2292 = vmatpush1.bf16.xpose.msra.mxu0 0
        %2293 = vmatprep.subr.bf16.mxu0 0
        %2294 = vmatpush1.bf16.xpose.msra.mxu0 0
        %2295 = vmatprep.subr.bf16.mxu0 0
        %2296 = vmatpush1.bf16.xpose.msra.mxu0 0
        %2297 = vmatprep.subr.bf16.mxu0 0
        %2298 = vmatpush1.bf16.xpose.msra.mxu0 0
        %2299 = vmatprep.mubr.bf16.mxu0 0
        %2300 = vmatmul.mubr.bf16.gmra.mrb[0].mxu0 %v2262
        %v2301 = vpop.f32.mrb[0].mxu0
        %v2302 = vadd.f32 0.0, %v2301
        %v2303 = vpop.f32.mrb[0].mxu0
        %v2304 = vpop.f32.mrb[0].mxu0
        %v2305 = vpop.f32.mrb[0].mxu0
        %2306 = vdwg.mxu0
        %v2307 = vsel %vm1203, %v2252, -inf
        %2308 = vmax.xlane.f32.xlu0 %v2307
        %v2309 = vpop.xlane.xlu0 %2308
        %v2310 = vsel %vm1203, %v2302, -inf
        %2311 = vmax.xlane.f32.xlu0 %v2310
        %v2312 = vpop.xlane.xlu0 %2311
        %v2313 = vsub.f32 %v2252, %v2309
        %v2314 = vsub.f32 %v2302, %v2312
        %v2315 = vmul.f32 %v2313, 1.442695
        %v2316 = vpow.pop %v2315
        %v2317 = vmul.f32 %v2314, 1.442695
        %v2318 = vpow.pop %v2317
        %v2319 = vsel %vm1203, %v2316, 0.0
        %2320 = vadd.xlane.f32.xlu0 %v2319
        %v2321 = vpop.xlane.xlu0 %2320
        %v2322 = vsel %vm1203, %v2318, 0.0
        %2323 = vadd.xlane.f32.xlu0 %v2322
        %v2324 = vpop.xlane.xlu0 %2323
        %v2325 = vrcp.pop %v2321
        %v2326 = vrcp.pop %v2324
        %v2327 = vmul.f32 %v2316, %v2325
        %v2328 = vmul.f32 %v2318, %v2326
        %v2329 = vpack.c.bf16 %v2327, %v2327
        %v2330 = vpack.c.bf16 %v2328, %v2328
        %2331 = vrot.lane.b32.xlu0 %v1108, 48
        %v2332 = vpop.permute.xlu0 %2331
        %v2334 = vsel %vm1203, %v2329, 0
        %v2337 = vsel %vm1231, %v2332, 0
        %2339 = vmatprep.subr.bf16.mxu0 0
        %2340 = vmatpush1.bf16.msra.mxu0 %v2337
        %2341 = vmatprep.subr.bf16.mxu0 0
        %2342 = vmatpush1.bf16.msra.mxu0 0
        %2343 = vmatprep.subr.bf16.mxu0 0
        %2344 = vmatpush1.bf16.msra.mxu0 0
        %2345 = vmatprep.subr.bf16.mxu0 0
        %2346 = vmatpush1.bf16.msra.mxu0 0
        %2347 = vmatprep.subr.bf16.mxu0 0
        %2348 = vmatpush1.bf16.msra.mxu0 0
        %2349 = vmatprep.subr.bf16.mxu0 0
        %2350 = vmatpush1.bf16.msra.mxu0 0
        %2351 = vmatprep.subr.bf16.mxu0 0
        %2352 = vmatpush1.bf16.msra.mxu0 0
        %2353 = vmatprep.subr.bf16.mxu0 0
        %2354 = vmatpush1.bf16.msra.mxu0 0
        %2355 = vmatprep.subr.bf16.mxu0 0
        %2356 = vmatpush1.bf16.msra.mxu0 0
        %2357 = vmatprep.subr.bf16.mxu0 0
        %2358 = vmatpush1.bf16.msra.mxu0 0
        %2359 = vmatprep.subr.bf16.mxu0 0
        %2360 = vmatpush1.bf16.msra.mxu0 0
        %2361 = vmatprep.subr.bf16.mxu0 0
        %2362 = vmatpush1.bf16.msra.mxu0 0
        %2363 = vmatprep.subr.bf16.mxu0 0
        %2364 = vmatpush1.bf16.msra.mxu0 0
        %2365 = vmatprep.subr.bf16.mxu0 0
        %2366 = vmatpush1.bf16.msra.mxu0 0
        %2367 = vmatprep.subr.bf16.mxu0 0
        %2368 = vmatpush1.bf16.msra.mxu0 0
        %2369 = vmatprep.subr.bf16.mxu0 0
        %2370 = vmatpush1.bf16.msra.mxu0 0
        %2371 = vmatprep.mubr.bf16.mxu0 0
        %2372 = vmatmul.mubr.bf16.gmra.mrb[0].mxu0 %v2334
        %v2373 = vpop.f32.mrb[0].mxu0
        %v2374 = vadd.f32 0.0, %v2373
        %v2375 = vpop.f32.mrb[0].mxu0
        %v2376 = vpop.f32.mrb[0].mxu0
        %v2377 = vpop.f32.mrb[0].mxu0
        %2378 = vdwg.mxu0
        %2379 = vrot.lane.b32.xlu0 %v1109, 48
        %v2380 = vpop.permute.xlu0 %2379
        %v2382 = vsel %vm1203, %v2330, 0
        %v2385 = vsel %vm1231, %v2380, 0
        %2387 = vmatprep.subr.bf16.mxu0 0
        %2388 = vmatpush1.bf16.msra.mxu0 %v2385
        %2389 = vmatprep.subr.bf16.mxu0 0
        %2390 = vmatpush1.bf16.msra.mxu0 0
        %2391 = vmatprep.subr.bf16.mxu0 0
        %2392 = vmatpush1.bf16.msra.mxu0 0
        %2393 = vmatprep.subr.bf16.mxu0 0
        %2394 = vmatpush1.bf16.msra.mxu0 0
        %2395 = vmatprep.subr.bf16.mxu0 0
        %2396 = vmatpush1.bf16.msra.mxu0 0
        %2397 = vmatprep.subr.bf16.mxu0 0
        %2398 = vmatpush1.bf16.msra.mxu0 0
        %2399 = vmatprep.subr.bf16.mxu0 0
        %2400 = vmatpush1.bf16.msra.mxu0 0
        %2401 = vmatprep.subr.bf16.mxu0 0
        %2402 = vmatpush1.bf16.msra.mxu0 0
        %2403 = vmatprep.subr.bf16.mxu0 0
        %2404 = vmatpush1.bf16.msra.mxu0 0
        %2405 = vmatprep.subr.bf16.mxu0 0
        %2406 = vmatpush1.bf16.msra.mxu0 0
        %2407 = vmatprep.subr.bf16.mxu0 0
        %2408 = vmatpush1.bf16.msra.mxu0 0
        %2409 = vmatprep.subr.bf16.mxu0 0
        %2410 = vmatpush1.bf16.msra.mxu0 0
        %2411 = vmatprep.subr.bf16.mxu0 0
        %2412 = vmatpush1.bf16.msra.mxu0 0
        %2413 = vmatprep.subr.bf16.mxu0 0
        %2414 = vmatpush1.bf16.msra.mxu0 0
        %2415 = vmatprep.subr.bf16.mxu0 0
        %2416 = vmatpush1.bf16.msra.mxu0 0
        %2417 = vmatprep.subr.bf16.mxu0 0
        %2418 = vmatpush1.bf16.msra.mxu0 0
        %2419 = vmatprep.mubr.bf16.mxu0 0
        %2420 = vmatmul.mubr.bf16.gmra.mrb[0].mxu0 %v2382
        %v2421 = vpop.f32.mrb[0].mxu0
        %v2422 = vadd.f32 0.0, %v2421
        %v2423 = vpop.f32.mrb[0].mxu0
        %v2424 = vpop.f32.mrb[0].mxu0
        %v2425 = vpop.f32.mrb[0].mxu0
        %2426 = vdwg.mxu0
        %2427 = vrot.lane.b32.xlu0 %v1104, 32
        %v2428 = vpop.permute.xlu0 %2427
        %2429 = vrot.lane.b32.xlu0 %v1106, 32
        %v2430 = vpop.permute.xlu0 %2429
        %v2432 = vsel %vm1110, %v2428, 0
        %v2435 = vsel %vm1110, %v2430, 0
        %2437 = vmatprep.subr.bf16.mxu0 0
        %2438 = vmatpush1.bf16.xpose.msra.mxu0 %v2435
        %2439 = vmatprep.subr.bf16.mxu0 0
        %2440 = vmatpush1.bf16.xpose.msra.mxu0 0
        %2441 = vmatprep.subr.bf16.mxu0 0
        %2442 = vmatpush1.bf16.xpose.msra.mxu0 0
        %2443 = vmatprep.subr.bf16.mxu0 0
        %2444 = vmatpush1.bf16.xpose.msra.mxu0 0
        %2445 = vmatprep.subr.bf16.mxu0 0
        %2446 = vmatpush1.bf16.xpose.msra.mxu0 0
        %2447 = vmatprep.subr.bf16.mxu0 0
        %2448 = vmatpush1.bf16.xpose.msra.mxu0 0
        %2449 = vmatprep.subr.bf16.mxu0 0
        %2450 = vmatpush1.bf16.xpose.msra.mxu0 0
        %2451 = vmatprep.subr.bf16.mxu0 0
        %2452 = vmatpush1.bf16.xpose.msra.mxu0 0
        %2453 = vmatprep.subr.bf16.mxu0 0
        %2454 = vmatpush1.bf16.xpose.msra.mxu0 0
        %2455 = vmatprep.subr.bf16.mxu0 0
        %2456 = vmatpush1.bf16.xpose.msra.mxu0 0
        %2457 = vmatprep.subr.bf16.mxu0 0
        %2458 = vmatpush1.bf16.xpose.msra.mxu0 0
        %2459 = vmatprep.subr.bf16.mxu0 0
        %2460 = vmatpush1.bf16.xpose.msra.mxu0 0
        %2461 = vmatprep.subr.bf16.mxu0 0
        %2462 = vmatpush1.bf16.xpose.msra.mxu0 0
        %2463 = vmatprep.subr.bf16.mxu0 0
        %2464 = vmatpush1.bf16.xpose.msra.mxu0 0
        %2465 = vmatprep.subr.bf16.mxu0 0
        %2466 = vmatpush1.bf16.xpose.msra.mxu0 0
        %2467 = vmatprep.subr.bf16.mxu0 0
        %2468 = vmatpush1.bf16.xpose.msra.mxu0 0
        %2469 = vmatprep.mubr.bf16.mxu0 0
        %2470 = vmatmul.mubr.bf16.gmra.mrb[0].mxu0 %v2432
        %v2471 = vpop.f32.mrb[0].mxu0
        %v2472 = vadd.f32 0.0, %v2471
        %v2473 = vpop.f32.mrb[0].mxu0
        %v2474 = vpop.f32.mrb[0].mxu0
        %v2475 = vpop.f32.mrb[0].mxu0
        %2476 = vdwg.mxu0
        %2477 = vrot.lane.b32.xlu0 %v1105, 32
        %v2478 = vpop.permute.xlu0 %2477
        %2479 = vrot.lane.b32.xlu0 %v1107, 32
        %v2480 = vpop.permute.xlu0 %2479
        %v2482 = vsel %vm1110, %v2478, 0
        %v2485 = vsel %vm1110, %v2480, 0
        %2487 = vmatprep.subr.bf16.mxu0 0
        %2488 = vmatpush1.bf16.xpose.msra.mxu0 %v2485
        %2489 = vmatprep.subr.bf16.mxu0 0
        %2490 = vmatpush1.bf16.xpose.msra.mxu0 0
        %2491 = vmatprep.subr.bf16.mxu0 0
        %2492 = vmatpush1.bf16.xpose.msra.mxu0 0
        %2493 = vmatprep.subr.bf16.mxu0 0
        %2494 = vmatpush1.bf16.xpose.msra.mxu0 0
        %2495 = vmatprep.subr.bf16.mxu0 0
        %2496 = vmatpush1.bf16.xpose.msra.mxu0 0
        %2497 = vmatprep.subr.bf16.mxu0 0
        %2498 = vmatpush1.bf16.xpose.msra.mxu0 0
        %2499 = vmatprep.subr.bf16.mxu0 0
        %2500 = vmatpush1.bf16.xpose.msra.mxu0 0
        %2501 = vmatprep.subr.bf16.mxu0 0
        %2502 = vmatpush1.bf16.xpose.msra.mxu0 0
        %2503 = vmatprep.subr.bf16.mxu0 0
        %2504 = vmatpush1.bf16.xpose.msra.mxu0 0
        %2505 = vmatprep.subr.bf16.mxu0 0
        %2506 = vmatpush1.bf16.xpose.msra.mxu0 0
        %2507 = vmatprep.subr.bf16.mxu0 0
        %2508 = vmatpush1.bf16.xpose.msra.mxu0 0
        %2509 = vmatprep.subr.bf16.mxu0 0
        %2510 = vmatpush1.bf16.xpose.msra.mxu0 0
        %2511 = vmatprep.subr.bf16.mxu0 0
        %2512 = vmatpush1.bf16.xpose.msra.mxu0 0
        %2513 = vmatprep.subr.bf16.mxu0 0
        %2514 = vmatpush1.bf16.xpose.msra.mxu0 0
        %2515 = vmatprep.subr.bf16.mxu0 0
        %2516 = vmatpush1.bf16.xpose.msra.mxu0 0
        %2517 = vmatprep.subr.bf16.mxu0 0
        %2518 = vmatpush1.bf16.xpose.msra.mxu0 0
        %2519 = vmatprep.mubr.bf16.mxu0 0
        %2520 = vmatmul.mubr.bf16.gmra.mrb[0].mxu0 %v2482
        %v2521 = vpop.f32.mrb[0].mxu0
        %v2522 = vadd.f32 0.0, %v2521
        %v2523 = vpop.f32.mrb[0].mxu0
        %v2524 = vpop.f32.mrb[0].mxu0
        %v2525 = vpop.f32.mrb[0].mxu0
        %2526 = vdwg.mxu0
        %v2527 = vsel %vm1203, %v2472, -inf
        %2528 = vmax.xlane.f32.xlu0 %v2527
        %v2529 = vpop.xlane.xlu0 %2528
        %v2530 = vsel %vm1203, %v2522, -inf
        %2531 = vmax.xlane.f32.xlu0 %v2530
        %v2532 = vpop.xlane.xlu0 %2531
        %v2533 = vsub.f32 %v2472, %v2529
        %v2534 = vsub.f32 %v2522, %v2532
        %v2535 = vmul.f32 %v2533, 1.442695
        %v2536 = vpow.pop %v2535
        %v2537 = vmul.f32 %v2534, 1.442695
        %v2538 = vpow.pop %v2537
        %v2539 = vsel %vm1203, %v2536, 0.0
        %2540 = vadd.xlane.f32.xlu0 %v2539
        %v2541 = vpop.xlane.xlu0 %2540
        %v2542 = vsel %vm1203, %v2538, 0.0
        %2543 = vadd.xlane.f32.xlu0 %v2542
        %v2544 = vpop.xlane.xlu0 %2543
        %v2545 = vrcp.pop %v2541
        %v2546 = vrcp.pop %v2544
        %v2547 = vmul.f32 %v2536, %v2545
        %v2548 = vmul.f32 %v2538, %v2546
        %v2549 = vpack.c.bf16 %v2547, %v2547
        %v2550 = vpack.c.bf16 %v2548, %v2548
        %2551 = vrot.lane.b32.xlu0 %v1108, 32
        %v2552 = vpop.permute.xlu0 %2551
        %v2554 = vsel %vm1203, %v2549, 0
        %v2557 = vsel %vm1231, %v2552, 0
        %2559 = vmatprep.subr.bf16.mxu0 0
        %2560 = vmatpush1.bf16.msra.mxu0 %v2557
        %2561 = vmatprep.subr.bf16.mxu0 0
        %2562 = vmatpush1.bf16.msra.mxu0 0
        %2563 = vmatprep.subr.bf16.mxu0 0
        %2564 = vmatpush1.bf16.msra.mxu0 0
        %2565 = vmatprep.subr.bf16.mxu0 0
        %2566 = vmatpush1.bf16.msra.mxu0 0
        %2567 = vmatprep.subr.bf16.mxu0 0
        %2568 = vmatpush1.bf16.msra.mxu0 0
        %2569 = vmatprep.subr.bf16.mxu0 0
        %2570 = vmatpush1.bf16.msra.mxu0 0
        %2571 = vmatprep.subr.bf16.mxu0 0
        %2572 = vmatpush1.bf16.msra.mxu0 0
        %2573 = vmatprep.subr.bf16.mxu0 0
        %2574 = vmatpush1.bf16.msra.mxu0 0
        %2575 = vmatprep.subr.bf16.mxu0 0
        %2576 = vmatpush1.bf16.msra.mxu0 0
        %2577 = vmatprep.subr.bf16.mxu0 0
        %2578 = vmatpush1.bf16.msra.mxu0 0
        %2579 = vmatprep.subr.bf16.mxu0 0
        %2580 = vmatpush1.bf16.msra.mxu0 0
        %2581 = vmatprep.subr.bf16.mxu0 0
        %2582 = vmatpush1.bf16.msra.mxu0 0
        %2583 = vmatprep.subr.bf16.mxu0 0
        %2584 = vmatpush1.bf16.msra.mxu0 0
        %2585 = vmatprep.subr.bf16.mxu0 0
        %2586 = vmatpush1.bf16.msra.mxu0 0
        %2587 = vmatprep.subr.bf16.mxu0 0
        %2588 = vmatpush1.bf16.msra.mxu0 0
        %2589 = vmatprep.subr.bf16.mxu0 0
        %2590 = vmatpush1.bf16.msra.mxu0 0
        %2591 = vmatprep.mubr.bf16.mxu0 0
        %2592 = vmatmul.mubr.bf16.gmra.mrb[0].mxu0 %v2554
        %v2593 = vpop.f32.mrb[0].mxu0
        %v2594 = vadd.f32 0.0, %v2593
        %v2595 = vpop.f32.mrb[0].mxu0
        %v2596 = vpop.f32.mrb[0].mxu0
        %v2597 = vpop.f32.mrb[0].mxu0
        %2598 = vdwg.mxu0
        %2599 = vrot.lane.b32.xlu0 %v1109, 32
        %v2600 = vpop.permute.xlu0 %2599
        %v2602 = vsel %vm1203, %v2550, 0
        %v2605 = vsel %vm1231, %v2600, 0
        %2607 = vmatprep.subr.bf16.mxu0 0
        %2608 = vmatpush1.bf16.msra.mxu0 %v2605
        %2609 = vmatprep.subr.bf16.mxu0 0
        %2610 = vmatpush1.bf16.msra.mxu0 0
        %2611 = vmatprep.subr.bf16.mxu0 0
        %2612 = vmatpush1.bf16.msra.mxu0 0
        %2613 = vmatprep.subr.bf16.mxu0 0
        %2614 = vmatpush1.bf16.msra.mxu0 0
        %2615 = vmatprep.subr.bf16.mxu0 0
        %2616 = vmatpush1.bf16.msra.mxu0 0
        %2617 = vmatprep.subr.bf16.mxu0 0
        %2618 = vmatpush1.bf16.msra.mxu0 0
        %2619 = vmatprep.subr.bf16.mxu0 0
        %2620 = vmatpush1.bf16.msra.mxu0 0
        %2621 = vmatprep.subr.bf16.mxu0 0
        %2622 = vmatpush1.bf16.msra.mxu0 0
        %2623 = vmatprep.subr.bf16.mxu0 0
        %2624 = vmatpush1.bf16.msra.mxu0 0
        %2625 = vmatprep.subr.bf16.mxu0 0
        %2626 = vmatpush1.bf16.msra.mxu0 0
        %2627 = vmatprep.subr.bf16.mxu0 0
        %2628 = vmatpush1.bf16.msra.mxu0 0
        %2629 = vmatprep.subr.bf16.mxu0 0
        %2630 = vmatpush1.bf16.msra.mxu0 0
        %2631 = vmatprep.subr.bf16.mxu0 0
        %2632 = vmatpush1.bf16.msra.mxu0 0
        %2633 = vmatprep.subr.bf16.mxu0 0
        %2634 = vmatpush1.bf16.msra.mxu0 0
        %2635 = vmatprep.subr.bf16.mxu0 0
        %2636 = vmatpush1.bf16.msra.mxu0 0
        %2637 = vmatprep.subr.bf16.mxu0 0
        %2638 = vmatpush1.bf16.msra.mxu0 0
        %2639 = vmatprep.mubr.bf16.mxu0 0
        %2640 = vmatmul.mubr.bf16.gmra.mrb[0].mxu0 %v2602
        %v2641 = vpop.f32.mrb[0].mxu0
        %v2642 = vadd.f32 0.0, %v2641
        %v2643 = vpop.f32.mrb[0].mxu0
        %v2644 = vpop.f32.mrb[0].mxu0
        %v2645 = vpop.f32.mrb[0].mxu0
        %2646 = vdwg.mxu0
        %2647 = vrot.lane.b32.xlu0 %v1104, 16
        %v2648 = vpop.permute.xlu0 %2647
        %2649 = vrot.lane.b32.xlu0 %v1106, 16
        %v2650 = vpop.permute.xlu0 %2649
        %v2652 = vsel %vm1110, %v2648, 0
        %v2655 = vsel %vm1110, %v2650, 0
        %2657 = vmatprep.subr.bf16.mxu0 0
        %2658 = vmatpush1.bf16.xpose.msra.mxu0 %v2655
        %2659 = vmatprep.subr.bf16.mxu0 0
        %2660 = vmatpush1.bf16.xpose.msra.mxu0 0
        %2661 = vmatprep.subr.bf16.mxu0 0
        %2662 = vmatpush1.bf16.xpose.msra.mxu0 0
        %2663 = vmatprep.subr.bf16.mxu0 0
        %2664 = vmatpush1.bf16.xpose.msra.mxu0 0
        %2665 = vmatprep.subr.bf16.mxu0 0
        %2666 = vmatpush1.bf16.xpose.msra.mxu0 0
        %2667 = vmatprep.subr.bf16.mxu0 0
        %2668 = vmatpush1.bf16.xpose.msra.mxu0 0
        %2669 = vmatprep.subr.bf16.mxu0 0
        %2670 = vmatpush1.bf16.xpose.msra.mxu0 0
        %2671 = vmatprep.subr.bf16.mxu0 0
        %2672 = vmatpush1.bf16.xpose.msra.mxu0 0
        %2673 = vmatprep.subr.bf16.mxu0 0
        %2674 = vmatpush1.bf16.xpose.msra.mxu0 0
        %2675 = vmatprep.subr.bf16.mxu0 0
        %2676 = vmatpush1.bf16.xpose.msra.mxu0 0
        %2677 = vmatprep.subr.bf16.mxu0 0
        %2678 = vmatpush1.bf16.xpose.msra.mxu0 0
        %2679 = vmatprep.subr.bf16.mxu0 0
        %2680 = vmatpush1.bf16.xpose.msra.mxu0 0
        %2681 = vmatprep.subr.bf16.mxu0 0
        %2682 = vmatpush1.bf16.xpose.msra.mxu0 0
        %2683 = vmatprep.subr.bf16.mxu0 0
        %2684 = vmatpush1.bf16.xpose.msra.mxu0 0
        %2685 = vmatprep.subr.bf16.mxu0 0
        %2686 = vmatpush1.bf16.xpose.msra.mxu0 0
        %2687 = vmatprep.subr.bf16.mxu0 0
        %2688 = vmatpush1.bf16.xpose.msra.mxu0 0
        %2689 = vmatprep.mubr.bf16.mxu0 0
        %2690 = vmatmul.mubr.bf16.gmra.mrb[0].mxu0 %v2652
        %v2691 = vpop.f32.mrb[0].mxu0
        %v2692 = vadd.f32 0.0, %v2691
        %v2693 = vpop.f32.mrb[0].mxu0
        %v2694 = vpop.f32.mrb[0].mxu0
        %v2695 = vpop.f32.mrb[0].mxu0
        %2696 = vdwg.mxu0
        %2697 = vrot.lane.b32.xlu0 %v1105, 16
        %v2698 = vpop.permute.xlu0 %2697
        %2699 = vrot.lane.b32.xlu0 %v1107, 16
        %v2700 = vpop.permute.xlu0 %2699
        %v2702 = vsel %vm1110, %v2698, 0
        %v2705 = vsel %vm1110, %v2700, 0
        %2707 = vmatprep.subr.bf16.mxu0 0
        %2708 = vmatpush1.bf16.xpose.msra.mxu0 %v2705
        %2709 = vmatprep.subr.bf16.mxu0 0
        %2710 = vmatpush1.bf16.xpose.msra.mxu0 0
        %2711 = vmatprep.subr.bf16.mxu0 0
        %2712 = vmatpush1.bf16.xpose.msra.mxu0 0
        %2713 = vmatprep.subr.bf16.mxu0 0
        %2714 = vmatpush1.bf16.xpose.msra.mxu0 0
        %2715 = vmatprep.subr.bf16.mxu0 0
        %2716 = vmatpush1.bf16.xpose.msra.mxu0 0
        %2717 = vmatprep.subr.bf16.mxu0 0
        %2718 = vmatpush1.bf16.xpose.msra.mxu0 0
        %2719 = vmatprep.subr.bf16.mxu0 0
        %2720 = vmatpush1.bf16.xpose.msra.mxu0 0
        %2721 = vmatprep.subr.bf16.mxu0 0
        %2722 = vmatpush1.bf16.xpose.msra.mxu0 0
        %2723 = vmatprep.subr.bf16.mxu0 0
        %2724 = vmatpush1.bf16.xpose.msra.mxu0 0
        %2725 = vmatprep.subr.bf16.mxu0 0
        %2726 = vmatpush1.bf16.xpose.msra.mxu0 0
        %2727 = vmatprep.subr.bf16.mxu0 0
        %2728 = vmatpush1.bf16.xpose.msra.mxu0 0
        %2729 = vmatprep.subr.bf16.mxu0 0
        %2730 = vmatpush1.bf16.xpose.msra.mxu0 0
        %2731 = vmatprep.subr.bf16.mxu0 0
        %2732 = vmatpush1.bf16.xpose.msra.mxu0 0
        %2733 = vmatprep.subr.bf16.mxu0 0
        %2734 = vmatpush1.bf16.xpose.msra.mxu0 0
        %2735 = vmatprep.subr.bf16.mxu0 0
        %2736 = vmatpush1.bf16.xpose.msra.mxu0 0
        %2737 = vmatprep.subr.bf16.mxu0 0
        %2738 = vmatpush1.bf16.xpose.msra.mxu0 0
        %2739 = vmatprep.mubr.bf16.mxu0 0
        %2740 = vmatmul.mubr.bf16.gmra.mrb[0].mxu0 %v2702
        %v2741 = vpop.f32.mrb[0].mxu0
        %v2742 = vadd.f32 0.0, %v2741
        %v2743 = vpop.f32.mrb[0].mxu0
        %v2744 = vpop.f32.mrb[0].mxu0
        %v2745 = vpop.f32.mrb[0].mxu0
        %2746 = vdwg.mxu0
        %v2747 = vsel %vm1203, %v2692, -inf
        %2748 = vmax.xlane.f32.xlu0 %v2747
        %v2749 = vpop.xlane.xlu0 %2748
        %v2750 = vsel %vm1203, %v2742, -inf
        %2751 = vmax.xlane.f32.xlu0 %v2750
        %v2752 = vpop.xlane.xlu0 %2751
        %v2753 = vsub.f32 %v2692, %v2749
        %v2754 = vsub.f32 %v2742, %v2752
        %v2755 = vmul.f32 %v2753, 1.442695
        %v2756 = vpow.pop %v2755
        %v2757 = vmul.f32 %v2754, 1.442695
        %v2758 = vpow.pop %v2757
        %v2759 = vsel %vm1203, %v2756, 0.0
        %2760 = vadd.xlane.f32.xlu0 %v2759
        %v2761 = vpop.xlane.xlu0 %2760
        %v2762 = vsel %vm1203, %v2758, 0.0
        %2763 = vadd.xlane.f32.xlu0 %v2762
        %v2764 = vpop.xlane.xlu0 %2763
        %v2765 = vrcp.pop %v2761
        %v2766 = vrcp.pop %v2764
        %v2767 = vmul.f32 %v2756, %v2765
        %v2768 = vmul.f32 %v2758, %v2766
        %v2769 = vpack.c.bf16 %v2767, %v2767
        %v2770 = vpack.c.bf16 %v2768, %v2768
        %2771 = vrot.lane.b32.xlu0 %v1108, 16
        %v2772 = vpop.permute.xlu0 %2771
        %v2774 = vsel %vm1203, %v2769, 0
        %v2777 = vsel %vm1231, %v2772, 0
        %2779 = vmatprep.subr.bf16.mxu0 0
        %2780 = vmatpush1.bf16.msra.mxu0 %v2777
        %2781 = vmatprep.subr.bf16.mxu0 0
        %2782 = vmatpush1.bf16.msra.mxu0 0
        %2783 = vmatprep.subr.bf16.mxu0 0
        %2784 = vmatpush1.bf16.msra.mxu0 0
        %2785 = vmatprep.subr.bf16.mxu0 0
        %2786 = vmatpush1.bf16.msra.mxu0 0
        %2787 = vmatprep.subr.bf16.mxu0 0
        %2788 = vmatpush1.bf16.msra.mxu0 0
        %2789 = vmatprep.subr.bf16.mxu0 0
        %2790 = vmatpush1.bf16.msra.mxu0 0
        %2791 = vmatprep.subr.bf16.mxu0 0
        %2792 = vmatpush1.bf16.msra.mxu0 0
        %2793 = vmatprep.subr.bf16.mxu0 0
        %2794 = vmatpush1.bf16.msra.mxu0 0
        %2795 = vmatprep.subr.bf16.mxu0 0
        %2796 = vmatpush1.bf16.msra.mxu0 0
        %2797 = vmatprep.subr.bf16.mxu0 0
        %2798 = vmatpush1.bf16.msra.mxu0 0
        %2799 = vmatprep.subr.bf16.mxu0 0
        %2800 = vmatpush1.bf16.msra.mxu0 0
        %2801 = vmatprep.subr.bf16.mxu0 0
        %2802 = vmatpush1.bf16.msra.mxu0 0
        %2803 = vmatprep.subr.bf16.mxu0 0
        %2804 = vmatpush1.bf16.msra.mxu0 0
        %2805 = vmatprep.subr.bf16.mxu0 0
        %2806 = vmatpush1.bf16.msra.mxu0 0
        %2807 = vmatprep.subr.bf16.mxu0 0
        %2808 = vmatpush1.bf16.msra.mxu0 0
        %2809 = vmatprep.subr.bf16.mxu0 0
        %2810 = vmatpush1.bf16.msra.mxu0 0
        %2811 = vmatprep.mubr.bf16.mxu0 0
        %2812 = vmatmul.mubr.bf16.gmra.mrb[0].mxu0 %v2774
        %v2813 = vpop.f32.mrb[0].mxu0
        %v2814 = vadd.f32 0.0, %v2813
        %v2815 = vpop.f32.mrb[0].mxu0
        %v2816 = vpop.f32.mrb[0].mxu0
        %v2817 = vpop.f32.mrb[0].mxu0
        %2818 = vdwg.mxu0
        %2819 = vrot.lane.b32.xlu0 %v1109, 16
        %v2820 = vpop.permute.xlu0 %2819
        %v2822 = vsel %vm1203, %v2770, 0
        %v2825 = vsel %vm1231, %v2820, 0
        %2827 = vmatprep.subr.bf16.mxu0 0
        %2828 = vmatpush1.bf16.msra.mxu0 %v2825
        %2829 = vmatprep.subr.bf16.mxu0 0
        %2830 = vmatpush1.bf16.msra.mxu0 0
        %2831 = vmatprep.subr.bf16.mxu0 0
        %2832 = vmatpush1.bf16.msra.mxu0 0
        %2833 = vmatprep.subr.bf16.mxu0 0
        %2834 = vmatpush1.bf16.msra.mxu0 0
        %2835 = vmatprep.subr.bf16.mxu0 0
        %2836 = vmatpush1.bf16.msra.mxu0 0
        %2837 = vmatprep.subr.bf16.mxu0 0
        %2838 = vmatpush1.bf16.msra.mxu0 0
        %2839 = vmatprep.subr.bf16.mxu0 0
        %2840 = vmatpush1.bf16.msra.mxu0 0
        %2841 = vmatprep.subr.bf16.mxu0 0
        %2842 = vmatpush1.bf16.msra.mxu0 0
        %2843 = vmatprep.subr.bf16.mxu0 0
        %2844 = vmatpush1.bf16.msra.mxu0 0
        %2845 = vmatprep.subr.bf16.mxu0 0
        %2846 = vmatpush1.bf16.msra.mxu0 0
        %2847 = vmatprep.subr.bf16.mxu0 0
        %2848 = vmatpush1.bf16.msra.mxu0 0
        %2849 = vmatprep.subr.bf16.mxu0 0
        %2850 = vmatpush1.bf16.msra.mxu0 0
        %2851 = vmatprep.subr.bf16.mxu0 0
        %2852 = vmatpush1.bf16.msra.mxu0 0
        %2853 = vmatprep.subr.bf16.mxu0 0
        %2854 = vmatpush1.bf16.msra.mxu0 0
        %2855 = vmatprep.subr.bf16.mxu0 0
        %2856 = vmatpush1.bf16.msra.mxu0 0
        %2857 = vmatprep.subr.bf16.mxu0 0
        %2858 = vmatpush1.bf16.msra.mxu0 0
        %2859 = vmatprep.mubr.bf16.mxu0 0
        %2860 = vmatmul.mubr.bf16.gmra.mrb[0].mxu0 %v2822
        %v2861 = vpop.f32.mrb[0].mxu0
        %v2862 = vadd.f32 0.0, %v2861
        %v2863 = vpop.f32.mrb[0].mxu0
        %v2864 = vpop.f32.mrb[0].mxu0
        %v2865 = vpop.f32.mrb[0].mxu0
        %2866 = vdwg.mxu0
        %2869 = vrot.lane.b32.xlu0 %v1493, 16
        %v2870 = vpop.permute.xlu0 %2869
        %2871 = vrot.lane.b32.xlu0 %v1542, 16
        %v2872 = vpop.permute.xlu0 %2871
        %2877 = vrot.lane.b32.xlu0 %v1714, 32
        %v2878 = vpop.permute.xlu0 %2877
        %2879 = vrot.lane.b32.xlu0 %v1762, 32
        %v2880 = vpop.permute.xlu0 %2879
        %2885 = vrot.lane.b32.xlu0 %v1934, 48
        %v2886 = vpop.permute.xlu0 %2885
        %2887 = vrot.lane.b32.xlu0 %v1982, 48
        %v2888 = vpop.permute.xlu0 %2887
        %2893 = vrot.lane.b32.xlu0 %v2154, 64
        %v2894 = vpop.permute.xlu0 %2893
        %2895 = vrot.lane.b32.xlu0 %v2202, 64
        %v2896 = vpop.permute.xlu0 %2895
        %2901 = vrot.lane.b32.xlu0 %v2374, 80
        %v2902 = vpop.permute.xlu0 %2901
        %2903 = vrot.lane.b32.xlu0 %v2422, 80
        %v2904 = vpop.permute.xlu0 %2903
        %2909 = vrot.lane.b32.xlu0 %v2594, 96
        %v2910 = vpop.permute.xlu0 %2909
        %2911 = vrot.lane.b32.xlu0 %v2642, 96
        %v2912 = vpop.permute.xlu0 %2911
        %2917 = vrot.lane.b32.xlu0 %v2814, 112
        %v2918 = vpop.permute.xlu0 %2917
        %2919 = vrot.lane.b32.xlu0 %v2862, 112
        %v2920 = vpop.permute.xlu0 %2919
        %v2923 = vsel %vm1110, %v1270, %v2870
        %v2924 = vsel %vm1110, %v1316, %v2872
        %vm2925 = vcmask 261120
        %v2926 = vsel %vm2925, %v2923, %v2878
        %v2927 = vsel %vm2925, %v2924, %v2880
        %vm2928 = vcmask 392192
        %v2929 = vsel %vm2928, %v2926, %v2886
        %v2930 = vsel %vm2928, %v2927, %v2888
        %vm2931 = vcmask 523264
        %v2932 = vsel %vm2931, %v2929, %v2894
        %v2933 = vsel %vm2931, %v2930, %v2896
        %vm2934 = vcmask 654336
        %v2935 = vsel %vm2934, %v2932, %v2902
        %v2936 = vsel %vm2934, %v2933, %v2904
        %vm2937 = vcmask 785408
        %v2938 = vsel %vm2937, %v2935, %v2910
        %v2939 = vsel %vm2937, %v2936, %v2912
        %vm2940 = vcmask 916480
        %v2941 = vsel %vm2940, %v2938, %v2918
        %v2942 = vsel %vm2940, %v2939, %v2920
        %v2943 = vpack.c.bf16 %v2942, %v2941
        %v2944 = vld [vmem:[%s669] sm:$0xf]
        %v2945 = vld [vmem:[%s669 + $0x4] sm:$0xf]
        %v2946 = vld [vmem:[%s669 + $0x8] sm:$0xf]
        %v2947 = vld [vmem:[%s669 + $0xc] sm:$0xf]
        %v2948 = vld [vmem:[%s669 + $0x10] sm:$0xf]
        %v2949 = vld [vmem:[%s669 + $0x14] sm:$0xf]
        %v2950 = vld [vmem:[%s669 + $0x18] sm:$0xf]
        %v2951 = vld [vmem:[%s669 + $0x1c] sm:$0xf]
        %v2952 = vld [vmem:[%s669 + $0x20] sm:$0xf]
        %v2953 = vld [vmem:[%s669 + $0x24] sm:$0xf]
        %v2954 = vld [vmem:[%s669 + $0x28] sm:$0xf]
        %v2955 = vld [vmem:[%s669 + $0x2c] sm:$0xf]
        %v2956 = vld [vmem:[%s669 + $0x30] sm:$0xf]
        %v2957 = vld [vmem:[%s669 + $0x34] sm:$0xf]
        %v2958 = vld [vmem:[%s669 + $0x38] sm:$0xf]
        %v2959 = vld [vmem:[%s669 + $0x3c] sm:$0xf]
        %v2960 = vld [vmem:[%s677] sm:$0x1]
        %v2962 = vlaneseq
        %v2963 = vshrl.u32 %v2962, 7
        %v2964 = vsub.s32 0, %v2963
        %v2965 = vrot.slane %v2960, %v2964
        %v2983 = vunpack.c.l.b16 %v2944
        %v2984 = vunpack.c.l.b16 %v2945
        %v2985 = vunpack.c.l.b16 %v2946
        %v2986 = vunpack.c.l.b16 %v2947
        %v2987 = vunpack.c.l.b16 %v2948
        %v2988 = vunpack.c.l.b16 %v2949
        %v2989 = vunpack.c.l.b16 %v2950
        %v2990 = vunpack.c.l.b16 %v2951
        %v2991 = vunpack.c.l.b16 %v2952
        %v2992 = vunpack.c.l.b16 %v2953
        %v2993 = vunpack.c.l.b16 %v2954
        %v2994 = vunpack.c.l.b16 %v2955
        %v2995 = vunpack.c.l.b16 %v2956
        %v2996 = vunpack.c.l.b16 %v2957
        %v2997 = vunpack.c.l.b16 %v2958
        %v2998 = vunpack.c.l.b16 %v2959
        %v2999 = vpack.c.b16 %v2984, %v2983
        %v3000 = vpack.c.b16 %v2986, %v2985
        %v3001 = vpack.c.b16 %v2988, %v2987
        %v3002 = vpack.c.b16 %v2990, %v2989
        %v3003 = vpack.c.b16 %v2992, %v2991
        %v3004 = vpack.c.b16 %v2994, %v2993
        %v3005 = vpack.c.b16 %v2996, %v2995
        %v3006 = vpack.c.b16 %v2998, %v2997
        %3015 = vmatprep.subr.bf16.mxu0 0
        %3016 = vmatpush1.bf16.msra.mxu0 %v2999
        %3017 = vmatprep.subr.bf16.mxu0 0
        %3018 = vmatpush1.bf16.msra.mxu0 %v3000
        %3019 = vmatprep.subr.bf16.mxu0 0
        %3020 = vmatpush1.bf16.msra.mxu0 %v3001
        %3021 = vmatprep.subr.bf16.mxu0 0
        %3022 = vmatpush1.bf16.msra.mxu0 %v3002
        %3023 = vmatprep.subr.bf16.mxu0 0
        %3024 = vmatpush1.bf16.msra.mxu0 %v3003
        %3025 = vmatprep.subr.bf16.mxu0 0
        %3026 = vmatpush1.bf16.msra.mxu0 %v3004
        %3027 = vmatprep.subr.bf16.mxu0 0
        %3028 = vmatpush1.bf16.msra.mxu0 %v3005
        %3029 = vmatprep.subr.bf16.mxu0 0
        %3030 = vmatpush1.bf16.msra.mxu0 %v3006
        %3031 = vmatprep.subr.bf16.mxu0 0
        %3032 = vmatpush1.bf16.msra.mxu0 0
        %3033 = vmatprep.subr.bf16.mxu0 0
        %3034 = vmatpush1.bf16.msra.mxu0 0
        %3035 = vmatprep.subr.bf16.mxu0 0
        %3036 = vmatpush1.bf16.msra.mxu0 0
        %3037 = vmatprep.subr.bf16.mxu0 0
        %3038 = vmatpush1.bf16.msra.mxu0 0
        %3039 = vmatprep.subr.bf16.mxu0 0
        %3040 = vmatpush1.bf16.msra.mxu0 0
        %3041 = vmatprep.subr.bf16.mxu0 0
        %3042 = vmatpush1.bf16.msra.mxu0 0
        %3043 = vmatprep.subr.bf16.mxu0 0
        %3044 = vmatpush1.bf16.msra.mxu0 0
        %3045 = vmatprep.subr.bf16.mxu0 0
        %3046 = vmatpush1.bf16.msra.mxu0 0
        %3047 = vmatprep.mubr.bf16.mxu0 0
        %3048 = vmatmul.mubr.bf16.gmra.mrb[0].mxu0 %v2943
        %v3049 = vpop.f32.mrb[0].mxu0
        %v3050 = vadd.f32 %v2965, %v3049
        %v3051 = vpop.f32.mrb[0].mxu0
        %v3052 = vpop.f32.mrb[0].mxu0
        %v3053 = vadd.f32 %v2965, %v3052
        %v3054 = vpop.f32.mrb[0].mxu0
        %3055 = vdwg.mxu0
        %v3056 = vadd.f32 %v840, %v3050
        %v3057 = vadd.f32 %v841, %v3053
        %v3058 = vld [vmem:[%s685] sm:$0x1]
        %v3059 = vld [vmem:[%s693] sm:$0x1]
        %3060 = vadd.xlane.f32.xlu0 %v3056
        %v3061 = vpop.xlane.xlu0 %3060
        %3062 = vadd.xlane.f32.xlu0 %v3057
        %v3063 = vpop.xlane.xlu0 %3062
        %v3064 = vrcp.pop 128.0
        %v3065 = vmul.f32 %v3061, %v3064
        %v3066 = vmul.f32 %v3063, %v3064
        %v3067 = vsub.f32 %v3056, %v3065
        %v3068 = vsub.f32 %v3057, %v3066
        %v3069 = vmul.f32 %v3067, %v3067
        %v3070 = vmul.f32 %v3068, %v3068
        %3071 = vadd.xlane.f32.xlu0 %v3069
        %v3072 = vpop.xlane.xlu0 %3071
        %3073 = vadd.xlane.f32.xlu0 %v3070
        %v3074 = vpop.xlane.xlu0 %3073
        %v3075 = vmul.f32 %v3072, %v3064
        %v3076 = vmul.f32 %v3074, %v3064
        %v3077 = vadd.f32 %v3075, 1e-05
        %v3078 = vadd.f32 %v3076, 1e-05
        %v3079 = vrsqrt.pop %v3077
        %v3080 = vrsqrt.pop %v3078
        %v3081 = vmul.f32 %v3067, %v3079
        %v3082 = vmul.f32 %v3068, %v3080
        %v3084 = vlaneseq
        %v3085 = vshrl.u32 %v3084, 7
        %v3086 = vsub.s32 0, %v3085
        %v3087 = vrot.slane %v3058, %v3086
        %v3089 = vmul.f32 %v3081, %v3087
        %v3090 = vmul.f32 %v3082, %v3087
        %v3092 = vlaneseq
        %v3093 = vshrl.u32 %v3092, 7
        %v3094 = vsub.s32 0, %v3093
        %v3095 = vrot.slane %v3059, %v3094
        %v3097 = vadd.f32 %v3089, %v3095
        %v3098 = vadd.f32 %v3090, %v3095
        %v3099 = vpack.c.bf16 %v3098, %v3097
        %v3100 = vld [vmem:[%s702] sm:$0xff]
        %v3101 = vld [vmem:[%s702 + $0x8] sm:$0xff]
        %v3102 = vld [vmem:[%s702 + $0x10] sm:$0xff]
        %v3103 = vld [vmem:[%s702 + $0x18] sm:$0xff]
        %v3104 = vld [vmem:[%s702 + $0x20] sm:$0xff]
        %v3105 = vld [vmem:[%s702 + $0x28] sm:$0xff]
        %v3106 = vld [vmem:[%s702 + $0x30] sm:$0xff]
        %v3107 = vld [vmem:[%s702 + $0x38] sm:$0xff]
        %v3108 = vld [vmem:[%s702 + $0x40] sm:$0xff]
        %v3109 = vld [vmem:[%s702 + $0x48] sm:$0xff]
        %v3110 = vld [vmem:[%s702 + $0x50] sm:$0xff]
        %v3111 = vld [vmem:[%s702 + $0x58] sm:$0xff]
        %v3112 = vld [vmem:[%s702 + $0x60] sm:$0xff]
        %v3113 = vld [vmem:[%s702 + $0x68] sm:$0xff]
        %v3114 = vld [vmem:[%s702 + $0x70] sm:$0xff]
        %v3115 = vld [vmem:[%s702 + $0x78] sm:$0xff]
        %v3116 = vld [vmem:[%s702 + $0x80] sm:$0xff]
        %v3117 = vld [vmem:[%s702 + $0x88] sm:$0xff]
        %v3118 = vld [vmem:[%s702 + $0x90] sm:$0xff]
        %v3119 = vld [vmem:[%s702 + $0x98] sm:$0xff]
        %v3120 = vld [vmem:[%s702 + $0xa0] sm:$0xff]
        %v3121 = vld [vmem:[%s702 + $0xa8] sm:$0xff]
        %v3122 = vld [vmem:[%s702 + $0xb0] sm:$0xff]
        %v3123 = vld [vmem:[%s702 + $0xb8] sm:$0xff]
        %v3124 = vld [vmem:[%s702 + $0xc0] sm:$0xff]
        %v3125 = vld [vmem:[%s702 + $0xc8] sm:$0xff]
        %v3126 = vld [vmem:[%s702 + $0xd0] sm:$0xff]
        %v3127 = vld [vmem:[%s702 + $0xd8] sm:$0xff]
        %v3128 = vld [vmem:[%s702 + $0xe0] sm:$0xff]
        %v3129 = vld [vmem:[%s702 + $0xe8] sm:$0xff]
        %v3130 = vld [vmem:[%s702 + $0xf0] sm:$0xff]
        %v3131 = vld [vmem:[%s702 + $0xf8] sm:$0xff]
        %v3132 = vld [vmem:[%s711] sm:$0xf]
        %v3134 = vlaneseq
        %v3135 = vshrl.u32 %v3134, 7
        %v3136 = vsub.s32 0, %v3135
        %v3137 = vrot.slane %v3132, %v3136
        %v3138 = vlaneseq
        %v3139 = vshrl.u32 %v3138, 7
        %v3140 = vsub.s32 1, %v3139
        %v3141 = vrot.slane %v3132, %v3140
        %v3142 = vlaneseq
        %v3143 = vshrl.u32 %v3142, 7
        %v3144 = vsub.s32 2, %v3143
        %v3145 = vrot.slane %v3132, %v3144
        %v3146 = vlaneseq
        %v3147 = vshrl.u32 %v3146, 7
        %v3148 = vsub.s32 3, %v3147
        %v3149 = vrot.slane %v3132, %v3148
        %v3186 = vunpack.c.l.b16 %v3100
        %v3187 = vunpack.c.h.b16 %v3100
        %v3188 = vunpack.c.l.b16 %v3101
        %v3189 = vunpack.c.h.b16 %v3101
        %v3190 = vunpack.c.l.b16 %v3102
        %v3191 = vunpack.c.h.b16 %v3102
        %v3192 = vunpack.c.l.b16 %v3103
        %v3193 = vunpack.c.h.b16 %v3103
        %v3194 = vunpack.c.l.b16 %v3104
        %v3195 = vunpack.c.h.b16 %v3104
        %v3196 = vunpack.c.l.b16 %v3105
        %v3197 = vunpack.c.h.b16 %v3105
        %v3198 = vunpack.c.l.b16 %v3106
        %v3199 = vunpack.c.h.b16 %v3106
        %v3200 = vunpack.c.l.b16 %v3107
        %v3201 = vunpack.c.h.b16 %v3107
        %v3202 = vunpack.c.l.b16 %v3108
        %v3203 = vunpack.c.h.b16 %v3108
        %v3204 = vunpack.c.l.b16 %v3109
        %v3205 = vunpack.c.h.b16 %v3109
        %v3206 = vunpack.c.l.b16 %v3110
        %v3207 = vunpack.c.h.b16 %v3110
        %v3208 = vunpack.c.l.b16 %v3111
        %v3209 = vunpack.c.h.b16 %v3111
        %v3210 = vunpack.c.l.b16 %v3112
        %v3211 = vunpack.c.h.b16 %v3112
        %v3212 = vunpack.c.l.b16 %v3113
        %v3213 = vunpack.c.h.b16 %v3113
        %v3214 = vunpack.c.l.b16 %v3114
        %v3215 = vunpack.c.h.b16 %v3114
        %v3216 = vunpack.c.l.b16 %v3115
        %v3217 = vunpack.c.h.b16 %v3115
        %v3218 = vunpack.c.l.b16 %v3116
        %v3219 = vunpack.c.h.b16 %v3116
        %v3220 = vunpack.c.l.b16 %v3117
        %v3221 = vunpack.c.h.b16 %v3117
        %v3222 = vunpack.c.l.b16 %v3118
        %v3223 = vunpack.c.h.b16 %v3118
        %v3224 = vunpack.c.l.b16 %v3119
        %v3225 = vunpack.c.h.b16 %v3119
        %v3226 = vunpack.c.l.b16 %v3120
        %v3227 = vunpack.c.h.b16 %v3120
        %v3228 = vunpack.c.l.b16 %v3121
        %v3229 = vunpack.c.h.b16 %v3121
        %v3230 = vunpack.c.l.b16 %v3122
        %v3231 = vunpack.c.h.b16 %v3122
        %v3232 = vunpack.c.l.b16 %v3123
        %v3233 = vunpack.c.h.b16 %v3123
        %v3234 = vunpack.c.l.b16 %v3124
        %v3235 = vunpack.c.h.b16 %v3124
        %v3236 = vunpack.c.l.b16 %v3125
        %v3237 = vunpack.c.h.b16 %v3125
        %v3238 = vunpack.c.l.b16 %v3126
        %v3239 = vunpack.c.h.b16 %v3126
        %v3240 = vunpack.c.l.b16 %v3127
        %v3241 = vunpack.c.h.b16 %v3127
        %v3242 = vunpack.c.l.b16 %v3128
        %v3243 = vunpack.c.h.b16 %v3128
        %v3244 = vunpack.c.l.b16 %v3129
        %v3245 = vunpack.c.h.b16 %v3129
        %v3246 = vunpack.c.l.b16 %v3130
        %v3247 = vunpack.c.h.b16 %v3130
        %v3248 = vunpack.c.l.b16 %v3131
        %v3249 = vunpack.c.h.b16 %v3131
        %v3250 = vpack.c.b16 %v3190, %v3186
        %v3251 = vpack.c.b16 %v3191, %v3187
        %v3252 = vpack.c.b16 %v3192, %v3188
        %v3253 = vpack.c.b16 %v3193, %v3189
        %v3254 = vpack.c.b16 %v3198, %v3194
        %v3255 = vpack.c.b16 %v3199, %v3195
        %v3256 = vpack.c.b16 %v3200, %v3196
        %v3257 = vpack.c.b16 %v3201, %v3197
        %v3258 = vpack.c.b16 %v3206, %v3202
        %v3259 = vpack.c.b16 %v3207, %v3203
        %v3260 = vpack.c.b16 %v3208, %v3204
        %v3261 = vpack.c.b16 %v3209, %v3205
        %v3262 = vpack.c.b16 %v3214, %v3210
        %v3263 = vpack.c.b16 %v3215, %v3211
        %v3264 = vpack.c.b16 %v3216, %v3212
        %v3265 = vpack.c.b16 %v3217, %v3213
        %v3266 = vpack.c.b16 %v3222, %v3218
        %v3267 = vpack.c.b16 %v3223, %v3219
        %v3268 = vpack.c.b16 %v3224, %v3220
        %v3269 = vpack.c.b16 %v3225, %v3221
        %v3270 = vpack.c.b16 %v3230, %v3226
        %v3271 = vpack.c.b16 %v3231, %v3227
        %v3272 = vpack.c.b16 %v3232, %v3228
        %v3273 = vpack.c.b16 %v3233, %v3229
        %v3274 = vpack.c.b16 %v3238, %v3234
        %v3275 = vpack.c.b16 %v3239, %v3235
        %v3276 = vpack.c.b16 %v3240, %v3236
        %v3277 = vpack.c.b16 %v3241, %v3237
        %v3278 = vpack.c.b16 %v3246, %v3242
        %v3279 = vpack.c.b16 %v3247, %v3243
        %v3280 = vpack.c.b16 %v3248, %v3244
        %v3281 = vpack.c.b16 %v3249, %v3245
        %3314 = vmatprep.subr.bf16.mxu0 %v3251
        %3315 = vmatpush1.bf16.msra.mxu0 %v3250
        %3316 = vmatprep.subr.bf16.mxu0 %v3255
        %3317 = vmatpush1.bf16.msra.mxu0 %v3254
        %3318 = vmatprep.subr.bf16.mxu0 %v3259
        %3319 = vmatpush1.bf16.msra.mxu0 %v3258
        %3320 = vmatprep.subr.bf16.mxu0 %v3263
        %3321 = vmatpush1.bf16.msra.mxu0 %v3262
        %3322 = vmatprep.subr.bf16.mxu0 %v3267
        %3323 = vmatpush1.bf16.msra.mxu0 %v3266
        %3324 = vmatprep.subr.bf16.mxu0 %v3271
        %3325 = vmatpush1.bf16.msra.mxu0 %v3270
        %3326 = vmatprep.subr.bf16.mxu0 %v3275
        %3327 = vmatpush1.bf16.msra.mxu0 %v3274
        %3328 = vmatprep.subr.bf16.mxu0 %v3279
        %3329 = vmatpush1.bf16.msra.mxu0 %v3278
        %3330 = vmatprep.subr.bf16.mxu0 0
        %3331 = vmatpush1.bf16.msra.mxu0 0
        %3332 = vmatprep.subr.bf16.mxu0 0
        %3333 = vmatpush1.bf16.msra.mxu0 0
        %3334 = vmatprep.subr.bf16.mxu0 0
        %3335 = vmatpush1.bf16.msra.mxu0 0
        %3336 = vmatprep.subr.bf16.mxu0 0
        %3337 = vmatpush1.bf16.msra.mxu0 0
        %3338 = vmatprep.subr.bf16.mxu0 0
        %3339 = vmatpush1.bf16.msra.mxu0 0
        %3340 = vmatprep.subr.bf16.mxu0 0
        %3341 = vmatpush1.bf16.msra.mxu0 0
        %3342 = vmatprep.subr.bf16.mxu0 0
        %3343 = vmatpush1.bf16.msra.mxu0 0
        %3344 = vmatprep.subr.bf16.mxu0 0
        %3345 = vmatpush1.bf16.msra.mxu0 0
        %3346 = vmatprep.mubr.bf16.mxu0 0
        %3347 = vmatmul.mubr.bf16.gmra.mrb[0].mxu0 %v3099
        %v3348 = vpop.f32.mrb[0].mxu0
        %v3349 = vadd.f32 %v3137, %v3348
        %v3350 = vpop.f32.mrb[0].mxu0
        %v3351 = vadd.f32 %v3141, %v3350
        %v3352 = vpop.f32.mrb[0].mxu0
        %v3353 = vadd.f32 %v3137, %v3352
        %v3354 = vpop.f32.mrb[0].mxu0
        %v3355 = vadd.f32 %v3141, %v3354
        %3356 = vdwg.mxu0
        %3357 = vmatprep.subr.bf16.mxu0 %v3253
        %3358 = vmatpush1.bf16.msra.mxu0 %v3252
        %3359 = vmatprep.subr.bf16.mxu0 %v3257
        %3360 = vmatpush1.bf16.msra.mxu0 %v3256
        %3361 = vmatprep.subr.bf16.mxu0 %v3261
        %3362 = vmatpush1.bf16.msra.mxu0 %v3260
        %3363 = vmatprep.subr.bf16.mxu0 %v3265
        %3364 = vmatpush1.bf16.msra.mxu0 %v3264
        %3365 = vmatprep.subr.bf16.mxu0 %v3269
        %3366 = vmatpush1.bf16.msra.mxu0 %v3268
        %3367 = vmatprep.subr.bf16.mxu0 %v3273
        %3368 = vmatpush1.bf16.msra.mxu0 %v3272
        %3369 = vmatprep.subr.bf16.mxu0 %v3277
        %3370 = vmatpush1.bf16.msra.mxu0 %v3276
        %3371 = vmatprep.subr.bf16.mxu0 %v3281
        %3372 = vmatpush1.bf16.msra.mxu0 %v3280
        %3373 = vmatprep.subr.bf16.mxu0 0
        %3374 = vmatpush1.bf16.msra.mxu0 0
        %3375 = vmatprep.subr.bf16.mxu0 0
        %3376 = vmatpush1.bf16.msra.mxu0 0
        %3377 = vmatprep.subr.bf16.mxu0 0
        %3378 = vmatpush1.bf16.msra.mxu0 0
        %3379 = vmatprep.subr.bf16.mxu0 0
        %3380 = vmatpush1.bf16.msra.mxu0 0
        %3381 = vmatprep.subr.bf16.mxu0 0
        %3382 = vmatpush1.bf16.msra.mxu0 0
        %3383 = vmatprep.subr.bf16.mxu0 0
        %3384 = vmatpush1.bf16.msra.mxu0 0
        %3385 = vmatprep.subr.bf16.mxu0 0
        %3386 = vmatpush1.bf16.msra.mxu0 0
        %3387 = vmatprep.subr.bf16.mxu0 0
        %3388 = vmatpush1.bf16.msra.mxu0 0
        %3389 = vmatprep.mubr.bf16.mxu0 0
        %3390 = vmatmul.mubr.bf16.gmra.mrb[0].mxu0 %v3099
        %v3391 = vpop.f32.mrb[0].mxu0
        %v3392 = vadd.f32 %v3145, %v3391
        %v3393 = vpop.f32.mrb[0].mxu0
        %v3394 = vadd.f32 %v3149, %v3393
        %v3395 = vpop.f32.mrb[0].mxu0
        %v3396 = vadd.f32 %v3145, %v3395
        %v3397 = vpop.f32.mrb[0].mxu0
        %v3398 = vadd.f32 %v3149, %v3397
        %3399 = vdwg.mxu0
        %v3400 = vmax.f32 %v3349, 0.0
        %v3401 = vmax.f32 %v3351, 0.0
        %v3402 = vmax.f32 %v3392, 0.0
        %v3403 = vmax.f32 %v3394, 0.0
        %v3404 = vmax.f32 %v3353, 0.0
        %v3405 = vmax.f32 %v3355, 0.0
        %v3406 = vmax.f32 %v3396, 0.0
        %v3407 = vmax.f32 %v3398, 0.0
        %v3408 = vpack.c.bf16 %v3404, %v3400
        %v3409 = vpack.c.bf16 %v3405, %v3401
        %v3410 = vpack.c.bf16 %v3406, %v3402
        %v3411 = vpack.c.bf16 %v3407, %v3403
        %v3412 = vld [vmem:[%s720] sm:$0xf]
        %v3413 = vld [vmem:[%s720 + $0x4] sm:$0xf]
        %v3414 = vld [vmem:[%s720 + $0x8] sm:$0xf]
        %v3415 = vld [vmem:[%s720 + $0xc] sm:$0xf]
        %v3416 = vld [vmem:[%s720 + $0x10] sm:$0xf]
        %v3417 = vld [vmem:[%s720 + $0x14] sm:$0xf]
        %v3418 = vld [vmem:[%s720 + $0x18] sm:$0xf]
        %v3419 = vld [vmem:[%s720 + $0x1c] sm:$0xf]
        %v3420 = vld [vmem:[%s720 + $0x20] sm:$0xf]
        %v3421 = vld [vmem:[%s720 + $0x24] sm:$0xf]
        %v3422 = vld [vmem:[%s720 + $0x28] sm:$0xf]
        %v3423 = vld [vmem:[%s720 + $0x2c] sm:$0xf]
        %v3424 = vld [vmem:[%s720 + $0x30] sm:$0xf]
        %v3425 = vld [vmem:[%s720 + $0x34] sm:$0xf]
        %v3426 = vld [vmem:[%s720 + $0x38] sm:$0xf]
        %v3427 = vld [vmem:[%s720 + $0x3c] sm:$0xf]
        %v3428 = vld [vmem:[%s720 + $0x40] sm:$0xf]
        %v3429 = vld [vmem:[%s720 + $0x44] sm:$0xf]
        %v3430 = vld [vmem:[%s720 + $0x48] sm:$0xf]
        %v3431 = vld [vmem:[%s720 + $0x4c] sm:$0xf]
        %v3432 = vld [vmem:[%s720 + $0x50] sm:$0xf]
        %v3433 = vld [vmem:[%s720 + $0x54] sm:$0xf]
        %v3434 = vld [vmem:[%s720 + $0x58] sm:$0xf]
        %v3435 = vld [vmem:[%s720 + $0x5c] sm:$0xf]
        %v3436 = vld [vmem:[%s720 + $0x60] sm:$0xf]
        %v3437 = vld [vmem:[%s720 + $0x64] sm:$0xf]
        %v3438 = vld [vmem:[%s720 + $0x68] sm:$0xf]
        %v3439 = vld [vmem:[%s720 + $0x6c] sm:$0xf]
        %v3440 = vld [vmem:[%s720 + $0x70] sm:$0xf]
        %v3441 = vld [vmem:[%s720 + $0x74] sm:$0xf]
        %v3442 = vld [vmem:[%s720 + $0x78] sm:$0xf]
        %v3443 = vld [vmem:[%s720 + $0x7c] sm:$0xf]
        %v3444 = vld [vmem:[%s720 + $0x80] sm:$0xf]
        %v3445 = vld [vmem:[%s720 + $0x84] sm:$0xf]
        %v3446 = vld [vmem:[%s720 + $0x88] sm:$0xf]
        %v3447 = vld [vmem:[%s720 + $0x8c] sm:$0xf]
        %v3448 = vld [vmem:[%s720 + $0x90] sm:$0xf]
        %v3449 = vld [vmem:[%s720 + $0x94] sm:$0xf]
        %v3450 = vld [vmem:[%s720 + $0x98] sm:$0xf]
        %v3451 = vld [vmem:[%s720 + $0x9c] sm:$0xf]
        %v3452 = vld [vmem:[%s720 + $0xa0] sm:$0xf]
        %v3453 = vld [vmem:[%s720 + $0xa4] sm:$0xf]
        %v3454 = vld [vmem:[%s720 + $0xa8] sm:$0xf]
        %v3455 = vld [vmem:[%s720 + $0xac] sm:$0xf]
        %v3456 = vld [vmem:[%s720 + $0xb0] sm:$0xf]
        %v3457 = vld [vmem:[%s720 + $0xb4] sm:$0xf]
        %v3458 = vld [vmem:[%s720 + $0xb8] sm:$0xf]
        %v3459 = vld [vmem:[%s720 + $0xbc] sm:$0xf]
        %v3460 = vld [vmem:[%s720 + $0xc0] sm:$0xf]
        %v3461 = vld [vmem:[%s720 + $0xc4] sm:$0xf]
        %v3462 = vld [vmem:[%s720 + $0xc8] sm:$0xf]
        %v3463 = vld [vmem:[%s720 + $0xcc] sm:$0xf]
        %v3464 = vld [vmem:[%s720 + $0xd0] sm:$0xf]
        %v3465 = vld [vmem:[%s720 + $0xd4] sm:$0xf]
        %v3466 = vld [vmem:[%s720 + $0xd8] sm:$0xf]
        %v3467 = vld [vmem:[%s720 + $0xdc] sm:$0xf]
        %v3468 = vld [vmem:[%s720 + $0xe0] sm:$0xf]
        %v3469 = vld [vmem:[%s720 + $0xe4] sm:$0xf]
        %v3470 = vld [vmem:[%s720 + $0xe8] sm:$0xf]
        %v3471 = vld [vmem:[%s720 + $0xec] sm:$0xf]
        %v3472 = vld [vmem:[%s720 + $0xf0] sm:$0xf]
        %v3473 = vld [vmem:[%s720 + $0xf4] sm:$0xf]
        %v3474 = vld [vmem:[%s720 + $0xf8] sm:$0xf]
        %v3475 = vld [vmem:[%s720 + $0xfc] sm:$0xf]
        %v3476 = vld [vmem:[%s728] sm:$0x1]
        %v3478 = vlaneseq
        %v3479 = vshrl.u32 %v3478, 7
        %v3480 = vsub.s32 0, %v3479
        %v3481 = vrot.slane %v3476, %v3480
        %v3547 = vunpack.c.l.b16 %v3412
        %v3548 = vunpack.c.l.b16 %v3413
        %v3549 = vunpack.c.l.b16 %v3414
        %v3550 = vunpack.c.l.b16 %v3415
        %v3551 = vunpack.c.l.b16 %v3416
        %v3552 = vunpack.c.l.b16 %v3417
        %v3553 = vunpack.c.l.b16 %v3418
        %v3554 = vunpack.c.l.b16 %v3419
        %v3555 = vunpack.c.l.b16 %v3420
        %v3556 = vunpack.c.l.b16 %v3421
        %v3557 = vunpack.c.l.b16 %v3422
        %v3558 = vunpack.c.l.b16 %v3423
        %v3559 = vunpack.c.l.b16 %v3424
        %v3560 = vunpack.c.l.b16 %v3425
        %v3561 = vunpack.c.l.b16 %v3426
        %v3562 = vunpack.c.l.b16 %v3427
        %v3563 = vunpack.c.l.b16 %v3428
        %v3564 = vunpack.c.l.b16 %v3429
        %v3565 = vunpack.c.l.b16 %v3430
        %v3566 = vunpack.c.l.b16 %v3431
        %v3567 = vunpack.c.l.b16 %v3432
        %v3568 = vunpack.c.l.b16 %v3433
        %v3569 = vunpack.c.l.b16 %v3434
        %v3570 = vunpack.c.l.b16 %v3435
        %v3571 = vunpack.c.l.b16 %v3436
        %v3572 = vunpack.c.l.b16 %v3437
        %v3573 = vunpack.c.l.b16 %v3438
        %v3574 = vunpack.c.l.b16 %v3439
        %v3575 = vunpack.c.l.b16 %v3440
        %v3576 = vunpack.c.l.b16 %v3441
        %v3577 = vunpack.c.l.b16 %v3442
        %v3578 = vunpack.c.l.b16 %v3443
        %v3579 = vunpack.c.l.b16 %v3444
        %v3580 = vunpack.c.l.b16 %v3445
        %v3581 = vunpack.c.l.b16 %v3446
        %v3582 = vunpack.c.l.b16 %v3447
        %v3583 = vunpack.c.l.b16 %v3448
        %v3584 = vunpack.c.l.b16 %v3449
        %v3585 = vunpack.c.l.b16 %v3450
        %v3586 = vunpack.c.l.b16 %v3451
        %v3587 = vunpack.c.l.b16 %v3452
        %v3588 = vunpack.c.l.b16 %v3453
        %v3589 = vunpack.c.l.b16 %v3454
        %v3590 = vunpack.c.l.b16 %v3455
        %v3591 = vunpack.c.l.b16 %v3456
        %v3592 = vunpack.c.l.b16 %v3457
        %v3593 = vunpack.c.l.b16 %v3458
        %v3594 = vunpack.c.l.b16 %v3459
        %v3595 = vunpack.c.l.b16 %v3460
        %v3596 = vunpack.c.l.b16 %v3461
        %v3597 = vunpack.c.l.b16 %v3462
        %v3598 = vunpack.c.l.b16 %v3463
        %v3599 = vunpack.c.l.b16 %v3464
        %v3600 = vunpack.c.l.b16 %v3465
        %v3601 = vunpack.c.l.b16 %v3466
        %v3602 = vunpack.c.l.b16 %v3467
        %v3603 = vunpack.c.l.b16 %v3468
        %v3604 = vunpack.c.l.b16 %v3469
        %v3605 = vunpack.c.l.b16 %v3470
        %v3606 = vunpack.c.l.b16 %v3471
        %v3607 = vunpack.c.l.b16 %v3472
        %v3608 = vunpack.c.l.b16 %v3473
        %v3609 = vunpack.c.l.b16 %v3474
        %v3610 = vunpack.c.l.b16 %v3475
        %v3611 = vpack.c.b16 %v3548, %v3547
        %v3612 = vpack.c.b16 %v3550, %v3549
        %v3613 = vpack.c.b16 %v3552, %v3551
        %v3614 = vpack.c.b16 %v3554, %v3553
        %v3615 = vpack.c.b16 %v3556, %v3555
        %v3616 = vpack.c.b16 %v3558, %v3557
        %v3617 = vpack.c.b16 %v3560, %v3559
        %v3618 = vpack.c.b16 %v3562, %v3561
        %v3619 = vpack.c.b16 %v3564, %v3563
        %v3620 = vpack.c.b16 %v3566, %v3565
        %v3621 = vpack.c.b16 %v3568, %v3567
        %v3622 = vpack.c.b16 %v3570, %v3569
        %v3623 = vpack.c.b16 %v3572, %v3571
        %v3624 = vpack.c.b16 %v3574, %v3573
        %v3625 = vpack.c.b16 %v3576, %v3575
        %v3626 = vpack.c.b16 %v3578, %v3577
        %v3627 = vpack.c.b16 %v3580, %v3579
        %v3628 = vpack.c.b16 %v3582, %v3581
        %v3629 = vpack.c.b16 %v3584, %v3583
        %v3630 = vpack.c.b16 %v3586, %v3585
        %v3631 = vpack.c.b16 %v3588, %v3587
        %v3632 = vpack.c.b16 %v3590, %v3589
        %v3633 = vpack.c.b16 %v3592, %v3591
        %v3634 = vpack.c.b16 %v3594, %v3593
        %v3635 = vpack.c.b16 %v3596, %v3595
        %v3636 = vpack.c.b16 %v3598, %v3597
        %v3637 = vpack.c.b16 %v3600, %v3599
        %v3638 = vpack.c.b16 %v3602, %v3601
        %v3639 = vpack.c.b16 %v3604, %v3603
        %v3640 = vpack.c.b16 %v3606, %v3605
        %v3641 = vpack.c.b16 %v3608, %v3607
        %v3642 = vpack.c.b16 %v3610, %v3609
        %3675 = vmatprep.subr.bf16.mxu0 0
        %3676 = vmatpush1.bf16.msra.mxu0 %v3611
        %3677 = vmatprep.subr.bf16.mxu0 0
        %3678 = vmatpush1.bf16.msra.mxu0 %v3612
        %3679 = vmatprep.subr.bf16.mxu0 0
        %3680 = vmatpush1.bf16.msra.mxu0 %v3613
        %3681 = vmatprep.subr.bf16.mxu0 0
        %3682 = vmatpush1.bf16.msra.mxu0 %v3614
        %3683 = vmatprep.subr.bf16.mxu0 0
        %3684 = vmatpush1.bf16.msra.mxu0 %v3615
        %3685 = vmatprep.subr.bf16.mxu0 0
        %3686 = vmatpush1.bf16.msra.mxu0 %v3616
        %3687 = vmatprep.subr.bf16.mxu0 0
        %3688 = vmatpush1.bf16.msra.mxu0 %v3617
        %3689 = vmatprep.subr.bf16.mxu0 0
        %3690 = vmatpush1.bf16.msra.mxu0 %v3618
        %3691 = vmatprep.subr.bf16.mxu0 0
        %3692 = vmatpush1.bf16.msra.mxu0 %v3619
        %3693 = vmatprep.subr.bf16.mxu0 0
        %3694 = vmatpush1.bf16.msra.mxu0 %v3620
        %3695 = vmatprep.subr.bf16.mxu0 0
        %3696 = vmatpush1.bf16.msra.mxu0 %v3621
        %3697 = vmatprep.subr.bf16.mxu0 0
        %3698 = vmatpush1.bf16.msra.mxu0 %v3622
        %3699 = vmatprep.subr.bf16.mxu0 0
        %3700 = vmatpush1.bf16.msra.mxu0 %v3623
        %3701 = vmatprep.subr.bf16.mxu0 0
        %3702 = vmatpush1.bf16.msra.mxu0 %v3624
        %3703 = vmatprep.subr.bf16.mxu0 0
        %3704 = vmatpush1.bf16.msra.mxu0 %v3625
        %3705 = vmatprep.subr.bf16.mxu0 0
        %3706 = vmatpush1.bf16.msra.mxu0 %v3626
        %3707 = vmatprep.mubr.bf16.mxu0 %v3409
        %3708 = vmatmul.mubr.bf16.gmra.mrb[0].mxu0 %v3408
        %v3709 = vpop.f32.mrb[0].mxu0
        %v3710 = vadd.f32 %v3481, %v3709
        %v3711 = vpop.f32.mrb[0].mxu0
        %v3712 = vpop.f32.mrb[0].mxu0
        %v3713 = vadd.f32 %v3481, %v3712
        %v3714 = vpop.f32.mrb[0].mxu0
        %3715 = vdwg.mxu0
        %3716 = vmatprep.subr.bf16.mxu0 0
        %3717 = vmatpush1.bf16.msra.mxu0 %v3627
        %3718 = vmatprep.subr.bf16.mxu0 0
        %3719 = vmatpush1.bf16.msra.mxu0 %v3628
        %3720 = vmatprep.subr.bf16.mxu0 0
        %3721 = vmatpush1.bf16.msra.mxu0 %v3629
        %3722 = vmatprep.subr.bf16.mxu0 0
        %3723 = vmatpush1.bf16.msra.mxu0 %v3630
        %3724 = vmatprep.subr.bf16.mxu0 0
        %3725 = vmatpush1.bf16.msra.mxu0 %v3631
        %3726 = vmatprep.subr.bf16.mxu0 0
        %3727 = vmatpush1.bf16.msra.mxu0 %v3632
        %3728 = vmatprep.subr.bf16.mxu0 0
        %3729 = vmatpush1.bf16.msra.mxu0 %v3633
        %3730 = vmatprep.subr.bf16.mxu0 0
        %3731 = vmatpush1.bf16.msra.mxu0 %v3634
        %3732 = vmatprep.subr.bf16.mxu0 0
        %3733 = vmatpush1.bf16.msra.mxu0 %v3635
        %3734 = vmatprep.subr.bf16.mxu0 0
        %3735 = vmatpush1.bf16.msra.mxu0 %v3636
        %3736 = vmatprep.subr.bf16.mxu0 0
        %3737 = vmatpush1.bf16.msra.mxu0 %v3637
        %3738 = vmatprep.subr.bf16.mxu0 0
        %3739 = vmatpush1.bf16.msra.mxu0 %v3638
        %3740 = vmatprep.subr.bf16.mxu0 0
        %3741 = vmatpush1.bf16.msra.mxu0 %v3639
        %3742 = vmatprep.subr.bf16.mxu0 0
        %3743 = vmatpush1.bf16.msra.mxu0 %v3640
        %3744 = vmatprep.subr.bf16.mxu0 0
        %3745 = vmatpush1.bf16.msra.mxu0 %v3641
        %3746 = vmatprep.subr.bf16.mxu0 0
        %3747 = vmatpush1.bf16.msra.mxu0 %v3642
        %3748 = vmatprep.mubr.bf16.mxu0 %v3411
        %3749 = vmatmul.mubr.bf16.gmra.mrb[0].mxu0 %v3410
        %v3750 = vpop.f32.mrb[0].mxu0
        %v3751 = vadd.f32 %v3710, %v3750
        %v3752 = vpop.f32.mrb[0].mxu0
        %v3753 = vpop.f32.mrb[0].mxu0
        %v3754 = vadd.f32 %v3713, %v3753
        %v3755 = vpop.f32.mrb[0].mxu0
        %3756 = vdwg.mxu0
        %v3757 = vadd.f32 %v3097, %v3751
        %v3758 = vadd.f32 %v3098, %v3754
        %v3759 = vld [vmem:[%s736] sm:$0x1]
        %v3760 = vld [vmem:[%s744] sm:$0x1]
        %3761 = vadd.xlane.f32.xlu0 %v3757
        %v3762 = vpop.xlane.xlu0 %3761
        %3763 = vadd.xlane.f32.xlu0 %v3758
        %v3764 = vpop.xlane.xlu0 %3763
        %v3765 = vmul.f32 %v3762, %v3064
        %v3766 = vmul.f32 %v3764, %v3064
        %v3767 = vsub.f32 %v3757, %v3765
        %v3768 = vsub.f32 %v3758, %v3766
        %v3769 = vmul.f32 %v3767, %v3767
        %v3770 = vmul.f32 %v3768, %v3768
        %3771 = vadd.xlane.f32.xlu0 %v3769
        %v3772 = vpop.xlane.xlu0 %3771
        %3773 = vadd.xlane.f32.xlu0 %v3770
        %v3774 = vpop.xlane.xlu0 %3773
        %v3775 = vmul.f32 %v3772, %v3064
        %v3776 = vmul.f32 %v3774, %v3064
        %v3777 = vadd.f32 %v3775, 1e-05
        %v3778 = vadd.f32 %v3776, 1e-05
        %v3779 = vrsqrt.pop %v3777
        %v3780 = vrsqrt.pop %v3778
        %v3781 = vmul.f32 %v3767, %v3779
        %v3782 = vmul.f32 %v3768, %v3780
        %v3784 = vlaneseq
        %v3785 = vshrl.u32 %v3784, 7
        %v3786 = vsub.s32 0, %v3785
        %v3787 = vrot.slane %v3759, %v3786
        %v3789 = vmul.f32 %v3781, %v3787
        %v3790 = vmul.f32 %v3782, %v3787
        %v3792 = vlaneseq
        %v3793 = vshrl.u32 %v3792, 7
        %v3794 = vsub.s32 0, %v3793
        %v3795 = vrot.slane %v3760, %v3794
        %v3797 = vadd.f32 %v3789, %v3795
        %v3798 = vadd.f32 %v3790, %v3795
        %3799 = vst [vmem:[%s13] sm:$0xff] %v3797
        %3800 = vst [vmem:[%s13 + $0x8] sm:$0xff] %v3798
        // Predicated region
        $region125: #{transformer_forward.2} parent=71 // pred_check
          %p3801 = pneg %p391
        $region126: #{transformer_forward.2} parent=71 // pred_check_branch
          %3803 = sbr.rel (%p3801) target = $region128
        $region127: #{transformer_forward.2} parent=71 // pred_region
          _
        $region128: #{transformer_forward.2} parent=71 // pred_fallthru
          _
        // Predicated region
        $region129: #{transformer_forward.2} parent=71 // pred_check
          %p3804 = pneg %p391
        $region130: #{transformer_forward.2} parent=71 // pred_check_branch
          %3806 = sbr.rel (%p3804) target = $region132
        $region131: #{transformer_forward.2} parent=71 // pred_region
          _
        $region132: #{transformer_forward.2} parent=71 // pred_fallthru
          _
      $region72: #{transformer_forward.2} parent=5 // pred_fallthru
        _
      %p3807 = scmp.le.s32.totalorder 2, %s40
      // Predicated region
      $region133: #{transformer_forward.2} parent=5 // pred_check
        %p3808 = pneg %p3807
      $region134: #{transformer_forward.2} parent=5 // pred_check_branch
        %3810 = sbr.rel (%p3808) target = $region136
      $region135: #{transformer_forward.2} parent=5 // pred_region
        %s3811 = ssub.s32 %s40, 2
      $region136: #{transformer_forward.2} parent=5 // pred_fallthru
        _
    $region6: #{transformer_forward.2} parent=1 // loop_footer
      %s44 = sadd.s32 1, %s40
    $region7: #{transformer_forward.2} parent=1 // loop_footer_branch
      %39 = sbr.rel target = $region3
    $region8: #{transformer_forward.2} parent=1 // loop_exit
      _
    %3812 = vsyncpa [#allocation3], 1
    %s3813 = scalar_lea.sflag [#allocation3], 1
    %3814 = vsyncpa %s3813, 1
    %3815 = vsyncpa [#allocation5], 1
    %s3816 = scalar_lea.sflag [#allocation5], 1
    %3817 = vsyncpa %s3816, 1
    %3818 = vsyncpa [#allocation8], 1
    %s3819 = scalar_lea.sflag [#allocation8], 1
    %3820 = vsyncpa %s3819, 1
    %3821 = vsyncpa [#allocation11], 1
    %s3822 = scalar_lea.sflag [#allocation11], 1
    %3823 = vsyncpa %s3822, 1
    %3824 = vsyncpa [#allocation14], 1
    %s3825 = scalar_lea.sflag [#allocation14], 1
    %3826 = vsyncpa %s3825, 1
    %3827 = vsyncpa [#allocation17], 1
    %s3828 = scalar_lea.sflag [#allocation17], 1
    %3829 = vsyncpa %s3828, 1
    %3830 = vsyncpa [#allocation20], 1
    %s3831 = scalar_lea.sflag [#allocation20], 1
    %3832 = vsyncpa %s3831, 1

</llo_original>
